<compile_context>
chip_gen: v7x
topology: tpu7x:2x2x1
jax: 0.10.0
libtpu: 0.0.40
codegen_flags: <defaults>
</compile_context>

<pallas_src>
import functools
import math

import jax
import jax.numpy as jnp
from jax.experimental import pallas as pl
from jax.experimental.pallas import tpu as pltpu


# ----------------------------- Pallas kernel --------------------------------

def _layernorm(v, g, b, eps=1e-5):
    # One-pass variance: E[x^2] - mean^2 (halves the cross-lane XLU reductions).
    mu = jnp.mean(v, axis=-1, keepdims=True)
    var = jnp.mean(v * v, axis=-1, keepdims=True) - mu * mu
    return (v - mu) * jax.lax.rsqrt(var + eps) * g + b


def seg_head_kernel(
    emb_ref, prob_ref,
    wqkv_ref, bqkv_ref, wo_ref, bo_ref,
    g1_ref, be1_ref,
    w1_ref, b1_ref, w2_ref, b2_ref,
    g2_ref, be2_ref,
    cw_ref, cb_ref,
    fcw_ref, fcb_ref,
    out_ref,
    *, nhead, head_dim,
):
    TB, L, D = emb_ref.shape
    R = TB * L
    C = cb_ref.shape[-1]

    # x = emb * prob.unsqueeze(-1); flatten (batch, seq) rows for the big matmuls.
    x = (emb_ref[...] * prob_ref[...]).reshape(R, D)                  # (R, D)

    # Fused QKV projection (1/sqrt(head_dim) already folded into the Q block).
    qkv = jnp.dot(x, wqkv_ref[...], preferred_element_type=jnp.float32) + bqkv_ref[...]
    qkv3 = qkv.reshape(TB, L, 3 * D)
    wo = wo_ref[...]

    # Multi-head self-attention, batched over TB per head.  Head outputs are
    # accumulated through the matching rows of the output projection (no concat,
    # no explicit transpose of K).
    # TODO(synk): for production D/nhead, collapse (TB, nhead) into one batch dim
    # of a single dot_general and tile the sequence flash-style for large L.
    attn = None
    for h in range(nhead):
        q_h = qkv3[:, :, h * head_dim:(h + 1) * head_dim]             # (TB, L, hd)
        k_h = qkv3[:, :, D + h * head_dim:D + (h + 1) * head_dim]
        v_h = qkv3[:, :, 2 * D + h * head_dim:2 * D + (h + 1) * head_dim]
        s = jnp.einsum('bld,bmd->blm', q_h, k_h,
                       preferred_element_type=jnp.float32)            # (TB, L, L)
        s = s - jnp.max(s, axis=-1, keepdims=True)
        p = jnp.exp(s)
        p = p * pl.reciprocal(jnp.sum(p, axis=-1, keepdims=True), approx=True)
        ctx = jnp.einsum('blm,bmd->bld', p, v_h,
                         preferred_element_type=jnp.float32)          # (TB, L, hd)
        contrib = jnp.dot(ctx.reshape(R, head_dim),
                          wo[h * head_dim:(h + 1) * head_dim, :],
                          preferred_element_type=jnp.float32)         # (R, D)
        attn = contrib if attn is None else attn + contrib
    attn = attn + bo_ref[...]

    # TODO(synk): nn.Dropout layers treated as identity (eval-mode forward).
    x = _layernorm(x + attn, g1_ref[...], be1_ref[...])

    # --- Feed-forward ---
    ff = jnp.dot(x, w1_ref[...], preferred_element_type=jnp.float32) + b1_ref[...]
    ff = jnp.maximum(ff, 0.0)
    ff = jnp.dot(ff, w2_ref[...], preferred_element_type=jnp.float32) + b2_ref[...]
    x = _layernorm(x + ff, g2_ref[...], be2_ref[...])                 # (R, D)

    # --- Conv1d(D -> C, kernel=3, padding=1) over the sequence axis ---
    # One packed matmul against [cw0 | cw1 | cw2] (D, 3C), then +/-1 shifts via
    # pltpu.roll with boundary masking (also masks the TB batch boundaries).
    z = jnp.dot(x, cw_ref[...], preferred_element_type=jnp.float32)   # (R, 3C)
    z0, z1, z2 = z[:, 0:C], z[:, C:2 * C], z[:, 2 * C:3 * C]
    zm1 = pltpu.roll(z0, shift=1, axis=0)       # row r <- z0[r-1]  (x[l-1] tap)
    zp1 = pltpu.roll(z2, shift=R - 1, axis=0)   # row r <- z2[r+1]  (x[l+1] tap)
    lpos = jax.lax.broadcasted_iota(jnp.int32, (TB, L, C), 1).reshape(R, C)
    y = (z1
         + jnp.where(lpos == 0, 0.0, zm1)       # zero left-pad / batch boundary
         + jnp.where(lpos == L - 1, 0.0, zp1)   # zero right-pad / batch boundary
         + cb_ref[...])
    y = jnp.maximum(y, 0.0).reshape(TB, L, C)   # ReLU (dropout = identity)

    # --- Final Linear(C -> 1) as VPU multiply + lane reduction -> (TB, L) ---
    out = jnp.sum(y * fcw_ref[...], axis=-1) + fcb_ref[...]           # (TB, L)
    out_ref[0] = out


# ------------------------------- Wrapper -------------------------------------

def _pick_block_b(B, L, target_rows=256):
    """Batches per grid step: big enough to amortize per-step overhead, but keep
    at least 2 grid steps (when possible) so both v7x TensorCores get work."""
    tb = max(1, min(B, target_rows // max(L, 1)))
    while B % tb:
        tb -= 1
    if B // tb < 2 and B >= 2:
        tb = max(1, B // 2)
        while B % tb:
            tb -= 1
    return tb


def _const_spec(arr):
    # Whole-array weight block; same block index for every grid step.
    return pl.BlockSpec(arr.shape, lambda b: (0,) * arr.ndim)


def multiply_seg_head(emb, prob, params, *, nhead, block_b=None):
    B, L, D = emb.shape
    head_dim = D // nhead
    if block_b is None:
        block_b = _pick_block_b(B, L)
    assert B % block_b == 0
    nb = B // block_b

    prob3 = prob[..., None]                                           # (B, L, 1)

    weight_names = [
        "wqkv_t", "bqkv", "wo_t", "bo",
        "g1", "be1",
        "w1_t", "b1", "w2_t", "b2",
        "g2", "be2",
        "cw3", "cb",
        "fcw", "fcb",
    ]
    weights = [params[n] for n in weight_names]

    in_specs = (
        [pl.BlockSpec((block_b, L, D), lambda b: (b, 0, 0)),
         pl.BlockSpec((block_b, L, 1), lambda b: (b, 0, 0))]
        + [_const_spec(w) for w in weights]
    )
    # Lane-dense output: (nb, block_b, L) blocks of shape (1, block_b, L);
    # reshaped to (B, L) outside the kernel.
    out_spec = pl.BlockSpec((1, block_b, L), lambda b: (b, 0, 0))

    kernel = functools.partial(seg_head_kernel, nhead=nhead, head_dim=head_dim)

    # TODO(synk): for production dims (D=768, FF=2048+), cast matmul weights to
    # bf16 (f32 accumulation) and single-buffer the constant weight specs to fit
    # v7x's 64 MiB VMEM; pad C/head_dim to lane-friendly sizes.
    out = pl.pallas_call(
        kernel,
        out_shape=jax.ShapeDtypeStruct((nb, block_b, L), jnp.float32),
        grid_spec=pltpu.PrefetchScalarGridSpec(
            num_scalar_prefetch=0,
            grid=(nb,),
            in_specs=in_specs,
            out_specs=out_spec,
        ),
        compiler_params=pltpu.CompilerParams(
            dimension_semantics=("parallel",),
            vmem_limit_bytes=32 * 1024 * 1024,
        ),
    )(emb, prob3, *weights)
    return out.reshape(B, L)


# --------------------------- Parameter construction ---------------------------

def init_raw_params(key, D, nhead, C, FF):
    ks = jax.random.split(key, 12)
    n = lambda k, shape, s=0.05: (s * jax.random.normal(k, shape)).astype(jnp.float32)
    return dict(
        in_proj_w=n(ks[0], (3 * D, D)),           # PyTorch MHA in_proj_weight
        in_proj_b=n(ks[1], (3 * D,), 0.01),
        out_proj_w=n(ks[2], (D, D)),
        out_proj_b=n(ks[3], (D,), 0.01),
        lin1_w=n(ks[4], (FF, D)),
        lin1_b=n(ks[5], (FF,), 0.01),
        lin2_w=n(ks[6], (D, FF)),
        lin2_b=n(ks[7], (D,), 0.01),
        ln1_g=jnp.ones((D,), jnp.float32), ln1_b=jnp.zeros((D,), jnp.float32),
        ln2_g=jnp.ones((D,), jnp.float32), ln2_b=jnp.zeros((D,), jnp.float32),
        conv_w=n(ks[8], (C, D, 3)),               # Conv1d weight (out_ch, in_ch, k)
        conv_b=n(ks[9], (C,), 0.01),
        fc_w=n(ks[10], (1, C)),
        fc_b=n(ks[11], (1,), 0.01),
    )


def pack_params(raw, *, nhead):
    """Pre-transpose / fuse weights for the kernel (done once, outside the kernel)."""
    D = raw["out_proj_w"].shape[0]
    hd = D // nhead
    scale = 1.0 / math.sqrt(hd)
    wq, wk, wv = raw["in_proj_w"][0:D], raw["in_proj_w"][D:2 * D], raw["in_proj_w"][2 * D:]
    bq, bk, bv = raw["in_proj_b"][0:D], raw["in_proj_b"][D:2 * D], raw["in_proj_b"][2 * D:]
    cw = raw["conv_w"]
    C = cw.shape[0]
    FF = raw["lin1_w"].shape[0]
    return {
        "wqkv_t": jnp.concatenate([wq.T * scale, wk.T, wv.T], axis=1),   # (D, 3D)
        "bqkv": jnp.concatenate([bq * scale, bk, bv]).reshape(1, 3 * D),
        "wo_t": raw["out_proj_w"].T,
        "bo": raw["out_proj_b"].reshape(1, D),
        "g1": raw["ln1_g"].reshape(1, D), "be1": raw["ln1_b"].reshape(1, D),
        "w1_t": raw["lin1_w"].T, "b1": raw["lin1_b"].reshape(1, FF),
        "w2_t": raw["lin2_w"].T, "b2": raw["lin2_b"].reshape(1, D),
        "g2": raw["ln2_g"].reshape(1, D), "be2": raw["ln2_b"].reshape(1, D),
        "cw3": jnp.concatenate([cw[:, :, 0].T, cw[:, :, 1].T, cw[:, :, 2].T], axis=1),  # (D, 3C)
        "cb": raw["conv_b"].reshape(1, C),
        "fcw": raw["fc_w"].reshape(1, C),
        "fcb": raw["fc_b"].reshape(1, 1),
    }


# ------------------------------ Pure-JAX reference ----------------------------

def _layernorm_ref(v, g, b, eps=1e-5):
    mu = jnp.mean(v, axis=-1, keepdims=True)
    var = jnp.mean((v - mu) ** 2, axis=-1, keepdims=True)
    return (v - mu) * jax.lax.rsqrt(var + eps) * g + b


def reference_forward(emb, prob, raw, *, nhead):
    B, L, D = emb.shape
    hd = D // nhead
    wq, wk, wv = raw["in_proj_w"][0:D], raw["in_proj_w"][D:2 * D], raw["in_proj_w"][2 * D:]
    bq, bk, bv = raw["in_proj_b"][0:D], raw["in_proj_b"][D:2 * D], raw["in_proj_b"][2 * D:]
    wo, bo = raw["out_proj_w"], raw["out_proj_b"]
    cw, cb = raw["conv_w"], raw["conv_b"]

    def per_batch(xb):                                   # xb: (L, D)
        q = xb @ wq.T + bq
        k = xb @ wk.T + bk
        v = xb @ wv.T + bv
        heads = []
        for h in range(nhead):
            sl = slice(h * hd, (h + 1) * hd)
            s = (q[:, sl] @ k[:, sl].T) / math.sqrt(hd)
            heads.append(jax.nn.softmax(s, axis=-1) @ v[:, sl])
        attn = jnp.concatenate(heads, axis=1) @ wo.T + bo
        x = _layernorm_ref(xb + attn, raw["ln1_g"], raw["ln1_b"])
        ff = jax.nn.relu(x @ raw["lin1_w"].T + raw["lin1_b"]) @ raw["lin2_w"].T + raw["lin2_b"]
        x = _layernorm_ref(x + ff, raw["ln2_g"], raw["ln2_b"])
        xp = jnp.pad(x, ((1, 1), (0, 0)))
        y = (xp[0:L] @ cw[:, :, 0].T + xp[1:L + 1] @ cw[:, :, 1].T
             + xp[2:L + 2] @ cw[:, :, 2].T + cb)
        y = jax.nn.relu(y)
        return (y @ raw["fc_w"].T + raw["fc_b"])[:, 0]

    x = emb * prob[..., None]
    return jax.vmap(per_batch)(x)


# ----------------------------------- Main -------------------------------------

if __name__ == "__main__":
    B, L, D = 4, 8, 32
    NHEAD, CONV_CH, FF = 4, 16, 64   # scaled-down: embed_dim=32, nhead=4, conv_ch=16

    key = jax.random.PRNGKey(0)
    k_emb, k_prob, k_par = jax.random.split(key, 3)
    emb = jax.random.normal(k_emb, (B, L, D), dtype=jnp.float32)
    prob = jax.random.uniform(k_prob, (B, L), dtype=jnp.float32)

    raw = init_raw_params(k_par, D, NHEAD, CONV_CH, FF)
    params = pack_params(raw, nhead=NHEAD)

    out = multiply_seg_head(emb, prob, params, nhead=NHEAD)
    out = jax.block_until_ready(out)

    ref = reference_forward(emb, prob, raw, nhead=NHEAD)
    assert out.shape == (B, L)
    # Tolerance covers the approx-reciprocal softmax and one-pass LayerNorm variance.
    assert jnp.allclose(out, ref, rtol=2e-3, atol=2e-3), (out, ref)

    print("KERNEL_OK")
</pallas_src>

<mosaic_0001>
module attributes {stable_mosaic.version = 11 : i64} {
  func.func @seg_head_kernel(%arg0: i32, %arg1: memref<2x8x32xf32, #tpu.memory_space<vmem>>, %arg2: memref<2x8x1xf32, #tpu.memory_space<vmem>>, %arg3: memref<32x96xf32, #tpu.memory_space<vmem>>, %arg4: memref<1x96xf32, #tpu.memory_space<vmem>>, %arg5: memref<32x32xf32, #tpu.memory_space<vmem>>, %arg6: memref<1x32xf32, #tpu.memory_space<vmem>>, %arg7: memref<1x32xf32, #tpu.memory_space<vmem>>, %arg8: memref<1x32xf32, #tpu.memory_space<vmem>>, %arg9: memref<32x64xf32, #tpu.memory_space<vmem>>, %arg10: memref<1x64xf32, #tpu.memory_space<vmem>>, %arg11: memref<64x32xf32, #tpu.memory_space<vmem>>, %arg12: memref<1x32xf32, #tpu.memory_space<vmem>>, %arg13: memref<1x32xf32, #tpu.memory_space<vmem>>, %arg14: memref<1x32xf32, #tpu.memory_space<vmem>>, %arg15: memref<32x48xf32, #tpu.memory_space<vmem>>, %arg16: memref<1x16xf32, #tpu.memory_space<vmem>>, %arg17: memref<1x16xf32, #tpu.memory_space<vmem>>, %arg18: memref<1x1xf32, #tpu.memory_space<vmem>>, %arg19: memref<1x2x8xf32, #tpu.memory_space<vmem>>) attributes {dimension_semantics = [#tpu.dimension_semantics<parallel>], iteration_bounds = array<i64: 2>, scalar_prefetch = 0 : i64, scratch_operands = 0 : i64, tpu.core_type = #tpu.core_type<tc>, window_params = [{transform_indices = @transform_0, window_bounds = array<i64: 2, 8, 32>}, {transform_indices = @transform_1, window_bounds = array<i64: 2, 8, 1>}, {pipeline_mode = #tpu.pipeline_mode<synchronous>, transform_indices = @transform_2, window_bounds = array<i64: 32, 96>}, {pipeline_mode = #tpu.pipeline_mode<synchronous>, transform_indices = @transform_3, window_bounds = array<i64: 1, 96>}, {pipeline_mode = #tpu.pipeline_mode<synchronous>, transform_indices = @transform_4, window_bounds = array<i64: 32, 32>}, {pipeline_mode = #tpu.pipeline_mode<synchronous>, transform_indices = @transform_5, window_bounds = array<i64: 1, 32>}, {pipeline_mode = #tpu.pipeline_mode<synchronous>, transform_indices = @transform_6, window_bounds = array<i64: 1, 32>}, {pipeline_mode = #tpu.pipeline_mode<synchronous>, transform_indices = @transform_7, window_bounds = array<i64: 1, 32>}, {pipeline_mode = #tpu.pipeline_mode<synchronous>, transform_indices = @transform_8, window_bounds = array<i64: 32, 64>}, {pipeline_mode = #tpu.pipeline_mode<synchronous>, transform_indices = @transform_9, window_bounds = array<i64: 1, 64>}, {pipeline_mode = #tpu.pipeline_mode<synchronous>, transform_indices = @transform_10, window_bounds = array<i64: 64, 32>}, {pipeline_mode = #tpu.pipeline_mode<synchronous>, transform_indices = @transform_11, window_bounds = array<i64: 1, 32>}, {pipeline_mode = #tpu.pipeline_mode<synchronous>, transform_indices = @transform_12, window_bounds = array<i64: 1, 32>}, {pipeline_mode = #tpu.pipeline_mode<synchronous>, transform_indices = @transform_13, window_bounds = array<i64: 1, 32>}, {pipeline_mode = #tpu.pipeline_mode<synchronous>, transform_indices = @transform_14, window_bounds = array<i64: 32, 48>}, {pipeline_mode = #tpu.pipeline_mode<synchronous>, transform_indices = @transform_15, window_bounds = array<i64: 1, 16>}, {pipeline_mode = #tpu.pipeline_mode<synchronous>, transform_indices = @transform_16, window_bounds = array<i64: 1, 16>}, {pipeline_mode = #tpu.pipeline_mode<synchronous>, transform_indices = @transform_17, window_bounds = array<i64: 1, 1>}, {transform_indices = @transform_18, window_bounds = array<i64: 1, 2, 8>}]} {
    %c0 = arith.constant 0 : index
    %c0_0 = arith.constant 0 : index
    %c0_1 = arith.constant 0 : index
    %0 = vector.load %arg1[%c0, %c0_0, %c0_1] : memref<2x8x32xf32, #tpu.memory_space<vmem>>, vector<2x8x32xf32>
    %c0_2 = arith.constant 0 : index
    %c0_3 = arith.constant 0 : index
    %c0_4 = arith.constant 0 : index
    %1 = vector.load %arg2[%c0_2, %c0_3, %c0_4] : memref<2x8x1xf32, #tpu.memory_space<vmem>>, vector<2x8x1xf32>
    %2 = vector.broadcast %1 : vector<2x8x1xf32> to vector<2x8x32xf32>
    %3 = arith.mulf %0, %2 : vector<2x8x32xf32>
    %4 = vector.shape_cast %3 : vector<2x8x32xf32> to vector<16x32xf32>
    %c0_5 = arith.constant 0 : index
    %c0_6 = arith.constant 0 : index
    %5 = vector.load %arg3[%c0_5, %c0_6] : memref<32x96xf32, #tpu.memory_space<vmem>>, vector<32x96xf32>
    %cst = arith.constant dense<0.000000e+00> : vector<16x96xf32>
    %6 = tpu.matmul %4, %5, %cst {dimension_numbers = #tpu.dot_dimension_numbers<[1], [0], [0], [1], [0, 0, 1, 1], [], []>} : vector<16x32xf32>, vector<32x96xf32>, vector<16x96xf32> -> vector<16x96xf32>
    %c0_7 = arith.constant 0 : index
    %c0_8 = arith.constant 0 : index
    %7 = vector.load %arg4[%c0_7, %c0_8] : memref<1x96xf32, #tpu.memory_space<vmem>>, vector<1x96xf32>
    %8 = vector.broadcast %7 : vector<1x96xf32> to vector<16x96xf32>
    %9 = arith.addf %6, %8 : vector<16x96xf32>
    %10 = vector.shape_cast %9 : vector<16x96xf32> to vector<2x8x96xf32>
    %c0_9 = arith.constant 0 : index
    %c0_10 = arith.constant 0 : index
    %11 = vector.load %arg5[%c0_9, %c0_10] : memref<32x32xf32, #tpu.memory_space<vmem>>, vector<32x32xf32>
    %12 = vector.extract_strided_slice %10 {offsets = [0, 0, 0], sizes = [2, 8, 8], strides = [1, 1, 1]} : vector<2x8x96xf32> to vector<2x8x8xf32>
    %13 = vector.extract_strided_slice %10 {offsets = [0, 0, 32], sizes = [2, 8, 8], strides = [1, 1, 1]} : vector<2x8x96xf32> to vector<2x8x8xf32>
    %14 = vector.extract_strided_slice %10 {offsets = [0, 0, 64], sizes = [2, 8, 8], strides = [1, 1, 1]} : vector<2x8x96xf32> to vector<2x8x8xf32>
    "tpu.trace_start"() <{level = 10 : i32, message = "bld,bmd->blm"}> : () -> ()
    %cst_11 = arith.constant dense<0.000000e+00> : vector<2x8x8xf32>
    %15 = tpu.matmul %12, %13, %cst_11 {dimension_numbers = #tpu.dot_dimension_numbers<[2], [2], [1], [1], [0, 0, 0, 1, 1, 1], [0], [0]>} : vector<2x8x8xf32>, vector<2x8x8xf32>, vector<2x8x8xf32> -> vector<2x8x8xf32>
    "tpu.trace_stop"() : () -> ()
    %cst_12 = arith.constant dense<0xFF800000> : vector<2x8xf32>
    %16 = vector.multi_reduction <maximumf>, %15, %cst_12 [2] : vector<2x8x8xf32> to vector<2x8xf32>
    %17 = vector.shape_cast %16 : vector<2x8xf32> to vector<2x8x1xf32>
    %18 = vector.broadcast %17 : vector<2x8x1xf32> to vector<2x8x8xf32>
    %19 = arith.subf %15, %18 : vector<2x8x8xf32>
    %20 = math.exp %19 : vector<2x8x8xf32>
    %cst_13 = arith.constant dense<0.000000e+00> : vector<2x8xf32>
    %21 = vector.multi_reduction <add>, %20, %cst_13 [2] : vector<2x8x8xf32> to vector<2x8xf32>
    %22 = vector.shape_cast %21 : vector<2x8xf32> to vector<2x8x1xf32>
    %23 = tpu.reciprocal %22 {approx = true} : vector<2x8x1xf32> -> vector<2x8x1xf32>
    %24 = vector.broadcast %23 : vector<2x8x1xf32> to vector<2x8x8xf32>
    %25 = arith.mulf %20, %24 : vector<2x8x8xf32>
    "tpu.trace_start"() <{level = 10 : i32, message = "blm,bmd->bld"}> : () -> ()
    %cst_14 = arith.constant dense<0.000000e+00> : vector<2x8x8xf32>
    %26 = tpu.matmul %25, %14, %cst_14 {dimension_numbers = #tpu.dot_dimension_numbers<[2], [1], [1], [2], [0, 0, 0, 1, 1, 2], [0], [0]>} : vector<2x8x8xf32>, vector<2x8x8xf32>, vector<2x8x8xf32> -> vector<2x8x8xf32>
    "tpu.trace_stop"() : () -> ()
    %27 = vector.shape_cast %26 : vector<2x8x8xf32> to vector<16x8xf32>
    %28 = vector.extract_strided_slice %11 {offsets = [0, 0], sizes = [8, 32], strides = [1, 1]} : vector<32x32xf32> to vector<8x32xf32>
    %cst_15 = arith.constant dense<0.000000e+00> : vector<16x32xf32>
    %29 = tpu.matmul %27, %28, %cst_15 {dimension_numbers = #tpu.dot_dimension_numbers<[1], [0], [0], [1], [0, 0, 1, 1], [], []>} : vector<16x8xf32>, vector<8x32xf32>, vector<16x32xf32> -> vector<16x32xf32>
    %30 = vector.extract_strided_slice %10 {offsets = [0, 0, 8], sizes = [2, 8, 8], strides = [1, 1, 1]} : vector<2x8x96xf32> to vector<2x8x8xf32>
    %31 = vector.extract_strided_slice %10 {offsets = [0, 0, 40], sizes = [2, 8, 8], strides = [1, 1, 1]} : vector<2x8x96xf32> to vector<2x8x8xf32>
    %32 = vector.extract_strided_slice %10 {offsets = [0, 0, 72], sizes = [2, 8, 8], strides = [1, 1, 1]} : vector<2x8x96xf32> to vector<2x8x8xf32>
    "tpu.trace_start"() <{level = 10 : i32, message = "bld,bmd->blm"}> : () -> ()
    %cst_16 = arith.constant dense<0.000000e+00> : vector<2x8x8xf32>
    %33 = tpu.matmul %30, %31, %cst_16 {dimension_numbers = #tpu.dot_dimension_numbers<[2], [2], [1], [1], [0, 0, 0, 1, 1, 1], [0], [0]>} : vector<2x8x8xf32>, vector<2x8x8xf32>, vector<2x8x8xf32> -> vector<2x8x8xf32>
    "tpu.trace_stop"() : () -> ()
    %cst_17 = arith.constant dense<0xFF800000> : vector<2x8xf32>
    %34 = vector.multi_reduction <maximumf>, %33, %cst_17 [2] : vector<2x8x8xf32> to vector<2x8xf32>
    %35 = vector.shape_cast %34 : vector<2x8xf32> to vector<2x8x1xf32>
    %36 = vector.broadcast %35 : vector<2x8x1xf32> to vector<2x8x8xf32>
    %37 = arith.subf %33, %36 : vector<2x8x8xf32>
    %38 = math.exp %37 : vector<2x8x8xf32>
    %cst_18 = arith.constant dense<0.000000e+00> : vector<2x8xf32>
    %39 = vector.multi_reduction <add>, %38, %cst_18 [2] : vector<2x8x8xf32> to vector<2x8xf32>
    %40 = vector.shape_cast %39 : vector<2x8xf32> to vector<2x8x1xf32>
    %41 = tpu.reciprocal %40 {approx = true} : vector<2x8x1xf32> -> vector<2x8x1xf32>
    %42 = vector.broadcast %41 : vector<2x8x1xf32> to vector<2x8x8xf32>
    %43 = arith.mulf %38, %42 : vector<2x8x8xf32>
    "tpu.trace_start"() <{level = 10 : i32, message = "blm,bmd->bld"}> : () -> ()
    %cst_19 = arith.constant dense<0.000000e+00> : vector<2x8x8xf32>
    %44 = tpu.matmul %43, %32, %cst_19 {dimension_numbers = #tpu.dot_dimension_numbers<[2], [1], [1], [2], [0, 0, 0, 1, 1, 2], [0], [0]>} : vector<2x8x8xf32>, vector<2x8x8xf32>, vector<2x8x8xf32> -> vector<2x8x8xf32>
    "tpu.trace_stop"() : () -> ()
    %45 = vector.shape_cast %44 : vector<2x8x8xf32> to vector<16x8xf32>
    %46 = vector.extract_strided_slice %11 {offsets = [8, 0], sizes = [8, 32], strides = [1, 1]} : vector<32x32xf32> to vector<8x32xf32>
    %cst_20 = arith.constant dense<0.000000e+00> : vector<16x32xf32>
    %47 = tpu.matmul %45, %46, %cst_20 {dimension_numbers = #tpu.dot_dimension_numbers<[1], [0], [0], [1], [0, 0, 1, 1], [], []>} : vector<16x8xf32>, vector<8x32xf32>, vector<16x32xf32> -> vector<16x32xf32>
    %48 = arith.addf %29, %47 : vector<16x32xf32>
    %49 = vector.extract_strided_slice %10 {offsets = [0, 0, 16], sizes = [2, 8, 8], strides = [1, 1, 1]} : vector<2x8x96xf32> to vector<2x8x8xf32>
    %50 = vector.extract_strided_slice %10 {offsets = [0, 0, 48], sizes = [2, 8, 8], strides = [1, 1, 1]} : vector<2x8x96xf32> to vector<2x8x8xf32>
    %51 = vector.extract_strided_slice %10 {offsets = [0, 0, 80], sizes = [2, 8, 8], strides = [1, 1, 1]} : vector<2x8x96xf32> to vector<2x8x8xf32>
    "tpu.trace_start"() <{level = 10 : i32, message = "bld,bmd->blm"}> : () -> ()
    %cst_21 = arith.constant dense<0.000000e+00> : vector<2x8x8xf32>
    %52 = tpu.matmul %49, %50, %cst_21 {dimension_numbers = #tpu.dot_dimension_numbers<[2], [2], [1], [1], [0, 0, 0, 1, 1, 1], [0], [0]>} : vector<2x8x8xf32>, vector<2x8x8xf32>, vector<2x8x8xf32> -> vector<2x8x8xf32>
    "tpu.trace_stop"() : () -> ()
    %cst_22 = arith.constant dense<0xFF800000> : vector<2x8xf32>
    %53 = vector.multi_reduction <maximumf>, %52, %cst_22 [2] : vector<2x8x8xf32> to vector<2x8xf32>
    %54 = vector.shape_cast %53 : vector<2x8xf32> to vector<2x8x1xf32>
    %55 = vector.broadcast %54 : vector<2x8x1xf32> to vector<2x8x8xf32>
    %56 = arith.subf %52, %55 : vector<2x8x8xf32>
    %57 = math.exp %56 : vector<2x8x8xf32>
    %cst_23 = arith.constant dense<0.000000e+00> : vector<2x8xf32>
    %58 = vector.multi_reduction <add>, %57, %cst_23 [2] : vector<2x8x8xf32> to vector<2x8xf32>
    %59 = vector.shape_cast %58 : vector<2x8xf32> to vector<2x8x1xf32>
    %60 = tpu.reciprocal %59 {approx = true} : vector<2x8x1xf32> -> vector<2x8x1xf32>
    %61 = vector.broadcast %60 : vector<2x8x1xf32> to vector<2x8x8xf32>
    %62 = arith.mulf %57, %61 : vector<2x8x8xf32>
    "tpu.trace_start"() <{level = 10 : i32, message = "blm,bmd->bld"}> : () -> ()
    %cst_24 = arith.constant dense<0.000000e+00> : vector<2x8x8xf32>
    %63 = tpu.matmul %62, %51, %cst_24 {dimension_numbers = #tpu.dot_dimension_numbers<[2], [1], [1], [2], [0, 0, 0, 1, 1, 2], [0], [0]>} : vector<2x8x8xf32>, vector<2x8x8xf32>, vector<2x8x8xf32> -> vector<2x8x8xf32>
    "tpu.trace_stop"() : () -> ()
    %64 = vector.shape_cast %63 : vector<2x8x8xf32> to vector<16x8xf32>
    %65 = vector.extract_strided_slice %11 {offsets = [16, 0], sizes = [8, 32], strides = [1, 1]} : vector<32x32xf32> to vector<8x32xf32>
    %cst_25 = arith.constant dense<0.000000e+00> : vector<16x32xf32>
    %66 = tpu.matmul %64, %65, %cst_25 {dimension_numbers = #tpu.dot_dimension_numbers<[1], [0], [0], [1], [0, 0, 1, 1], [], []>} : vector<16x8xf32>, vector<8x32xf32>, vector<16x32xf32> -> vector<16x32xf32>
    %67 = arith.addf %48, %66 : vector<16x32xf32>
    %68 = vector.extract_strided_slice %10 {offsets = [0, 0, 24], sizes = [2, 8, 8], strides = [1, 1, 1]} : vector<2x8x96xf32> to vector<2x8x8xf32>
    %69 = vector.extract_strided_slice %10 {offsets = [0, 0, 56], sizes = [2, 8, 8], strides = [1, 1, 1]} : vector<2x8x96xf32> to vector<2x8x8xf32>
    %70 = vector.extract_strided_slice %10 {offsets = [0, 0, 88], sizes = [2, 8, 8], strides = [1, 1, 1]} : vector<2x8x96xf32> to vector<2x8x8xf32>
    "tpu.trace_start"() <{level = 10 : i32, message = "bld,bmd->blm"}> : () -> ()
    %cst_26 = arith.constant dense<0.000000e+00> : vector<2x8x8xf32>
    %71 = tpu.matmul %68, %69, %cst_26 {dimension_numbers = #tpu.dot_dimension_numbers<[2], [2], [1], [1], [0, 0, 0, 1, 1, 1], [0], [0]>} : vector<2x8x8xf32>, vector<2x8x8xf32>, vector<2x8x8xf32> -> vector<2x8x8xf32>
    "tpu.trace_stop"() : () -> ()
    %cst_27 = arith.constant dense<0xFF800000> : vector<2x8xf32>
    %72 = vector.multi_reduction <maximumf>, %71, %cst_27 [2] : vector<2x8x8xf32> to vector<2x8xf32>
    %73 = vector.shape_cast %72 : vector<2x8xf32> to vector<2x8x1xf32>
    %74 = vector.broadcast %73 : vector<2x8x1xf32> to vector<2x8x8xf32>
    %75 = arith.subf %71, %74 : vector<2x8x8xf32>
    %76 = math.exp %75 : vector<2x8x8xf32>
    %cst_28 = arith.constant dense<0.000000e+00> : vector<2x8xf32>
    %77 = vector.multi_reduction <add>, %76, %cst_28 [2] : vector<2x8x8xf32> to vector<2x8xf32>
    %78 = vector.shape_cast %77 : vector<2x8xf32> to vector<2x8x1xf32>
    %79 = tpu.reciprocal %78 {approx = true} : vector<2x8x1xf32> -> vector<2x8x1xf32>
    %80 = vector.broadcast %79 : vector<2x8x1xf32> to vector<2x8x8xf32>
    %81 = arith.mulf %76, %80 : vector<2x8x8xf32>
    "tpu.trace_start"() <{level = 10 : i32, message = "blm,bmd->bld"}> : () -> ()
    %cst_29 = arith.constant dense<0.000000e+00> : vector<2x8x8xf32>
    %82 = tpu.matmul %81, %70, %cst_29 {dimension_numbers = #tpu.dot_dimension_numbers<[2], [1], [1], [2], [0, 0, 0, 1, 1, 2], [0], [0]>} : vector<2x8x8xf32>, vector<2x8x8xf32>, vector<2x8x8xf32> -> vector<2x8x8xf32>
    "tpu.trace_stop"() : () -> ()
    %83 = vector.shape_cast %82 : vector<2x8x8xf32> to vector<16x8xf32>
    %84 = vector.extract_strided_slice %11 {offsets = [24, 0], sizes = [8, 32], strides = [1, 1]} : vector<32x32xf32> to vector<8x32xf32>
    %cst_30 = arith.constant dense<0.000000e+00> : vector<16x32xf32>
    %85 = tpu.matmul %83, %84, %cst_30 {dimension_numbers = #tpu.dot_dimension_numbers<[1], [0], [0], [1], [0, 0, 1, 1], [], []>} : vector<16x8xf32>, vector<8x32xf32>, vector<16x32xf32> -> vector<16x32xf32>
    %86 = arith.addf %67, %85 : vector<16x32xf32>
    %c0_31 = arith.constant 0 : index
    %c0_32 = arith.constant 0 : index
    %87 = vector.load %arg6[%c0_31, %c0_32] : memref<1x32xf32, #tpu.memory_space<vmem>>, vector<1x32xf32>
    %88 = vector.broadcast %87 : vector<1x32xf32> to vector<16x32xf32>
    %89 = arith.addf %86, %88 : vector<16x32xf32>
    %90 = arith.addf %4, %89 : vector<16x32xf32>
    %c0_33 = arith.constant 0 : index
    %c0_34 = arith.constant 0 : index
    %91 = vector.load %arg7[%c0_33, %c0_34] : memref<1x32xf32, #tpu.memory_space<vmem>>, vector<1x32xf32>
    %c0_35 = arith.constant 0 : index
    %c0_36 = arith.constant 0 : index
    %92 = vector.load %arg8[%c0_35, %c0_36] : memref<1x32xf32, #tpu.memory_space<vmem>>, vector<1x32xf32>
    %cst_37 = arith.constant dense<0.000000e+00> : vector<16xf32>
    %93 = vector.multi_reduction <add>, %90, %cst_37 [1] : vector<16x32xf32> to vector<16xf32>
    %94 = vector.shape_cast %93 : vector<16xf32> to vector<16x1xf32>
    %cst_38 = arith.constant 3.200000e+01 : f32
    %95 = vector.broadcast %cst_38 : f32 to vector<16x1xf32>
    %96 = arith.divf %94, %95 : vector<16x1xf32>
    %97 = arith.mulf %90, %90 : vector<16x32xf32>
    %cst_39 = arith.constant dense<0.000000e+00> : vector<16xf32>
    %98 = vector.multi_reduction <add>, %97, %cst_39 [1] : vector<16x32xf32> to vector<16xf32>
    %99 = vector.shape_cast %98 : vector<16xf32> to vector<16x1xf32>
    %cst_40 = arith.constant 3.200000e+01 : f32
    %100 = vector.broadcast %cst_40 : f32 to vector<16x1xf32>
    %101 = arith.divf %99, %100 : vector<16x1xf32>
    %102 = arith.mulf %96, %96 : vector<16x1xf32>
    %103 = arith.subf %101, %102 : vector<16x1xf32>
    %104 = vector.broadcast %96 : vector<16x1xf32> to vector<16x32xf32>
    %105 = arith.subf %90, %104 : vector<16x32xf32>
    %cst_41 = arith.constant 9.99999974E-6 : f32
    %106 = vector.broadcast %cst_41 : f32 to vector<16x1xf32>
    %107 = arith.addf %103, %106 : vector<16x1xf32>
    %108 = math.rsqrt %107 : vector<16x1xf32>
    %109 = vector.broadcast %108 : vector<16x1xf32> to vector<16x32xf32>
    %110 = arith.mulf %105, %109 : vector<16x32xf32>
    %111 = vector.broadcast %91 : vector<1x32xf32> to vector<16x32xf32>
    %112 = arith.mulf %110, %111 : vector<16x32xf32>
    %113 = vector.broadcast %92 : vector<1x32xf32> to vector<16x32xf32>
    %114 = arith.addf %112, %113 : vector<16x32xf32>
    %c0_42 = arith.constant 0 : index
    %c0_43 = arith.constant 0 : index
    %115 = vector.load %arg9[%c0_42, %c0_43] : memref<32x64xf32, #tpu.memory_space<vmem>>, vector<32x64xf32>
    %cst_44 = arith.constant dense<0.000000e+00> : vector<16x64xf32>
    %116 = tpu.matmul %114, %115, %cst_44 {dimension_numbers = #tpu.dot_dimension_numbers<[1], [0], [0], [1], [0, 0, 1, 1], [], []>} : vector<16x32xf32>, vector<32x64xf32>, vector<16x64xf32> -> vector<16x64xf32>
    %c0_45 = arith.constant 0 : index
    %c0_46 = arith.constant 0 : index
    %117 = vector.load %arg10[%c0_45, %c0_46] : memref<1x64xf32, #tpu.memory_space<vmem>>, vector<1x64xf32>
    %118 = vector.broadcast %117 : vector<1x64xf32> to vector<16x64xf32>
    %119 = arith.addf %116, %118 : vector<16x64xf32>
    %cst_47 = arith.constant 0.000000e+00 : f32
    %120 = vector.broadcast %cst_47 : f32 to vector<16x64xf32>
    %121 = arith.maximumf %119, %120 : vector<16x64xf32>
    %c0_48 = arith.constant 0 : index
    %c0_49 = arith.constant 0 : index
    %122 = vector.load %arg11[%c0_48, %c0_49] : memref<64x32xf32, #tpu.memory_space<vmem>>, vector<64x32xf32>
    %cst_50 = arith.constant dense<0.000000e+00> : vector<16x32xf32>
    %123 = tpu.matmul %121, %122, %cst_50 {dimension_numbers = #tpu.dot_dimension_numbers<[1], [0], [0], [1], [0, 0, 1, 1], [], []>} : vector<16x64xf32>, vector<64x32xf32>, vector<16x32xf32> -> vector<16x32xf32>
    %c0_51 = arith.constant 0 : index
    %c0_52 = arith.constant 0 : index
    %124 = vector.load %arg12[%c0_51, %c0_52] : memref<1x32xf32, #tpu.memory_space<vmem>>, vector<1x32xf32>
    %125 = vector.broadcast %124 : vector<1x32xf32> to vector<16x32xf32>
    %126 = arith.addf %123, %125 : vector<16x32xf32>
    %127 = arith.addf %114, %126 : vector<16x32xf32>
    %c0_53 = arith.constant 0 : index
    %c0_54 = arith.constant 0 : index
    %128 = vector.load %arg13[%c0_53, %c0_54] : memref<1x32xf32, #tpu.memory_space<vmem>>, vector<1x32xf32>
    %c0_55 = arith.constant 0 : index
    %c0_56 = arith.constant 0 : index
    %129 = vector.load %arg14[%c0_55, %c0_56] : memref<1x32xf32, #tpu.memory_space<vmem>>, vector<1x32xf32>
    %cst_57 = arith.constant dense<0.000000e+00> : vector<16xf32>
    %130 = vector.multi_reduction <add>, %127, %cst_57 [1] : vector<16x32xf32> to vector<16xf32>
    %131 = vector.shape_cast %130 : vector<16xf32> to vector<16x1xf32>
    %cst_58 = arith.constant 3.200000e+01 : f32
    %132 = vector.broadcast %cst_58 : f32 to vector<16x1xf32>
    %133 = arith.divf %131, %132 : vector<16x1xf32>
    %134 = arith.mulf %127, %127 : vector<16x32xf32>
    %cst_59 = arith.constant dense<0.000000e+00> : vector<16xf32>
    %135 = vector.multi_reduction <add>, %134, %cst_59 [1] : vector<16x32xf32> to vector<16xf32>
    %136 = vector.shape_cast %135 : vector<16xf32> to vector<16x1xf32>
    %cst_60 = arith.constant 3.200000e+01 : f32
    %137 = vector.broadcast %cst_60 : f32 to vector<16x1xf32>
    %138 = arith.divf %136, %137 : vector<16x1xf32>
    %139 = arith.mulf %133, %133 : vector<16x1xf32>
    %140 = arith.subf %138, %139 : vector<16x1xf32>
    %141 = vector.broadcast %133 : vector<16x1xf32> to vector<16x32xf32>
    %142 = arith.subf %127, %141 : vector<16x32xf32>
    %cst_61 = arith.constant 9.99999974E-6 : f32
    %143 = vector.broadcast %cst_61 : f32 to vector<16x1xf32>
    %144 = arith.addf %140, %143 : vector<16x1xf32>
    %145 = math.rsqrt %144 : vector<16x1xf32>
    %146 = vector.broadcast %145 : vector<16x1xf32> to vector<16x32xf32>
    %147 = arith.mulf %142, %146 : vector<16x32xf32>
    %148 = vector.broadcast %128 : vector<1x32xf32> to vector<16x32xf32>
    %149 = arith.mulf %147, %148 : vector<16x32xf32>
    %150 = vector.broadcast %129 : vector<1x32xf32> to vector<16x32xf32>
    %151 = arith.addf %149, %150 : vector<16x32xf32>
    %c0_62 = arith.constant 0 : index
    %c0_63 = arith.constant 0 : index
    %152 = vector.load %arg15[%c0_62, %c0_63] : memref<32x48xf32, #tpu.memory_space<vmem>>, vector<32x48xf32>
    %cst_64 = arith.constant dense<0.000000e+00> : vector<16x48xf32>
    %153 = tpu.matmul %151, %152, %cst_64 {dimension_numbers = #tpu.dot_dimension_numbers<[1], [0], [0], [1], [0, 0, 1, 1], [], []>} : vector<16x32xf32>, vector<32x48xf32>, vector<16x48xf32> -> vector<16x48xf32>
    %154 = vector.extract_strided_slice %153 {offsets = [0, 0], sizes = [16, 16], strides = [1, 1]} : vector<16x48xf32> to vector<16x16xf32>
    %155 = vector.extract_strided_slice %153 {offsets = [0, 16], sizes = [16, 16], strides = [1, 1]} : vector<16x48xf32> to vector<16x16xf32>
    %156 = vector.extract_strided_slice %153 {offsets = [0, 32], sizes = [16, 16], strides = [1, 1]} : vector<16x48xf32> to vector<16x16xf32>
    %c1_i32 = arith.constant 1 : i32
    %157 = tpu.dynamic_rotate %154 by %c1_i32 dim 0 : vector<16x16xf32>, i32 -> vector<16x16xf32>
    %c15_i32 = arith.constant 15 : i32
    %158 = tpu.dynamic_rotate %156 by %c15_i32 dim 0 : vector<16x16xf32>, i32 -> vector<16x16xf32>
    %159 = tpu.iota {dimensions = array<i32: 1>} : vector<2x8x16xi32>
    %160 = vector.shape_cast %159 : vector<2x8x16xi32> to vector<16x16xi32>
    %c0_i32 = arith.constant 0 : i32
    %161 = vector.broadcast %c0_i32 : i32 to vector<16x16xi32>
    %162 = arith.cmpi eq, %160, %161 : vector<16x16xi32>
    %cst_65 = arith.constant 0.000000e+00 : f32
    %163 = vector.broadcast %cst_65 : f32 to vector<16x16xf32>
    %164 = arith.select %162, %163, %157 : vector<16x16xi1>, vector<16x16xf32>
    %165 = arith.addf %155, %164 : vector<16x16xf32>
    %c7_i32 = arith.constant 7 : i32
    %166 = vector.broadcast %c7_i32 : i32 to vector<16x16xi32>
    %167 = arith.cmpi eq, %160, %166 : vector<16x16xi32>
    %cst_66 = arith.constant 0.000000e+00 : f32
    %168 = vector.broadcast %cst_66 : f32 to vector<16x16xf32>
    %169 = arith.select %167, %168, %158 : vector<16x16xi1>, vector<16x16xf32>
    %170 = arith.addf %165, %169 : vector<16x16xf32>
    %c0_67 = arith.constant 0 : index
    %c0_68 = arith.constant 0 : index
    %171 = vector.load %arg16[%c0_67, %c0_68] : memref<1x16xf32, #tpu.memory_space<vmem>>, vector<1x16xf32>
    %172 = vector.broadcast %171 : vector<1x16xf32> to vector<16x16xf32>
    %173 = arith.addf %170, %172 : vector<16x16xf32>
    %cst_69 = arith.constant 0.000000e+00 : f32
    %174 = vector.broadcast %cst_69 : f32 to vector<16x16xf32>
    %175 = arith.maximumf %173, %174 : vector<16x16xf32>
    %176 = vector.shape_cast %175 : vector<16x16xf32> to vector<2x8x16xf32>
    %c0_70 = arith.constant 0 : index
    %c0_71 = arith.constant 0 : index
    %177 = vector.load %arg17[%c0_70, %c0_71] : memref<1x16xf32, #tpu.memory_space<vmem>>, vector<1x16xf32>
    %178 = vector.shape_cast %177 : vector<1x16xf32> to vector<1x1x16xf32>
    %179 = vector.broadcast %178 : vector<1x1x16xf32> to vector<2x8x16xf32>
    %180 = arith.mulf %176, %179 : vector<2x8x16xf32>
    %cst_72 = arith.constant dense<0.000000e+00> : vector<2x8xf32>
    %181 = vector.multi_reduction <add>, %180, %cst_72 [2] : vector<2x8x16xf32> to vector<2x8xf32>
    %c0_73 = arith.constant 0 : index
    %c0_74 = arith.constant 0 : index
    %182 = vector.load %arg18[%c0_73, %c0_74] : memref<1x1xf32, #tpu.memory_space<vmem>>, vector<1x1xf32>
    %183 = vector.broadcast %182 : vector<1x1xf32> to vector<2x8xf32>
    %184 = arith.addf %181, %183 : vector<2x8xf32>
    %c0_75 = arith.constant 0 : index
    %c0_76 = arith.constant 0 : index
    %c0_77 = arith.constant 0 : index
    %185 = vector.load %arg19[%c0_75, %c0_76, %c0_77] : memref<1x2x8xf32, #tpu.memory_space<vmem>>, vector<1x2x8xf32>
    %186 = vector.shape_cast %185 : vector<1x2x8xf32> to vector<2x8xf32>
    %187 = vector.shape_cast %184 : vector<2x8xf32> to vector<1x2x8xf32>
    tpu.vector_store %arg19[%c0_75, %c0_76, %c0_77], %187 {strides = array<i32>} : memref<1x2x8xf32, #tpu.memory_space<vmem>>, vector<1x2x8xf32>,
    return
  }
  func.func @transform_0(%arg0: i32) -> (i32, i32, i32) {
    %c0_i32 = arith.constant 0 : i32
    %c0_i32_0 = arith.constant 0 : i32
    %c0_i32_1 = arith.constant 0 : i32
    return %arg0, %c0_i32, %c0_i32_0 : i32, i32, i32
  }
  func.func @transform_1(%arg0: i32) -> (i32, i32, i32) {
    %c0_i32 = arith.constant 0 : i32
    %c0_i32_0 = arith.constant 0 : i32
    %c0_i32_1 = arith.constant 0 : i32
    return %arg0, %c0_i32, %c0_i32_0 : i32, i32, i32
  }
  func.func @transform_2(%arg0: i32) -> (i32, i32) {
    %c0_i32 = arith.constant 0 : i32
    %c0_i32_0 = arith.constant 0 : i32
    %c0_i32_1 = arith.constant 0 : i32
    return %c0_i32, %c0_i32_0 : i32, i32
  }
  func.func @transform_3(%arg0: i32) -> (i32, i32) {
    %c0_i32 = arith.constant 0 : i32
    %c0_i32_0 = arith.constant 0 : i32
    %c0_i32_1 = arith.constant 0 : i32
    return %c0_i32, %c0_i32_0 : i32, i32
  }
  func.func @transform_4(%arg0: i32) -> (i32, i32) {
    %c0_i32 = arith.constant 0 : i32
    %c0_i32_0 = arith.constant 0 : i32
    %c0_i32_1 = arith.constant 0 : i32
    return %c0_i32, %c0_i32_0 : i32, i32
  }
  func.func @transform_5(%arg0: i32) -> (i32, i32) {
    %c0_i32 = arith.constant 0 : i32
    %c0_i32_0 = arith.constant 0 : i32
    %c0_i32_1 = arith.constant 0 : i32
    return %c0_i32, %c0_i32_0 : i32, i32
  }
  func.func @transform_6(%arg0: i32) -> (i32, i32) {
    %c0_i32 = arith.constant 0 : i32
    %c0_i32_0 = arith.constant 0 : i32
    %c0_i32_1 = arith.constant 0 : i32
    return %c0_i32, %c0_i32_0 : i32, i32
  }
  func.func @transform_7(%arg0: i32) -> (i32, i32) {
    %c0_i32 = arith.constant 0 : i32
    %c0_i32_0 = arith.constant 0 : i32
    %c0_i32_1 = arith.constant 0 : i32
    return %c0_i32, %c0_i32_0 : i32, i32
  }
  func.func @transform_8(%arg0: i32) -> (i32, i32) {
    %c0_i32 = arith.constant 0 : i32
    %c0_i32_0 = arith.constant 0 : i32
    %c0_i32_1 = arith.constant 0 : i32
    return %c0_i32, %c0_i32_0 : i32, i32
  }
  func.func @transform_9(%arg0: i32) -> (i32, i32) {
    %c0_i32 = arith.constant 0 : i32
    %c0_i32_0 = arith.constant 0 : i32
    %c0_i32_1 = arith.constant 0 : i32
    return %c0_i32, %c0_i32_0 : i32, i32
  }
  func.func @transform_10(%arg0: i32) -> (i32, i32) {
    %c0_i32 = arith.constant 0 : i32
    %c0_i32_0 = arith.constant 0 : i32
    %c0_i32_1 = arith.constant 0 : i32
    return %c0_i32, %c0_i32_0 : i32, i32
  }
  func.func @transform_11(%arg0: i32) -> (i32, i32) {
    %c0_i32 = arith.constant 0 : i32
    %c0_i32_0 = arith.constant 0 : i32
    %c0_i32_1 = arith.constant 0 : i32
    return %c0_i32, %c0_i32_0 : i32, i32
  }
  func.func @transform_12(%arg0: i32) -> (i32, i32) {
    %c0_i32 = arith.constant 0 : i32
    %c0_i32_0 = arith.constant 0 : i32
    %c0_i32_1 = arith.constant 0 : i32
    return %c0_i32, %c0_i32_0 : i32, i32
  }
  func.func @transform_13(%arg0: i32) -> (i32, i32) {
    %c0_i32 = arith.constant 0 : i32
    %c0_i32_0 = arith.constant 0 : i32
    %c0_i32_1 = arith.constant 0 : i32
    return %c0_i32, %c0_i32_0 : i32, i32
  }
  func.func @transform_14(%arg0: i32) -> (i32, i32) {
    %c0_i32 = arith.constant 0 : i32
    %c0_i32_0 = arith.constant 0 : i32
    %c0_i32_1 = arith.constant 0 : i32
    return %c0_i32, %c0_i32_0 : i32, i32
  }
  func.func @transform_15(%arg0: i32) -> (i32, i32) {
    %c0_i32 = arith.constant 0 : i32
    %c0_i32_0 = arith.constant 0 : i32
    %c0_i32_1 = arith.constant 0 : i32
    return %c0_i32, %c0_i32_0 : i32, i32
  }
  func.func @transform_16(%arg0: i32) -> (i32, i32) {
    %c0_i32 = arith.constant 0 : i32
    %c0_i32_0 = arith.constant 0 : i32
    %c0_i32_1 = arith.constant 0 : i32
    return %c0_i32, %c0_i32_0 : i32, i32
  }
  func.func @transform_17(%arg0: i32) -> (i32, i32) {
    %c0_i32 = arith.constant 0 : i32
    %c0_i32_0 = arith.constant 0 : i32
    %c0_i32_1 = arith.constant 0 : i32
    return %c0_i32, %c0_i32_0 : i32, i32
  }
  func.func @transform_18(%arg0: i32) -> (i32, i32, i32) {
    %c0_i32 = arith.constant 0 : i32
    %c0_i32_0 = arith.constant 0 : i32
    %c0_i32_1 = arith.constant 0 : i32
    return %arg0, %c0_i32, %c0_i32_0 : i32, i32, i32
  }
}

</mosaic_0001>

<llo_original>
// kernel: tpu_custom_call.1
$region0: #{tpu_custom_call.1}
  #allocation0 [shape = 'u32[]', space=smem, size = 0x4, offset = 0x4, fixed_abs, tag = 'smem constant byte address 0x4 - core index']
  #allocation1 [shape = 'u32[144,128]{1,0:T(1,128)}', space=vmem, size = 0x12000, scoped, tag = 'internal scratch']
  #allocation2 [shape = 'f32[1,1]{1,0:T(1,128)S(1)}', space=vmem, size = 0x200, scoped, tag = 'scoped memory for tpu_custom_call.1']
  %s0 = inlined_call_operand.vmem [shape: f32[4,8,32], index: 0, kind: input, shape index: {}]
  %s1 = inlined_call_operand.vmem [shape: f32[4,8,1], index: 1, kind: input, shape index: {}]
  %s2 = inlined_call_operand.vmem [shape: f32[32,96], index: 2, kind: input, shape index: {}]
  %s3 = inlined_call_operand.vmem [shape: f32[1,96], index: 3, kind: input, shape index: {}]
  %s4 = inlined_call_operand.vmem [shape: f32[32,32], index: 4, kind: input, shape index: {}]
  %s5 = inlined_call_operand.vmem [shape: f32[1,32], index: 5, kind: input, shape index: {}]
  %s6 = inlined_call_operand.hbm [shape: f32[1,32], index: 6, kind: input, shape index: {}]
  %s7 = inlined_call_operand.hbm [shape: f32[1,32], index: 7, kind: input, shape index: {}]
  %s8 = inlined_call_operand.vmem [shape: f32[32,64], index: 8, kind: input, shape index: {}]
  %s9 = inlined_call_operand.vmem [shape: f32[1,64], index: 9, kind: input, shape index: {}]
  %s10 = inlined_call_operand.vmem [shape: f32[64,32], index: 10, kind: input, shape index: {}]
  %s11 = inlined_call_operand.vmem [shape: f32[1,32], index: 11, kind: input, shape index: {}]
  %s12 = inlined_call_operand.vmem [shape: f32[1,32], index: 12, kind: input, shape index: {}]
  %s13 = inlined_call_operand.vmem [shape: f32[1,32], index: 13, kind: input, shape index: {}]
  %s14 = inlined_call_operand.hbm [shape: f32[32,48], index: 14, kind: input, shape index: {}]
  %s15 = inlined_call_operand.vmem [shape: f32[1,16], index: 15, kind: input, shape index: {}]
  %s16 = inlined_call_operand.vmem [shape: f32[1,16], index: 16, kind: input, shape index: {}]
  %s17 = inlined_call_operand.<no memory space> [shape: f32[1,1], index: 17, kind: input, shape index: {}]
  %s18 = inlined_call_operand.hbm [shape: f32[2,2,8], index: 18, kind: output, shape index: {}]
  %s19 = sld [smem:[#allocation0]]
  $region117: #{tpu_custom_call.1} parent=0
    _
  %s21 = ssub.s32 1, %s19
  %s22 = scalar_select 0, %s21, %s19
  %v23 = vstv %s17
  %24 = vst [vmem:[#allocation2] sm:$0x1] %v23
  $region1: #{tpu_custom_call.1} parent=0
    #allocation3 [shape = 'u8[512]{0}', space=vmem, size = 0x400, scoped, tag = 'input window, operand 6, single buffered']
    #allocation4 [shape = 's32[2]{0}', space=sflag, size = 0x8, scoped, tag = 'scoped memory for tpu_custom_call.1']
    #allocation5 [shape = 's32[2]{0}', space=sflag, size = 0x8, scoped, tag = 'scoped memory for tpu_custom_call.1']
    #allocation6 [shape = 'u8[512]{0}', space=vmem, size = 0x400, scoped, tag = 'input window, operand 7, single buffered']
    #allocation7 [shape = 's32[1]{0}', space=sflag, size = 0x4, scoped, tag = 'scoped memory for tpu_custom_call.1']
    #allocation8 [shape = 'u8[16384]{0}', space=vmem, size = 0x4000, scoped, tag = 'input window, operand 14, single buffered']
    #allocation9 [shape = 'u8[2048]{0}', space=vmem, size = 0x800, scoped, tag = 'output window, operand 0']
    %25 = vsyncpa [#allocation4], 0
    %26 = vsyncpa [#allocation7], 0
    %27 = vsyncpa [#allocation5], 0
    %s28 = scalar_lea.sflag [#allocation5], 1
    %29 = vsyncpa %s28, 0
    loop: start=0, step=1, limit=4
    $region2: #{tpu_custom_call.1} parent=1 // loop_pre_header
      _
    $region3: #{tpu_custom_call.1} parent=1 // loop_header
      %s31 = sphi 0, %s35
      %p32 = scmp.ge.s32.totalorder %s31, 4
      %s41 = sphi 0, %s43
      %s44 = sphi 0, %s41
      %s45 = sphi 0, %s44
      %s61 = sphi 0, %s45
      %s67 = sphi 0, %s69
      %s70 = sphi 0, %s67
      %s71 = sphi 0, %s70
      %s87 = sphi 0, %s71
      %s91 = sphi 0, %s91
      %s93 = sphi 0, %s91
      %s94 = sphi 0, %s93
      %s108 = sphi 0, %s94
      %s112 = sphi 0, %s112
      %s114 = sphi 0, %s112
      %s115 = sphi 0, %s114
      %s129 = sphi 0, %s115
      %s133 = sphi 0, %s133
      %s135 = sphi 0, %s133
      %s136 = sphi 0, %s135
      %s150 = sphi 0, %s136
      %s154 = sphi 0, %s154
      %s156 = sphi 0, %s154
      %s157 = sphi 0, %s156
      %s171 = sphi 0, %s157
      %s175 = sphi 0, %s175
      %s177 = sphi 0, %s175
      %s178 = sphi 0, %s177
      %s192 = sphi 0, %s178
      %s196 = sphi 0, %s196
      %s198 = sphi 0, %s196
      %s199 = sphi 0, %s198
      %s213 = sphi 0, %s199
      %s217 = sphi 0, %s217
      %s219 = sphi 0, %s217
      %s220 = sphi 0, %s219
      %s234 = sphi 0, %s220
      %s238 = sphi 0, %s238
      %s240 = sphi 0, %s238
      %s241 = sphi 0, %s240
      %s255 = sphi 0, %s241
      %s259 = sphi 0, %s259
      %s261 = sphi 0, %s259
      %s262 = sphi 0, %s261
      %s276 = sphi 0, %s262
      %s280 = sphi 0, %s280
      %s282 = sphi 0, %s280
      %s283 = sphi 0, %s282
      %s297 = sphi 0, %s283
      %s301 = sphi 0, %s301
      %s303 = sphi 0, %s301
      %s304 = sphi 0, %s303
      %s318 = sphi 0, %s304
      %s322 = sphi 0, %s322
      %s324 = sphi 0, %s322
      %s325 = sphi 0, %s324
      %s339 = sphi 0, %s325
      %s343 = sphi 0, %s343
      %s345 = sphi 0, %s343
      %s346 = sphi 0, %s345
      %s360 = sphi 0, %s346
      %s364 = sphi 0, %s364
      %s366 = sphi 0, %s364
      %s367 = sphi 0, %s366
      %s381 = sphi 0, %s367
      %s385 = sphi 0, %s385
      %s387 = sphi 0, %s385
      %s388 = sphi 0, %s387
      %s402 = sphi 0, %s388
      %s406 = sphi 0, %s406
      %s408 = sphi 0, %s406
      %s409 = sphi 0, %s408
      %s423 = sphi 0, %s409
      %s429 = sphi 0, %s431
      %s432 = sphi 0, %s429
      %s433 = sphi 0, %s432
      %s449 = sphi 0, %s433
    $region4: #{tpu_custom_call.1} parent=1 // loop_header_branch
      %34 = sbr.rel (%p32) target = $region8
    $region5: #{tpu_custom_call.1} parent=1 // loop_body
      %s36 = ssub.s32 %s31, 1
      %s37 = ssub.s32 %s31, 2
      %s38 = sadd.s32 %s31, 1
      %s39 = ssub.s32 %s31, %s38
      %p40 = scmp.eq.s32.totalorder %s39, 0
      %s42 = sadd.s32 %s41, 1
      %s43 = scalar_select %p40, %s41, %s42
      %p46 = pneg %p40
      %p47 = scmp.eq.s32.totalorder %s31, 1
      %p48 = por %p46, %p47
      %p49 = scmp.ne.s32.totalorder %s41, %s44
      %p50 = scmp.eq.s32.totalorder %s31, 0
      %p51 = por %p49, %p50
      %p52 = scmp.ne.s32.totalorder %s41, %s44
      %p53 = scmp.eq.s32.totalorder %s36, 1
      %p54 = por %p52, %p53
      %p55 = scmp.ne.s32.totalorder %s44, %s45
      %p56 = scmp.eq.s32.totalorder %s36, 0
      %p57 = por %p55, %p56
      %p58 = scmp.ne.s32.totalorder %s44, %s45
      %p59 = scmp.eq.s32.totalorder %s37, 1
      %p60 = por %p58, %p59
      %p62 = scmp.ne.s32.totalorder %s45, %s61
      %p63 = scmp.eq.s32.totalorder %s37, 0
      %p64 = por %p62, %p63
      %s65 = ssub.s32 %s31, %s38
      %p66 = scmp.eq.s32.totalorder %s65, 0
      %s68 = sadd.s32 %s67, 1
      %s69 = scalar_select %p66, %s67, %s68
      %p72 = pneg %p66
      %p73 = scmp.eq.s32.totalorder %s31, 1
      %p74 = por %p72, %p73
      %p75 = scmp.ne.s32.totalorder %s67, %s70
      %p76 = scmp.eq.s32.totalorder %s31, 0
      %p77 = por %p75, %p76
      %p78 = scmp.ne.s32.totalorder %s67, %s70
      %p79 = scmp.eq.s32.totalorder %s36, 1
      %p80 = por %p78, %p79
      %p81 = scmp.ne.s32.totalorder %s70, %s71
      %p82 = scmp.eq.s32.totalorder %s36, 0
      %p83 = por %p81, %p82
      %p84 = scmp.ne.s32.totalorder %s70, %s71
      %p85 = scmp.eq.s32.totalorder %s37, 1
      %p86 = por %p84, %p85
      %p88 = scmp.ne.s32.totalorder %s71, %s87
      %p89 = scmp.eq.s32.totalorder %s37, 0
      %p90 = por %p88, %p89
      %s92 = sadd.s32 %s91, 1
      %p95 = scmp.eq.s32.totalorder %s31, 1
      %p96 = scmp.ne.s32.totalorder %s91, %s93
      %p97 = scmp.eq.s32.totalorder %s31, 0
      %p98 = por %p96, %p97
      %p99 = scmp.ne.s32.totalorder %s91, %s93
      %p100 = scmp.eq.s32.totalorder %s36, 1
      %p101 = por %p99, %p100
      %p102 = scmp.ne.s32.totalorder %s93, %s94
      %p103 = scmp.eq.s32.totalorder %s36, 0
      %p104 = por %p102, %p103
      %p105 = scmp.ne.s32.totalorder %s93, %s94
      %p106 = scmp.eq.s32.totalorder %s37, 1
      %p107 = por %p105, %p106
      %p109 = scmp.ne.s32.totalorder %s94, %s108
      %p110 = scmp.eq.s32.totalorder %s37, 0
      %p111 = por %p109, %p110
      %s113 = sadd.s32 %s112, 1
      %p116 = scmp.eq.s32.totalorder %s31, 1
      %p117 = scmp.ne.s32.totalorder %s112, %s114
      %p118 = scmp.eq.s32.totalorder %s31, 0
      %p119 = por %p117, %p118
      %p120 = scmp.ne.s32.totalorder %s112, %s114
      %p121 = scmp.eq.s32.totalorder %s36, 1
      %p122 = por %p120, %p121
      %p123 = scmp.ne.s32.totalorder %s114, %s115
      %p124 = scmp.eq.s32.totalorder %s36, 0
      %p125 = por %p123, %p124
      %p126 = scmp.ne.s32.totalorder %s114, %s115
      %p127 = scmp.eq.s32.totalorder %s37, 1
      %p128 = por %p126, %p127
      %p130 = scmp.ne.s32.totalorder %s115, %s129
      %p131 = scmp.eq.s32.totalorder %s37, 0
      %p132 = por %p130, %p131
      %s134 = sadd.s32 %s133, 1
      %p137 = scmp.eq.s32.totalorder %s31, 1
      %p138 = scmp.ne.s32.totalorder %s133, %s135
      %p139 = scmp.eq.s32.totalorder %s31, 0
      %p140 = por %p138, %p139
      %p141 = scmp.ne.s32.totalorder %s133, %s135
      %p142 = scmp.eq.s32.totalorder %s36, 1
      %p143 = por %p141, %p142
      %p144 = scmp.ne.s32.totalorder %s135, %s136
      %p145 = scmp.eq.s32.totalorder %s36, 0
      %p146 = por %p144, %p145
      %p147 = scmp.ne.s32.totalorder %s135, %s136
      %p148 = scmp.eq.s32.totalorder %s37, 1
      %p149 = por %p147, %p148
      %p151 = scmp.ne.s32.totalorder %s136, %s150
      %p152 = scmp.eq.s32.totalorder %s37, 0
      %p153 = por %p151, %p152
      %s155 = sadd.s32 %s154, 1
      %p158 = scmp.eq.s32.totalorder %s31, 1
      %p159 = scmp.ne.s32.totalorder %s154, %s156
      %p160 = scmp.eq.s32.totalorder %s31, 0
      %p161 = por %p159, %p160
      %p162 = scmp.ne.s32.totalorder %s154, %s156
      %p163 = scmp.eq.s32.totalorder %s36, 1
      %p164 = por %p162, %p163
      %p165 = scmp.ne.s32.totalorder %s156, %s157
      %p166 = scmp.eq.s32.totalorder %s36, 0
      %p167 = por %p165, %p166
      %p168 = scmp.ne.s32.totalorder %s156, %s157
      %p169 = scmp.eq.s32.totalorder %s37, 1
      %p170 = por %p168, %p169
      %p172 = scmp.ne.s32.totalorder %s157, %s171
      %p173 = scmp.eq.s32.totalorder %s37, 0
      %p174 = por %p172, %p173
      %s176 = sadd.s32 %s175, 1
      %p179 = scmp.eq.s32.totalorder %s31, 1
      %p180 = scmp.ne.s32.totalorder %s175, %s177
      %p181 = scmp.eq.s32.totalorder %s31, 0
      %p182 = por %p180, %p181
      %p183 = scmp.ne.s32.totalorder %s175, %s177
      %p184 = scmp.eq.s32.totalorder %s36, 1
      %p185 = por %p183, %p184
      %p186 = scmp.ne.s32.totalorder %s177, %s178
      %p187 = scmp.eq.s32.totalorder %s36, 0
      %p188 = por %p186, %p187
      %p189 = scmp.ne.s32.totalorder %s177, %s178
      %p190 = scmp.eq.s32.totalorder %s37, 1
      %p191 = por %p189, %p190
      %p193 = scmp.ne.s32.totalorder %s178, %s192
      %p194 = scmp.eq.s32.totalorder %s37, 0
      %p195 = por %p193, %p194
      %s197 = sadd.s32 %s196, 1
      %p200 = scmp.eq.s32.totalorder %s31, 1
      %p201 = scmp.ne.s32.totalorder %s196, %s198
      %p202 = scmp.eq.s32.totalorder %s31, 0
      %p203 = por %p201, %p202
      %p204 = scmp.ne.s32.totalorder %s196, %s198
      %p205 = scmp.eq.s32.totalorder %s36, 1
      %p206 = por %p204, %p205
      %p207 = scmp.ne.s32.totalorder %s198, %s199
      %p208 = scmp.eq.s32.totalorder %s36, 0
      %p209 = por %p207, %p208
      %p210 = scmp.ne.s32.totalorder %s198, %s199
      %p211 = scmp.eq.s32.totalorder %s37, 1
      %p212 = por %p210, %p211
      %p214 = scmp.ne.s32.totalorder %s199, %s213
      %p215 = scmp.eq.s32.totalorder %s37, 0
      %p216 = por %p214, %p215
      %s218 = sadd.s32 %s217, 1
      %p221 = scmp.eq.s32.totalorder %s31, 1
      %p222 = scmp.ne.s32.totalorder %s217, %s219
      %p223 = scmp.eq.s32.totalorder %s31, 0
      %p224 = por %p222, %p223
      %p225 = scmp.ne.s32.totalorder %s217, %s219
      %p226 = scmp.eq.s32.totalorder %s36, 1
      %p227 = por %p225, %p226
      %p228 = scmp.ne.s32.totalorder %s219, %s220
      %p229 = scmp.eq.s32.totalorder %s36, 0
      %p230 = por %p228, %p229
      %p231 = scmp.ne.s32.totalorder %s219, %s220
      %p232 = scmp.eq.s32.totalorder %s37, 1
      %p233 = por %p231, %p232
      %p235 = scmp.ne.s32.totalorder %s220, %s234
      %p236 = scmp.eq.s32.totalorder %s37, 0
      %p237 = por %p235, %p236
      %s239 = sadd.s32 %s238, 1
      %p242 = scmp.eq.s32.totalorder %s31, 1
      %p243 = scmp.ne.s32.totalorder %s238, %s240
      %p244 = scmp.eq.s32.totalorder %s31, 0
      %p245 = por %p243, %p244
      %p246 = scmp.ne.s32.totalorder %s238, %s240
      %p247 = scmp.eq.s32.totalorder %s36, 1
      %p248 = por %p246, %p247
      %p249 = scmp.ne.s32.totalorder %s240, %s241
      %p250 = scmp.eq.s32.totalorder %s36, 0
      %p251 = por %p249, %p250
      %p252 = scmp.ne.s32.totalorder %s240, %s241
      %p253 = scmp.eq.s32.totalorder %s37, 1
      %p254 = por %p252, %p253
      %p256 = scmp.ne.s32.totalorder %s241, %s255
      %p257 = scmp.eq.s32.totalorder %s37, 0
      %p258 = por %p256, %p257
      %s260 = sadd.s32 %s259, 1
      %p263 = scmp.eq.s32.totalorder %s31, 1
      %p264 = scmp.ne.s32.totalorder %s259, %s261
      %p265 = scmp.eq.s32.totalorder %s31, 0
      %p266 = por %p264, %p265
      %p267 = scmp.ne.s32.totalorder %s259, %s261
      %p268 = scmp.eq.s32.totalorder %s36, 1
      %p269 = por %p267, %p268
      %p270 = scmp.ne.s32.totalorder %s261, %s262
      %p271 = scmp.eq.s32.totalorder %s36, 0
      %p272 = por %p270, %p271
      %p273 = scmp.ne.s32.totalorder %s261, %s262
      %p274 = scmp.eq.s32.totalorder %s37, 1
      %p275 = por %p273, %p274
      %p277 = scmp.ne.s32.totalorder %s262, %s276
      %p278 = scmp.eq.s32.totalorder %s37, 0
      %p279 = por %p277, %p278
      %s281 = sadd.s32 %s280, 1
      %p284 = scmp.eq.s32.totalorder %s31, 1
      %p285 = scmp.ne.s32.totalorder %s280, %s282
      %p286 = scmp.eq.s32.totalorder %s31, 0
      %p287 = por %p285, %p286
      %p288 = scmp.ne.s32.totalorder %s280, %s282
      %p289 = scmp.eq.s32.totalorder %s36, 1
      %p290 = por %p288, %p289
      %p291 = scmp.ne.s32.totalorder %s282, %s283
      %p292 = scmp.eq.s32.totalorder %s36, 0
      %p293 = por %p291, %p292
      %p294 = scmp.ne.s32.totalorder %s282, %s283
      %p295 = scmp.eq.s32.totalorder %s37, 1
      %p296 = por %p294, %p295
      %p298 = scmp.ne.s32.totalorder %s283, %s297
      %p299 = scmp.eq.s32.totalorder %s37, 0
      %p300 = por %p298, %p299
      %s302 = sadd.s32 %s301, 1
      %p305 = scmp.eq.s32.totalorder %s31, 1
      %p306 = scmp.ne.s32.totalorder %s301, %s303
      %p307 = scmp.eq.s32.totalorder %s31, 0
      %p308 = por %p306, %p307
      %p309 = scmp.ne.s32.totalorder %s301, %s303
      %p310 = scmp.eq.s32.totalorder %s36, 1
      %p311 = por %p309, %p310
      %p312 = scmp.ne.s32.totalorder %s303, %s304
      %p313 = scmp.eq.s32.totalorder %s36, 0
      %p314 = por %p312, %p313
      %p315 = scmp.ne.s32.totalorder %s303, %s304
      %p316 = scmp.eq.s32.totalorder %s37, 1
      %p317 = por %p315, %p316
      %p319 = scmp.ne.s32.totalorder %s304, %s318
      %p320 = scmp.eq.s32.totalorder %s37, 0
      %p321 = por %p319, %p320
      %s323 = sadd.s32 %s322, 1
      %p326 = scmp.eq.s32.totalorder %s31, 1
      %p327 = scmp.ne.s32.totalorder %s322, %s324
      %p328 = scmp.eq.s32.totalorder %s31, 0
      %p329 = por %p327, %p328
      %p330 = scmp.ne.s32.totalorder %s322, %s324
      %p331 = scmp.eq.s32.totalorder %s36, 1
      %p332 = por %p330, %p331
      %p333 = scmp.ne.s32.totalorder %s324, %s325
      %p334 = scmp.eq.s32.totalorder %s36, 0
      %p335 = por %p333, %p334
      %p336 = scmp.ne.s32.totalorder %s324, %s325
      %p337 = scmp.eq.s32.totalorder %s37, 1
      %p338 = por %p336, %p337
      %p340 = scmp.ne.s32.totalorder %s325, %s339
      %p341 = scmp.eq.s32.totalorder %s37, 0
      %p342 = por %p340, %p341
      %s344 = sadd.s32 %s343, 1
      %p347 = scmp.eq.s32.totalorder %s31, 1
      %p348 = scmp.ne.s32.totalorder %s343, %s345
      %p349 = scmp.eq.s32.totalorder %s31, 0
      %p350 = por %p348, %p349
      %p351 = scmp.ne.s32.totalorder %s343, %s345
      %p352 = scmp.eq.s32.totalorder %s36, 1
      %p353 = por %p351, %p352
      %p354 = scmp.ne.s32.totalorder %s345, %s346
      %p355 = scmp.eq.s32.totalorder %s36, 0
      %p356 = por %p354, %p355
      %p357 = scmp.ne.s32.totalorder %s345, %s346
      %p358 = scmp.eq.s32.totalorder %s37, 1
      %p359 = por %p357, %p358
      %p361 = scmp.ne.s32.totalorder %s346, %s360
      %p362 = scmp.eq.s32.totalorder %s37, 0
      %p363 = por %p361, %p362
      %s365 = sadd.s32 %s364, 1
      %p368 = scmp.eq.s32.totalorder %s31, 1
      %p369 = scmp.ne.s32.totalorder %s364, %s366
      %p370 = scmp.eq.s32.totalorder %s31, 0
      %p371 = por %p369, %p370
      %p372 = scmp.ne.s32.totalorder %s364, %s366
      %p373 = scmp.eq.s32.totalorder %s36, 1
      %p374 = por %p372, %p373
      %p375 = scmp.ne.s32.totalorder %s366, %s367
      %p376 = scmp.eq.s32.totalorder %s36, 0
      %p377 = por %p375, %p376
      %p378 = scmp.ne.s32.totalorder %s366, %s367
      %p379 = scmp.eq.s32.totalorder %s37, 1
      %p380 = por %p378, %p379
      %p382 = scmp.ne.s32.totalorder %s367, %s381
      %p383 = scmp.eq.s32.totalorder %s37, 0
      %p384 = por %p382, %p383
      %s386 = sadd.s32 %s385, 1
      %p389 = scmp.eq.s32.totalorder %s31, 1
      %p390 = scmp.ne.s32.totalorder %s385, %s387
      %p391 = scmp.eq.s32.totalorder %s31, 0
      %p392 = por %p390, %p391
      %p393 = scmp.ne.s32.totalorder %s385, %s387
      %p394 = scmp.eq.s32.totalorder %s36, 1
      %p395 = por %p393, %p394
      %p396 = scmp.ne.s32.totalorder %s387, %s388
      %p397 = scmp.eq.s32.totalorder %s36, 0
      %p398 = por %p396, %p397
      %p399 = scmp.ne.s32.totalorder %s387, %s388
      %p400 = scmp.eq.s32.totalorder %s37, 1
      %p401 = por %p399, %p400
      %p403 = scmp.ne.s32.totalorder %s388, %s402
      %p404 = scmp.eq.s32.totalorder %s37, 0
      %p405 = por %p403, %p404
      %s407 = sadd.s32 %s406, 1
      %p410 = scmp.eq.s32.totalorder %s31, 1
      %p411 = scmp.ne.s32.totalorder %s406, %s408
      %p412 = scmp.eq.s32.totalorder %s31, 0
      %p413 = por %p411, %p412
      %p414 = scmp.ne.s32.totalorder %s406, %s408
      %p415 = scmp.eq.s32.totalorder %s36, 1
      %p416 = por %p414, %p415
      %p417 = scmp.ne.s32.totalorder %s408, %s409
      %p418 = scmp.eq.s32.totalorder %s36, 0
      %p419 = por %p417, %p418
      %p420 = scmp.ne.s32.totalorder %s408, %s409
      %p421 = scmp.eq.s32.totalorder %s37, 1
      %p422 = por %p420, %p421
      %p424 = scmp.ne.s32.totalorder %s409, %s423
      %p425 = scmp.eq.s32.totalorder %s37, 0
      %p426 = por %p424, %p425
      %s427 = ssub.s32 %s31, %s38
      %p428 = scmp.eq.s32.totalorder %s427, 0
      %s430 = sadd.s32 %s429, 1
      %s431 = scalar_select %p428, %s429, %s430
      %p434 = pneg %p428
      %p435 = scmp.eq.s32.totalorder %s31, 1
      %p436 = por %p434, %p435
      %p437 = scmp.ne.s32.totalorder %s429, %s432
      %p438 = scmp.eq.s32.totalorder %s31, 0
      %p439 = por %p437, %p438
      %p440 = scmp.ne.s32.totalorder %s429, %s432
      %p441 = scmp.eq.s32.totalorder %s36, 1
      %p442 = por %p440, %p441
      %p443 = scmp.ne.s32.totalorder %s432, %s433
      %p444 = scmp.eq.s32.totalorder %s36, 0
      %p445 = por %p443, %p444
      %p446 = scmp.ne.s32.totalorder %s432, %s433
      %p447 = scmp.eq.s32.totalorder %s37, 1
      %p448 = por %p446, %p447
      %p450 = scmp.ne.s32.totalorder %s433, %s449
      %p451 = scmp.eq.s32.totalorder %s37, 0
      %p452 = por %p450, %p451
      %p453 = scmp.le.s32.totalorder 1, %s31
      %p454 = scmp.lt.s32.totalorder %s31, 3
      %p455 = pnand %p453, %p454
      %p456 = pneg %p455
      // Predicated region
      $region9: #{tpu_custom_call.1} parent=5 // pred_check
        _
      $region10: #{tpu_custom_call.1} parent=5 // pred_check_branch
        %458 = sbr.rel (%p455) target = $region12
      $region11: #{tpu_custom_call.1} parent=5 // pred_region
        %s459 = ssub.s32 %s31, 1
        // Predicated region
        $region13: #{tpu_custom_call.1} parent=11 // pred_check
          %p460 = pneg %p104
        $region14: #{tpu_custom_call.1} parent=11 // pred_check_branch
          %462 = sbr.rel (%p460) target = $region16
        $region15: #{tpu_custom_call.1} parent=11 // pred_region
          _
        $region16: #{tpu_custom_call.1} parent=11 // pred_fallthru
          _
        // Predicated region
        $region17: #{tpu_custom_call.1} parent=11 // pred_check
          %p463 = pneg %p125
        $region18: #{tpu_custom_call.1} parent=11 // pred_check_branch
          %465 = sbr.rel (%p463) target = $region20
        $region19: #{tpu_custom_call.1} parent=11 // pred_region
          _
        $region20: #{tpu_custom_call.1} parent=11 // pred_fallthru
          _
        // Predicated region
        $region21: #{tpu_custom_call.1} parent=11 // pred_check
          %p466 = pneg %p146
        $region22: #{tpu_custom_call.1} parent=11 // pred_check_branch
          %468 = sbr.rel (%p466) target = $region24
        $region23: #{tpu_custom_call.1} parent=11 // pred_region
          _
        $region24: #{tpu_custom_call.1} parent=11 // pred_fallthru
          _
        // Predicated region
        $region25: #{tpu_custom_call.1} parent=11 // pred_check
          %p469 = pneg %p167
        $region26: #{tpu_custom_call.1} parent=11 // pred_check_branch
          %471 = sbr.rel (%p469) target = $region28
        $region27: #{tpu_custom_call.1} parent=11 // pred_region
          _
        $region28: #{tpu_custom_call.1} parent=11 // pred_fallthru
          _
        // Predicated region
        $region29: #{tpu_custom_call.1} parent=11 // pred_check
          %p472 = pneg %p188
        $region30: #{tpu_custom_call.1} parent=11 // pred_check_branch
          %474 = sbr.rel (%p472) target = $region32
        $region31: #{tpu_custom_call.1} parent=11 // pred_region
          %s476 = ssub.s32 16, 16
          %477 = vsyncadd [#allocation4], %s476
          %s479 = sshll.u32 [#allocation3], 4
          %s480 = int_to_ptr.vmem [resolvable:$true] %s479
          %482 = dma.hbm_to_vmem [thread:$0]  %s6, 16, %s480, [#allocation4]
        $region32: #{tpu_custom_call.1} parent=11 // pred_fallthru
          _
        // Predicated region
        $region33: #{tpu_custom_call.1} parent=11 // pred_check
          %p483 = pneg %p209
        $region34: #{tpu_custom_call.1} parent=11 // pred_check_branch
          %485 = sbr.rel (%p483) target = $region36
        $region35: #{tpu_custom_call.1} parent=11 // pred_region
          %s487 = ssub.s32 16, 16
          %488 = vsyncadd [#allocation7], %s487
          %s490 = sshll.u32 [#allocation6], 4
          %s491 = int_to_ptr.vmem [resolvable:$true] %s490
          %493 = dma.hbm_to_vmem [thread:$0]  %s7, 16, %s491, [#allocation7]
        $region36: #{tpu_custom_call.1} parent=11 // pred_fallthru
          _
        // Predicated region
        $region37: #{tpu_custom_call.1} parent=11 // pred_check
          %p494 = pneg %p230
        $region38: #{tpu_custom_call.1} parent=11 // pred_check_branch
          %496 = sbr.rel (%p494) target = $region40
        $region39: #{tpu_custom_call.1} parent=11 // pred_region
          _
        $region40: #{tpu_custom_call.1} parent=11 // pred_fallthru
          _
        // Predicated region
        $region41: #{tpu_custom_call.1} parent=11 // pred_check
          %p497 = pneg %p251
        $region42: #{tpu_custom_call.1} parent=11 // pred_check_branch
          %499 = sbr.rel (%p497) target = $region44
        $region43: #{tpu_custom_call.1} parent=11 // pred_region
          _
        $region44: #{tpu_custom_call.1} parent=11 // pred_fallthru
          _
        // Predicated region
        $region45: #{tpu_custom_call.1} parent=11 // pred_check
          %p500 = pneg %p272
        $region46: #{tpu_custom_call.1} parent=11 // pred_check_branch
          %502 = sbr.rel (%p500) target = $region48
        $region47: #{tpu_custom_call.1} parent=11 // pred_region
          _
        $region48: #{tpu_custom_call.1} parent=11 // pred_fallthru
          _
        // Predicated region
        $region49: #{tpu_custom_call.1} parent=11 // pred_check
          %p503 = pneg %p293
        $region50: #{tpu_custom_call.1} parent=11 // pred_check_branch
          %505 = sbr.rel (%p503) target = $region52
        $region51: #{tpu_custom_call.1} parent=11 // pred_region
          _
        $region52: #{tpu_custom_call.1} parent=11 // pred_fallthru
          _
        // Predicated region
        $region53: #{tpu_custom_call.1} parent=11 // pred_check
          %p506 = pneg %p314
        $region54: #{tpu_custom_call.1} parent=11 // pred_check_branch
          %508 = sbr.rel (%p506) target = $region56
        $region55: #{tpu_custom_call.1} parent=11 // pred_region
          _
        $region56: #{tpu_custom_call.1} parent=11 // pred_fallthru
          _
        // Predicated region
        $region57: #{tpu_custom_call.1} parent=11 // pred_check
          %p509 = pneg %p335
        $region58: #{tpu_custom_call.1} parent=11 // pred_check_branch
          %511 = sbr.rel (%p509) target = $region60
        $region59: #{tpu_custom_call.1} parent=11 // pred_region
          _
        $region60: #{tpu_custom_call.1} parent=11 // pred_fallthru
          _
        // Predicated region
        $region61: #{tpu_custom_call.1} parent=11 // pred_check
          %p512 = pneg %p356
        $region62: #{tpu_custom_call.1} parent=11 // pred_check_branch
          %514 = sbr.rel (%p512) target = $region64
        $region63: #{tpu_custom_call.1} parent=11 // pred_region
          %s516 = ssub.s32 512, 512
          %517 = vsyncadd [#allocation7], %s516
          %s518 = sshll.u32 [#allocation8], 4
          %s519 = int_to_ptr.vmem [resolvable:$true] %s518
          %524 = dma.hbm_to_vmem [thread:$0]  %s14, 512, %s519, [#allocation7], 128, 128, 8
        $region64: #{tpu_custom_call.1} parent=11 // pred_fallthru
          _
        // Predicated region
        $region65: #{tpu_custom_call.1} parent=11 // pred_check
          %p525 = pneg %p377
        $region66: #{tpu_custom_call.1} parent=11 // pred_check_branch
          %527 = sbr.rel (%p525) target = $region68
        $region67: #{tpu_custom_call.1} parent=11 // pred_region
          _
        $region68: #{tpu_custom_call.1} parent=11 // pred_fallthru
          _
        // Predicated region
        $region69: #{tpu_custom_call.1} parent=11 // pred_check
          %p528 = pneg %p398
        $region70: #{tpu_custom_call.1} parent=11 // pred_check_branch
          %530 = sbr.rel (%p528) target = $region72
        $region71: #{tpu_custom_call.1} parent=11 // pred_region
          _
        $region72: #{tpu_custom_call.1} parent=11 // pred_fallthru
          _
        // Predicated region
        $region73: #{tpu_custom_call.1} parent=11 // pred_check
          %p531 = pneg %p419
        $region74: #{tpu_custom_call.1} parent=11 // pred_check_branch
          %533 = sbr.rel (%p531) target = $region76
        $region75: #{tpu_custom_call.1} parent=11 // pred_region
          _
        $region76: #{tpu_custom_call.1} parent=11 // pred_fallthru
          _
      $region12: #{tpu_custom_call.1} parent=5 // pred_fallthru
        _
      %p534 = scmp.lt.s32.totalorder %s31, 2
      // Predicated region
      $region77: #{tpu_custom_call.1} parent=5 // pred_check
        %p535 = pneg %p534
      $region78: #{tpu_custom_call.1} parent=5 // pred_check_branch
        %537 = sbr.rel (%p535) target = $region80
      $region79: #{tpu_custom_call.1} parent=5 // pred_region
        // Predicated region
        $region81: #{tpu_custom_call.1} parent=79 // pred_check
          %p538 = pneg %p51
        $region82: #{tpu_custom_call.1} parent=79 // pred_check_branch
          %540 = sbr.rel (%p538) target = $region84
        $region83: #{tpu_custom_call.1} parent=79 // pred_region
          %s541 = smul.u32 2, %s31
          %p542 = scmp.lt.s32.totalorder %s541, 3
          %s543 = scalar_select %p542, %s541, 3
          %s544 = smul.addr %s543, 8
          %s545 = scalar_lea.vmem %s0, %s544
          %s546 = smul.u32 2, %s31
        $region84: #{tpu_custom_call.1} parent=79 // pred_fallthru
          _
        // Predicated region
        $region85: #{tpu_custom_call.1} parent=79 // pred_check
          %p547 = pneg %p77
        $region86: #{tpu_custom_call.1} parent=79 // pred_check_branch
          %549 = sbr.rel (%p547) target = $region88
        $region87: #{tpu_custom_call.1} parent=79 // pred_region
          %s550 = smul.u32 2, %s31
          %p551 = scmp.lt.s32.totalorder %s550, 3
          %s552 = scalar_select %p551, %s550, 3
          %s553 = smul.addr %s552, 8
          %s554 = scalar_lea.vmem %s1, %s553
          %s555 = smul.u32 2, %s31
        $region88: #{tpu_custom_call.1} parent=79 // pred_fallthru
          _
      $region80: #{tpu_custom_call.1} parent=5 // pred_fallthru
        _
      %p556 = scmp.le.s32.totalorder 1, %s31
      %p557 = scmp.lt.s32.totalorder %s31, 3
      %p558 = pnand %p556, %p557
      %p559 = pneg %p558
      // Predicated region
      $region89: #{tpu_custom_call.1} parent=5 // pred_check
        _
      $region90: #{tpu_custom_call.1} parent=5 // pred_check_branch
        %561 = sbr.rel (%p558) target = $region92
      $region91: #{tpu_custom_call.1} parent=5 // pred_region
        %s562 = ssub.s32 %s31, 1
        // Predicated region
        $region93: #{tpu_custom_call.1} parent=91 // pred_check
          %p563 = pneg %p188
        $region94: #{tpu_custom_call.1} parent=91 // pred_check_branch
          %565 = sbr.rel (%p563) target = $region96
        $region95: #{tpu_custom_call.1} parent=91 // pred_region
          %566 = dma.done [#allocation4], 16
        $region96: #{tpu_custom_call.1} parent=91 // pred_fallthru
          _
        // Predicated region
        $region97: #{tpu_custom_call.1} parent=91 // pred_check
          %p567 = pneg %p209
        $region98: #{tpu_custom_call.1} parent=91 // pred_check_branch
          %569 = sbr.rel (%p567) target = $region100
        $region99: #{tpu_custom_call.1} parent=91 // pred_region
          %570 = dma.done [#allocation7], 16
        $region100: #{tpu_custom_call.1} parent=91 // pred_fallthru
          _
        // Predicated region
        $region101: #{tpu_custom_call.1} parent=91 // pred_check
          %p571 = pneg %p356
        $region102: #{tpu_custom_call.1} parent=91 // pred_check_branch
          %573 = sbr.rel (%p571) target = $region104
        $region103: #{tpu_custom_call.1} parent=91 // pred_region
          %574 = dma.done [#allocation7], 512
        $region104: #{tpu_custom_call.1} parent=91 // pred_fallthru
          _
        %s575 = smul.u32 2, %s36
        %p576 = scmp.lt.s32.totalorder %s575, 3
        %s577 = scalar_select %p576, %s575, 3
        %s578 = smul.addr %s577, 8
        %s579 = scalar_lea.vmem %s0, %s578
        %p580 = pneg %p57
        %p581 = pneg %p54
        %s582 = smul.u32 2, %s36
        %p583 = scmp.lt.s32.totalorder %s582, 3
        %s584 = scalar_select %p583, %s582, 3
        %s585 = smul.addr %s584, 8
        %s586 = scalar_lea.vmem %s1, %s585
        %p587 = pneg %p83
        %p588 = pneg %p80
        %p589 = pneg %p104
        %p590 = pneg %p101
        %p591 = pneg %p125
        %p592 = pneg %p122
        %p593 = pneg %p146
        %p594 = pneg %p143
        %p595 = pneg %p167
        %p596 = pneg %p164
        %p597 = pneg %p188
        %p598 = pneg %p185
        %p599 = pneg %p209
        %p600 = pneg %p206
        %p601 = pneg %p230
        %p602 = pneg %p227
        %p603 = pneg %p251
        %p604 = pneg %p248
        %p605 = pneg %p272
        %p606 = pneg %p269
        %p607 = pneg %p293
        %p608 = pneg %p290
        %p609 = pneg %p314
        %p610 = pneg %p311
        %p611 = pneg %p335
        %p612 = pneg %p332
        %p613 = pneg %p356
        %p614 = pneg %p353
        %p615 = pneg %p377
        %p616 = pneg %p374
        %p617 = pneg %p398
        %p618 = pneg %p395
        %p619 = pneg %p419
        %p620 = pneg %p416
        %p621 = pneg %p445
        %p622 = pneg %p442
        %s623 = sand.u32 %s432, 1
        %s624 = scalar_lea.sflag [#allocation5], %s623
        %s625 = sand.u32 %s432, 1
        %s626 = smul.addr %s625, 2
        %s627 = scalar_lea.vmem [#allocation9], %s626
        %s628 = smul.u32 2, %s36
        %p629 = scmp.lt.s32.totalorder %s628, 3
        %s630 = scalar_select %p629, %s628, 3
        %s631 = smul.addr %s630, 8
        %s632 = scalar_lea.vmem %s0, %s631
        %s633 = smul.u32 2, %s36
        %s634 = smul.u32 2, %s36
        %p635 = scmp.lt.s32.totalorder %s634, 3
        %s636 = scalar_select %p635, %s634, 3
        %s637 = smul.addr %s636, 8
        %s638 = scalar_lea.vmem %s1, %s637
        %s639 = smul.u32 2, %s36
        %v640 = vld [vmem:[%s632] sm:$0xff]
        %v641 = vld [vmem:[%s632 + $0x8] sm:$0xff]
        %v642 = vld [vmem:[%s638] sm:$0xff]
        %v643 = vld [vmem:[%s638 + $0x8] sm:$0xff]
        %645 = vset.pattern.permute.xlu0 0
        %646 = vperm.xlu0 %645, %v642
        %v647 = vpop.permute.xlu0 %646
        %650 = vset.pattern.permute.xlu0 0
        %651 = vperm.xlu0 %650, %v643
        %v652 = vpop.permute.xlu0 %651
        %v654 = vmul.f32 %v640, %v647
        %v655 = vmul.f32 %v641, %v652
        %v656 = vld [vmem:[%s2] sm:$0xff]
        %v657 = vld [vmem:[%s2 + $0x8] sm:$0xff]
        %v658 = vld [vmem:[%s2 + $0x10] sm:$0xff]
        %v659 = vld [vmem:[%s2 + $0x18] sm:$0xff]
        %v660 = vld [vmem:[%s3] sm:$0x1]
        %v662 = vlaneseq
        %v663 = vshrl.u32 %v662, 7
        %v664 = vsub.s32 0, %v663
        %v665 = vrot.slane %v660, %v664
        %vm667 = vcmask 261120
        %v669 = vsel %vm667, %v654, 0
        %v672 = vsel %vm667, %v655, 0
        %674 = vmatprep.subr.mxu0 0.0
        %675 = vmatpush1.msra.mxu0 %v656
        %676 = vmatprep.subr.mxu0 0.0
        %677 = vmatpush1.msra.mxu0 %v657
        %678 = vmatprep.subr.mxu0 0.0
        %679 = vmatpush1.msra.mxu0 %v658
        %680 = vmatprep.subr.mxu0 0.0
        %681 = vmatpush1.msra.mxu0 %v659
        %682 = vmatprep.subr.mxu0 0.0
        %683 = vmatpush1.msra.mxu0 0.0
        %684 = vmatprep.subr.mxu0 0.0
        %685 = vmatpush1.msra.mxu0 0.0
        %686 = vmatprep.subr.mxu0 0.0
        %687 = vmatpush1.msra.mxu0 0.0
        %688 = vmatprep.subr.mxu0 0.0
        %689 = vmatpush1.msra.mxu0 0.0
        %690 = vmatprep.subr.mxu0 0.0
        %691 = vmatpush1.msra.mxu0 0.0
        %692 = vmatprep.subr.mxu0 0.0
        %693 = vmatpush1.msra.mxu0 0.0
        %694 = vmatprep.subr.mxu0 0.0
        %695 = vmatpush1.msra.mxu0 0.0
        %696 = vmatprep.subr.mxu0 0.0
        %697 = vmatpush1.msra.mxu0 0.0
        %698 = vmatprep.subr.mxu0 0.0
        %699 = vmatpush1.msra.mxu0 0.0
        %700 = vmatprep.subr.mxu0 0.0
        %701 = vmatpush1.msra.mxu0 0.0
        %702 = vmatprep.subr.mxu0 0.0
        %703 = vmatpush1.msra.mxu0 0.0
        %704 = vmatprep.subr.mxu0 0.0
        %705 = vmatpush1.msra.mxu0 0.0
        %706 = vmatprep.subr.mxu0 0.0
        %707 = vmatpush1.msra.mxu0 0.0
        %708 = vmatprep.subr.mxu0 0.0
        %709 = vmatpush1.msra.mxu0 0.0
        %710 = vmatprep.subr.mxu0 0.0
        %711 = vmatpush1.msra.mxu0 0.0
        %712 = vmatprep.subr.mxu0 0.0
        %713 = vmatpush1.msra.mxu0 0.0
        %714 = vmatprep.subr.mxu0 0.0
        %715 = vmatpush1.msra.mxu0 0.0
        %716 = vmatprep.subr.mxu0 0.0
        %717 = vmatpush1.msra.mxu0 0.0
        %718 = vmatprep.subr.mxu0 0.0
        %719 = vmatpush1.msra.mxu0 0.0
        %720 = vmatprep.subr.mxu0 0.0
        %721 = vmatpush1.msra.mxu0 0.0
        %722 = vmatprep.subr.mxu0 0.0
        %723 = vmatpush1.msra.mxu0 0.0
        %724 = vmatprep.subr.mxu0 0.0
        %725 = vmatpush1.msra.mxu0 0.0
        %726 = vmatprep.subr.mxu0 0.0
        %727 = vmatpush1.msra.mxu0 0.0
        %728 = vmatprep.subr.mxu0 0.0
        %729 = vmatpush1.msra.mxu0 0.0
        %730 = vmatprep.subr.mxu0 0.0
        %731 = vmatpush1.msra.mxu0 0.0
        %732 = vmatprep.subr.mxu0 0.0
        %733 = vmatpush1.msra.mxu0 0.0
        %734 = vmatprep.subr.mxu0 0.0
        %735 = vmatpush1.msra.mxu0 0.0
        %736 = vmatprep.subr.mxu0 0.0
        %737 = vmatpush1.msra.mxu0 0.0
        %738 = vmatprep.mubr.f32.mxu0 0.0
        %739 = vmatmul.mubr.f32.gmra.mrb[0].mxu0 %v669
        %v740 = vpop.f32.mrb[0].mxu0
        %v741 = vadd.f32 %v665, %v740
        %v742 = vpop.f32.mrb[0].mxu0
        %743 = vmatprep.mubr.f32.mxu0 0.0
        %744 = vmatmul.mubr.f32.gmra.mrb[0].mxu0 %v672
        %v745 = vpop.f32.mrb[0].mxu0
        %v746 = vadd.f32 %v665, %v745
        %v747 = vpop.f32.mrb[0].mxu0
        %748 = vdwg.mxu0
        %v749 = vld [vmem:[%s4] sm:$0xff]
        %v750 = vld [vmem:[%s4 + $0x8] sm:$0xff]
        %v751 = vld [vmem:[%s4 + $0x10] sm:$0xff]
        %v752 = vld [vmem:[%s4 + $0x18] sm:$0xff]
        %754 = vrot.lane.b32.xlu0 %v741, 96
        %v755 = vpop.permute.xlu0 %754
        %vm756 = vcmask 64512
        %v757 = vsel %vm756, %v741, 0
        %v759 = vsel %vm756, %v755, 0
        %761 = vmatprep.subr.mxu0 0.0
        %762 = vmatpush1.xpose.msra.mxu0 %v759
        %763 = vmatprep.subr.mxu0 0.0
        %764 = vmatpush1.xpose.msra.mxu0 0.0
        %765 = vmatprep.subr.mxu0 0.0
        %766 = vmatpush1.xpose.msra.mxu0 0.0
        %767 = vmatprep.subr.mxu0 0.0
        %768 = vmatpush1.xpose.msra.mxu0 0.0
        %769 = vmatprep.subr.mxu0 0.0
        %770 = vmatpush1.xpose.msra.mxu0 0.0
        %771 = vmatprep.subr.mxu0 0.0
        %772 = vmatpush1.xpose.msra.mxu0 0.0
        %773 = vmatprep.subr.mxu0 0.0
        %774 = vmatpush1.xpose.msra.mxu0 0.0
        %775 = vmatprep.subr.mxu0 0.0
        %776 = vmatpush1.xpose.msra.mxu0 0.0
        %777 = vmatprep.subr.mxu0 0.0
        %778 = vmatpush1.xpose.msra.mxu0 0.0
        %779 = vmatprep.subr.mxu0 0.0
        %780 = vmatpush1.xpose.msra.mxu0 0.0
        %781 = vmatprep.subr.mxu0 0.0
        %782 = vmatpush1.xpose.msra.mxu0 0.0
        %783 = vmatprep.subr.mxu0 0.0
        %784 = vmatpush1.xpose.msra.mxu0 0.0
        %785 = vmatprep.subr.mxu0 0.0
        %786 = vmatpush1.xpose.msra.mxu0 0.0
        %787 = vmatprep.subr.mxu0 0.0
        %788 = vmatpush1.xpose.msra.mxu0 0.0
        %789 = vmatprep.subr.mxu0 0.0
        %790 = vmatpush1.xpose.msra.mxu0 0.0
        %791 = vmatprep.subr.mxu0 0.0
        %792 = vmatpush1.xpose.msra.mxu0 0.0
        %793 = vmatprep.subr.mxu0 0.0
        %794 = vmatpush1.xpose.msra.mxu0 0.0
        %795 = vmatprep.subr.mxu0 0.0
        %796 = vmatpush1.xpose.msra.mxu0 0.0
        %797 = vmatprep.subr.mxu0 0.0
        %798 = vmatpush1.xpose.msra.mxu0 0.0
        %799 = vmatprep.subr.mxu0 0.0
        %800 = vmatpush1.xpose.msra.mxu0 0.0
        %801 = vmatprep.subr.mxu0 0.0
        %802 = vmatpush1.xpose.msra.mxu0 0.0
        %803 = vmatprep.subr.mxu0 0.0
        %804 = vmatpush1.xpose.msra.mxu0 0.0
        %805 = vmatprep.subr.mxu0 0.0
        %806 = vmatpush1.xpose.msra.mxu0 0.0
        %807 = vmatprep.subr.mxu0 0.0
        %808 = vmatpush1.xpose.msra.mxu0 0.0
        %809 = vmatprep.subr.mxu0 0.0
        %810 = vmatpush1.xpose.msra.mxu0 0.0
        %811 = vmatprep.subr.mxu0 0.0
        %812 = vmatpush1.xpose.msra.mxu0 0.0
        %813 = vmatprep.subr.mxu0 0.0
        %814 = vmatpush1.xpose.msra.mxu0 0.0
        %815 = vmatprep.subr.mxu0 0.0
        %816 = vmatpush1.xpose.msra.mxu0 0.0
        %817 = vmatprep.subr.mxu0 0.0
        %818 = vmatpush1.xpose.msra.mxu0 0.0
        %819 = vmatprep.subr.mxu0 0.0
        %820 = vmatpush1.xpose.msra.mxu0 0.0
        %821 = vmatprep.subr.mxu0 0.0
        %822 = vmatpush1.xpose.msra.mxu0 0.0
        %823 = vmatprep.subr.mxu0 0.0
        %824 = vmatpush1.xpose.msra.mxu0 0.0
        %825 = vmatprep.mubr.f32.mxu0 0.0
        %826 = vmatmul.mubr.f32.gmra.mrb[0].mxu0 %v757
        %v827 = vpop.f32.mrb[0].mxu0
        %v828 = vadd.f32 0.0, %v827
        %v829 = vpop.f32.mrb[0].mxu0
        %830 = vdwg.mxu0
        %832 = vrot.lane.b32.xlu0 %v746, 96
        %v833 = vpop.permute.xlu0 %832
        %v834 = vsel %vm756, %v746, 0
        %v836 = vsel %vm756, %v833, 0
        %838 = vmatprep.subr.mxu0 0.0
        %839 = vmatpush1.xpose.msra.mxu0 %v836
        %840 = vmatprep.subr.mxu0 0.0
        %841 = vmatpush1.xpose.msra.mxu0 0.0
        %842 = vmatprep.subr.mxu0 0.0
        %843 = vmatpush1.xpose.msra.mxu0 0.0
        %844 = vmatprep.subr.mxu0 0.0
        %845 = vmatpush1.xpose.msra.mxu0 0.0
        %846 = vmatprep.subr.mxu0 0.0
        %847 = vmatpush1.xpose.msra.mxu0 0.0
        %848 = vmatprep.subr.mxu0 0.0
        %849 = vmatpush1.xpose.msra.mxu0 0.0
        %850 = vmatprep.subr.mxu0 0.0
        %851 = vmatpush1.xpose.msra.mxu0 0.0
        %852 = vmatprep.subr.mxu0 0.0
        %853 = vmatpush1.xpose.msra.mxu0 0.0
        %854 = vmatprep.subr.mxu0 0.0
        %855 = vmatpush1.xpose.msra.mxu0 0.0
        %856 = vmatprep.subr.mxu0 0.0
        %857 = vmatpush1.xpose.msra.mxu0 0.0
        %858 = vmatprep.subr.mxu0 0.0
        %859 = vmatpush1.xpose.msra.mxu0 0.0
        %860 = vmatprep.subr.mxu0 0.0
        %861 = vmatpush1.xpose.msra.mxu0 0.0
        %862 = vmatprep.subr.mxu0 0.0
        %863 = vmatpush1.xpose.msra.mxu0 0.0
        %864 = vmatprep.subr.mxu0 0.0
        %865 = vmatpush1.xpose.msra.mxu0 0.0
        %866 = vmatprep.subr.mxu0 0.0
        %867 = vmatpush1.xpose.msra.mxu0 0.0
        %868 = vmatprep.subr.mxu0 0.0
        %869 = vmatpush1.xpose.msra.mxu0 0.0
        %870 = vmatprep.subr.mxu0 0.0
        %871 = vmatpush1.xpose.msra.mxu0 0.0
        %872 = vmatprep.subr.mxu0 0.0
        %873 = vmatpush1.xpose.msra.mxu0 0.0
        %874 = vmatprep.subr.mxu0 0.0
        %875 = vmatpush1.xpose.msra.mxu0 0.0
        %876 = vmatprep.subr.mxu0 0.0
        %877 = vmatpush1.xpose.msra.mxu0 0.0
        %878 = vmatprep.subr.mxu0 0.0
        %879 = vmatpush1.xpose.msra.mxu0 0.0
        %880 = vmatprep.subr.mxu0 0.0
        %881 = vmatpush1.xpose.msra.mxu0 0.0
        %882 = vmatprep.subr.mxu0 0.0
        %883 = vmatpush1.xpose.msra.mxu0 0.0
        %884 = vmatprep.subr.mxu0 0.0
        %885 = vmatpush1.xpose.msra.mxu0 0.0
        %886 = vmatprep.subr.mxu0 0.0
        %887 = vmatpush1.xpose.msra.mxu0 0.0
        %888 = vmatprep.subr.mxu0 0.0
        %889 = vmatpush1.xpose.msra.mxu0 0.0
        %890 = vmatprep.subr.mxu0 0.0
        %891 = vmatpush1.xpose.msra.mxu0 0.0
        %892 = vmatprep.subr.mxu0 0.0
        %893 = vmatpush1.xpose.msra.mxu0 0.0
        %894 = vmatprep.subr.mxu0 0.0
        %895 = vmatpush1.xpose.msra.mxu0 0.0
        %896 = vmatprep.subr.mxu0 0.0
        %897 = vmatpush1.xpose.msra.mxu0 0.0
        %898 = vmatprep.subr.mxu0 0.0
        %899 = vmatpush1.xpose.msra.mxu0 0.0
        %900 = vmatprep.subr.mxu0 0.0
        %901 = vmatpush1.xpose.msra.mxu0 0.0
        %902 = vmatprep.mubr.f32.mxu0 0.0
        %903 = vmatmul.mubr.f32.gmra.mrb[0].mxu0 %v834
        %v904 = vpop.f32.mrb[0].mxu0
        %v905 = vadd.f32 0.0, %v904
        %v906 = vpop.f32.mrb[0].mxu0
        %907 = vdwg.mxu0
        %v908 = vsel %vm756, %v828, -inf
        %909 = vmax.xlane.f32.xlu0 %v908
        %v910 = vpop.xlane.xlu0 %909
        %v911 = vsel %vm756, %v905, -inf
        %912 = vmax.xlane.f32.xlu0 %v911
        %v913 = vpop.xlane.xlu0 %912
        %v914 = vsub.f32 %v828, %v910
        %v915 = vsub.f32 %v905, %v913
        %v916 = vmul.f32 %v914, 1.442695
        %v917 = vpow.pop %v916
        %v918 = vmul.f32 %v915, 1.442695
        %v919 = vpow.pop %v918
        %v920 = vsel %vm756, %v917, 0.0
        %921 = vadd.xlane.f32.xlu0 %v920
        %v922 = vpop.xlane.xlu0 %921
        %v923 = vsel %vm756, %v919, 0.0
        %924 = vadd.xlane.f32.xlu0 %v923
        %v925 = vpop.xlane.xlu0 %924
        %v926 = vrcp.pop %v922
        %v927 = vrcp.pop %v925
        %v928 = vmul.f32 %v917, %v926
        %v929 = vmul.f32 %v919, %v927
        %930 = vrot.lane.b32.xlu0 %v741, 64
        %v931 = vpop.permute.xlu0 %930
        %v934 = vsel %vm756, %v928, 0
        %936 = vmatprep.subr.mxu0 0.0
        %937 = vmatpush1.msra.mxu0 %v931
        %938 = vmatprep.subr.mxu0 0.0
        %939 = vmatpush1.msra.mxu0 0.0
        %940 = vmatprep.subr.mxu0 0.0
        %941 = vmatpush1.msra.mxu0 0.0
        %942 = vmatprep.subr.mxu0 0.0
        %943 = vmatpush1.msra.mxu0 0.0
        %944 = vmatprep.subr.mxu0 0.0
        %945 = vmatpush1.msra.mxu0 0.0
        %946 = vmatprep.subr.mxu0 0.0
        %947 = vmatpush1.msra.mxu0 0.0
        %948 = vmatprep.subr.mxu0 0.0
        %949 = vmatpush1.msra.mxu0 0.0
        %950 = vmatprep.subr.mxu0 0.0
        %951 = vmatpush1.msra.mxu0 0.0
        %952 = vmatprep.subr.mxu0 0.0
        %953 = vmatpush1.msra.mxu0 0.0
        %954 = vmatprep.subr.mxu0 0.0
        %955 = vmatpush1.msra.mxu0 0.0
        %956 = vmatprep.subr.mxu0 0.0
        %957 = vmatpush1.msra.mxu0 0.0
        %958 = vmatprep.subr.mxu0 0.0
        %959 = vmatpush1.msra.mxu0 0.0
        %960 = vmatprep.subr.mxu0 0.0
        %961 = vmatpush1.msra.mxu0 0.0
        %962 = vmatprep.subr.mxu0 0.0
        %963 = vmatpush1.msra.mxu0 0.0
        %964 = vmatprep.subr.mxu0 0.0
        %965 = vmatpush1.msra.mxu0 0.0
        %966 = vmatprep.subr.mxu0 0.0
        %967 = vmatpush1.msra.mxu0 0.0
        %968 = vmatprep.subr.mxu0 0.0
        %969 = vmatpush1.msra.mxu0 0.0
        %970 = vmatprep.subr.mxu0 0.0
        %971 = vmatpush1.msra.mxu0 0.0
        %972 = vmatprep.subr.mxu0 0.0
        %973 = vmatpush1.msra.mxu0 0.0
        %974 = vmatprep.subr.mxu0 0.0
        %975 = vmatpush1.msra.mxu0 0.0
        %976 = vmatprep.subr.mxu0 0.0
        %977 = vmatpush1.msra.mxu0 0.0
        %978 = vmatprep.subr.mxu0 0.0
        %979 = vmatpush1.msra.mxu0 0.0
        %980 = vmatprep.subr.mxu0 0.0
        %981 = vmatpush1.msra.mxu0 0.0
        %982 = vmatprep.subr.mxu0 0.0
        %983 = vmatpush1.msra.mxu0 0.0
        %984 = vmatprep.subr.mxu0 0.0
        %985 = vmatpush1.msra.mxu0 0.0
        %986 = vmatprep.subr.mxu0 0.0
        %987 = vmatpush1.msra.mxu0 0.0
        %988 = vmatprep.subr.mxu0 0.0
        %989 = vmatpush1.msra.mxu0 0.0
        %990 = vmatprep.subr.mxu0 0.0
        %991 = vmatpush1.msra.mxu0 0.0
        %992 = vmatprep.subr.mxu0 0.0
        %993 = vmatpush1.msra.mxu0 0.0
        %994 = vmatprep.subr.mxu0 0.0
        %995 = vmatpush1.msra.mxu0 0.0
        %996 = vmatprep.subr.mxu0 0.0
        %997 = vmatpush1.msra.mxu0 0.0
        %998 = vmatprep.subr.mxu0 0.0
        %999 = vmatpush1.msra.mxu0 0.0
        %1000 = vmatprep.mubr.f32.mxu0 0.0
        %1001 = vmatmul.mubr.f32.gmra.mrb[0].mxu0 %v934
        %v1002 = vpop.f32.mrb[0].mxu0
        %v1003 = vadd.f32 0.0, %v1002
        %v1004 = vpop.f32.mrb[0].mxu0
        %1005 = vdwg.mxu0
        %1006 = vrot.lane.b32.xlu0 %v746, 64
        %v1007 = vpop.permute.xlu0 %1006
        %v1010 = vsel %vm756, %v929, 0
        %1012 = vmatprep.subr.mxu0 0.0
        %1013 = vmatpush1.msra.mxu0 %v1007
        %1014 = vmatprep.subr.mxu0 0.0
        %1015 = vmatpush1.msra.mxu0 0.0
        %1016 = vmatprep.subr.mxu0 0.0
        %1017 = vmatpush1.msra.mxu0 0.0
        %1018 = vmatprep.subr.mxu0 0.0
        %1019 = vmatpush1.msra.mxu0 0.0
        %1020 = vmatprep.subr.mxu0 0.0
        %1021 = vmatpush1.msra.mxu0 0.0
        %1022 = vmatprep.subr.mxu0 0.0
        %1023 = vmatpush1.msra.mxu0 0.0
        %1024 = vmatprep.subr.mxu0 0.0
        %1025 = vmatpush1.msra.mxu0 0.0
        %1026 = vmatprep.subr.mxu0 0.0
        %1027 = vmatpush1.msra.mxu0 0.0
        %1028 = vmatprep.subr.mxu0 0.0
        %1029 = vmatpush1.msra.mxu0 0.0
        %1030 = vmatprep.subr.mxu0 0.0
        %1031 = vmatpush1.msra.mxu0 0.0
        %1032 = vmatprep.subr.mxu0 0.0
        %1033 = vmatpush1.msra.mxu0 0.0
        %1034 = vmatprep.subr.mxu0 0.0
        %1035 = vmatpush1.msra.mxu0 0.0
        %1036 = vmatprep.subr.mxu0 0.0
        %1037 = vmatpush1.msra.mxu0 0.0
        %1038 = vmatprep.subr.mxu0 0.0
        %1039 = vmatpush1.msra.mxu0 0.0
        %1040 = vmatprep.subr.mxu0 0.0
        %1041 = vmatpush1.msra.mxu0 0.0
        %1042 = vmatprep.subr.mxu0 0.0
        %1043 = vmatpush1.msra.mxu0 0.0
        %1044 = vmatprep.subr.mxu0 0.0
        %1045 = vmatpush1.msra.mxu0 0.0
        %1046 = vmatprep.subr.mxu0 0.0
        %1047 = vmatpush1.msra.mxu0 0.0
        %1048 = vmatprep.subr.mxu0 0.0
        %1049 = vmatpush1.msra.mxu0 0.0
        %1050 = vmatprep.subr.mxu0 0.0
        %1051 = vmatpush1.msra.mxu0 0.0
        %1052 = vmatprep.subr.mxu0 0.0
        %1053 = vmatpush1.msra.mxu0 0.0
        %1054 = vmatprep.subr.mxu0 0.0
        %1055 = vmatpush1.msra.mxu0 0.0
        %1056 = vmatprep.subr.mxu0 0.0
        %1057 = vmatpush1.msra.mxu0 0.0
        %1058 = vmatprep.subr.mxu0 0.0
        %1059 = vmatpush1.msra.mxu0 0.0
        %1060 = vmatprep.subr.mxu0 0.0
        %1061 = vmatpush1.msra.mxu0 0.0
        %1062 = vmatprep.subr.mxu0 0.0
        %1063 = vmatpush1.msra.mxu0 0.0
        %1064 = vmatprep.subr.mxu0 0.0
        %1065 = vmatpush1.msra.mxu0 0.0
        %1066 = vmatprep.subr.mxu0 0.0
        %1067 = vmatpush1.msra.mxu0 0.0
        %1068 = vmatprep.subr.mxu0 0.0
        %1069 = vmatpush1.msra.mxu0 0.0
        %1070 = vmatprep.subr.mxu0 0.0
        %1071 = vmatpush1.msra.mxu0 0.0
        %1072 = vmatprep.subr.mxu0 0.0
        %1073 = vmatpush1.msra.mxu0 0.0
        %1074 = vmatprep.subr.mxu0 0.0
        %1075 = vmatpush1.msra.mxu0 0.0
        %1076 = vmatprep.mubr.f32.mxu0 0.0
        %1077 = vmatmul.mubr.f32.gmra.mrb[0].mxu0 %v1010
        %v1078 = vpop.f32.mrb[0].mxu0
        %v1079 = vadd.f32 0.0, %v1078
        %v1080 = vpop.f32.mrb[0].mxu0
        %1081 = vdwg.mxu0
        %1082 = vrot.lane.b32.xlu0 %v741, 120
        %v1083 = vpop.permute.xlu0 %1082
        %1084 = vrot.lane.b32.xlu0 %v741, 88
        %v1085 = vpop.permute.xlu0 %1084
        %v1086 = vsel %vm756, %v1083, 0
        %v1088 = vsel %vm756, %v1085, 0
        %1090 = vmatprep.subr.mxu0 0.0
        %1091 = vmatpush1.xpose.msra.mxu0 %v1088
        %1092 = vmatprep.subr.mxu0 0.0
        %1093 = vmatpush1.xpose.msra.mxu0 0.0
        %1094 = vmatprep.subr.mxu0 0.0
        %1095 = vmatpush1.xpose.msra.mxu0 0.0
        %1096 = vmatprep.subr.mxu0 0.0
        %1097 = vmatpush1.xpose.msra.mxu0 0.0
        %1098 = vmatprep.subr.mxu0 0.0
        %1099 = vmatpush1.xpose.msra.mxu0 0.0
        %1100 = vmatprep.subr.mxu0 0.0
        %1101 = vmatpush1.xpose.msra.mxu0 0.0
        %1102 = vmatprep.subr.mxu0 0.0
        %1103 = vmatpush1.xpose.msra.mxu0 0.0
        %1104 = vmatprep.subr.mxu0 0.0
        %1105 = vmatpush1.xpose.msra.mxu0 0.0
        %1106 = vmatprep.subr.mxu0 0.0
        %1107 = vmatpush1.xpose.msra.mxu0 0.0
        %1108 = vmatprep.subr.mxu0 0.0
        %1109 = vmatpush1.xpose.msra.mxu0 0.0
        %1110 = vmatprep.subr.mxu0 0.0
        %1111 = vmatpush1.xpose.msra.mxu0 0.0
        %1112 = vmatprep.subr.mxu0 0.0
        %1113 = vmatpush1.xpose.msra.mxu0 0.0
        %1114 = vmatprep.subr.mxu0 0.0
        %1115 = vmatpush1.xpose.msra.mxu0 0.0
        %1116 = vmatprep.subr.mxu0 0.0
        %1117 = vmatpush1.xpose.msra.mxu0 0.0
        %1118 = vmatprep.subr.mxu0 0.0
        %1119 = vmatpush1.xpose.msra.mxu0 0.0
        %1120 = vmatprep.subr.mxu0 0.0
        %1121 = vmatpush1.xpose.msra.mxu0 0.0
        %1122 = vmatprep.subr.mxu0 0.0
        %1123 = vmatpush1.xpose.msra.mxu0 0.0
        %1124 = vmatprep.subr.mxu0 0.0
        %1125 = vmatpush1.xpose.msra.mxu0 0.0
        %1126 = vmatprep.subr.mxu0 0.0
        %1127 = vmatpush1.xpose.msra.mxu0 0.0
        %1128 = vmatprep.subr.mxu0 0.0
        %1129 = vmatpush1.xpose.msra.mxu0 0.0
        %1130 = vmatprep.subr.mxu0 0.0
        %1131 = vmatpush1.xpose.msra.mxu0 0.0
        %1132 = vmatprep.subr.mxu0 0.0
        %1133 = vmatpush1.xpose.msra.mxu0 0.0
        %1134 = vmatprep.subr.mxu0 0.0
        %1135 = vmatpush1.xpose.msra.mxu0 0.0
        %1136 = vmatprep.subr.mxu0 0.0
        %1137 = vmatpush1.xpose.msra.mxu0 0.0
        %1138 = vmatprep.subr.mxu0 0.0
        %1139 = vmatpush1.xpose.msra.mxu0 0.0
        %1140 = vmatprep.subr.mxu0 0.0
        %1141 = vmatpush1.xpose.msra.mxu0 0.0
        %1142 = vmatprep.subr.mxu0 0.0
        %1143 = vmatpush1.xpose.msra.mxu0 0.0
        %1144 = vmatprep.subr.mxu0 0.0
        %1145 = vmatpush1.xpose.msra.mxu0 0.0
        %1146 = vmatprep.subr.mxu0 0.0
        %1147 = vmatpush1.xpose.msra.mxu0 0.0
        %1148 = vmatprep.subr.mxu0 0.0
        %1149 = vmatpush1.xpose.msra.mxu0 0.0
        %1150 = vmatprep.subr.mxu0 0.0
        %1151 = vmatpush1.xpose.msra.mxu0 0.0
        %1152 = vmatprep.subr.mxu0 0.0
        %1153 = vmatpush1.xpose.msra.mxu0 0.0
        %1154 = vmatprep.mubr.f32.mxu0 0.0
        %1155 = vmatmul.mubr.f32.gmra.mrb[0].mxu0 %v1086
        %v1156 = vpop.f32.mrb[0].mxu0
        %v1157 = vadd.f32 0.0, %v1156
        %v1158 = vpop.f32.mrb[0].mxu0
        %1159 = vdwg.mxu0
        %1160 = vrot.lane.b32.xlu0 %v746, 120
        %v1161 = vpop.permute.xlu0 %1160
        %1162 = vrot.lane.b32.xlu0 %v746, 88
        %v1163 = vpop.permute.xlu0 %1162
        %v1164 = vsel %vm756, %v1161, 0
        %v1166 = vsel %vm756, %v1163, 0
        %1168 = vmatprep.subr.mxu0 0.0
        %1169 = vmatpush1.xpose.msra.mxu0 %v1166
        %1170 = vmatprep.subr.mxu0 0.0
        %1171 = vmatpush1.xpose.msra.mxu0 0.0
        %1172 = vmatprep.subr.mxu0 0.0
        %1173 = vmatpush1.xpose.msra.mxu0 0.0
        %1174 = vmatprep.subr.mxu0 0.0
        %1175 = vmatpush1.xpose.msra.mxu0 0.0
        %1176 = vmatprep.subr.mxu0 0.0
        %1177 = vmatpush1.xpose.msra.mxu0 0.0
        %1178 = vmatprep.subr.mxu0 0.0
        %1179 = vmatpush1.xpose.msra.mxu0 0.0
        %1180 = vmatprep.subr.mxu0 0.0
        %1181 = vmatpush1.xpose.msra.mxu0 0.0
        %1182 = vmatprep.subr.mxu0 0.0
        %1183 = vmatpush1.xpose.msra.mxu0 0.0
        %1184 = vmatprep.subr.mxu0 0.0
        %1185 = vmatpush1.xpose.msra.mxu0 0.0
        %1186 = vmatprep.subr.mxu0 0.0
        %1187 = vmatpush1.xpose.msra.mxu0 0.0
        %1188 = vmatprep.subr.mxu0 0.0
        %1189 = vmatpush1.xpose.msra.mxu0 0.0
        %1190 = vmatprep.subr.mxu0 0.0
        %1191 = vmatpush1.xpose.msra.mxu0 0.0
        %1192 = vmatprep.subr.mxu0 0.0
        %1193 = vmatpush1.xpose.msra.mxu0 0.0
        %1194 = vmatprep.subr.mxu0 0.0
        %1195 = vmatpush1.xpose.msra.mxu0 0.0
        %1196 = vmatprep.subr.mxu0 0.0
        %1197 = vmatpush1.xpose.msra.mxu0 0.0
        %1198 = vmatprep.subr.mxu0 0.0
        %1199 = vmatpush1.xpose.msra.mxu0 0.0
        %1200 = vmatprep.subr.mxu0 0.0
        %1201 = vmatpush1.xpose.msra.mxu0 0.0
        %1202 = vmatprep.subr.mxu0 0.0
        %1203 = vmatpush1.xpose.msra.mxu0 0.0
        %1204 = vmatprep.subr.mxu0 0.0
        %1205 = vmatpush1.xpose.msra.mxu0 0.0
        %1206 = vmatprep.subr.mxu0 0.0
        %1207 = vmatpush1.xpose.msra.mxu0 0.0
        %1208 = vmatprep.subr.mxu0 0.0
        %1209 = vmatpush1.xpose.msra.mxu0 0.0
        %1210 = vmatprep.subr.mxu0 0.0
        %1211 = vmatpush1.xpose.msra.mxu0 0.0
        %1212 = vmatprep.subr.mxu0 0.0
        %1213 = vmatpush1.xpose.msra.mxu0 0.0
        %1214 = vmatprep.subr.mxu0 0.0
        %1215 = vmatpush1.xpose.msra.mxu0 0.0
        %1216 = vmatprep.subr.mxu0 0.0
        %1217 = vmatpush1.xpose.msra.mxu0 0.0
        %1218 = vmatprep.subr.mxu0 0.0
        %1219 = vmatpush1.xpose.msra.mxu0 0.0
        %1220 = vmatprep.subr.mxu0 0.0
        %1221 = vmatpush1.xpose.msra.mxu0 0.0
        %1222 = vmatprep.subr.mxu0 0.0
        %1223 = vmatpush1.xpose.msra.mxu0 0.0
        %1224 = vmatprep.subr.mxu0 0.0
        %1225 = vmatpush1.xpose.msra.mxu0 0.0
        %1226 = vmatprep.subr.mxu0 0.0
        %1227 = vmatpush1.xpose.msra.mxu0 0.0
        %1228 = vmatprep.subr.mxu0 0.0
        %1229 = vmatpush1.xpose.msra.mxu0 0.0
        %1230 = vmatprep.subr.mxu0 0.0
        %1231 = vmatpush1.xpose.msra.mxu0 0.0
        %1232 = vmatprep.mubr.f32.mxu0 0.0
        %1233 = vmatmul.mubr.f32.gmra.mrb[0].mxu0 %v1164
        %v1234 = vpop.f32.mrb[0].mxu0
        %v1235 = vadd.f32 0.0, %v1234
        %v1236 = vpop.f32.mrb[0].mxu0
        %1237 = vdwg.mxu0
        %v1238 = vsel %vm756, %v1157, -inf
        %1239 = vmax.xlane.f32.xlu0 %v1238
        %v1240 = vpop.xlane.xlu0 %1239
        %v1241 = vsel %vm756, %v1235, -inf
        %1242 = vmax.xlane.f32.xlu0 %v1241
        %v1243 = vpop.xlane.xlu0 %1242
        %v1244 = vsub.f32 %v1157, %v1240
        %v1245 = vsub.f32 %v1235, %v1243
        %v1246 = vmul.f32 %v1244, 1.442695
        %v1247 = vpow.pop %v1246
        %v1248 = vmul.f32 %v1245, 1.442695
        %v1249 = vpow.pop %v1248
        %v1250 = vsel %vm756, %v1247, 0.0
        %1251 = vadd.xlane.f32.xlu0 %v1250
        %v1252 = vpop.xlane.xlu0 %1251
        %v1253 = vsel %vm756, %v1249, 0.0
        %1254 = vadd.xlane.f32.xlu0 %v1253
        %v1255 = vpop.xlane.xlu0 %1254
        %v1256 = vrcp.pop %v1252
        %v1257 = vrcp.pop %v1255
        %v1258 = vmul.f32 %v1247, %v1256
        %v1259 = vmul.f32 %v1249, %v1257
        %1260 = vrot.lane.b32.xlu0 %v741, 56
        %v1261 = vpop.permute.xlu0 %1260
        %v1264 = vsel %vm756, %v1258, 0
        %1266 = vmatprep.subr.mxu0 0.0
        %1267 = vmatpush1.msra.mxu0 %v1261
        %1268 = vmatprep.subr.mxu0 0.0
        %1269 = vmatpush1.msra.mxu0 0.0
        %1270 = vmatprep.subr.mxu0 0.0
        %1271 = vmatpush1.msra.mxu0 0.0
        %1272 = vmatprep.subr.mxu0 0.0
        %1273 = vmatpush1.msra.mxu0 0.0
        %1274 = vmatprep.subr.mxu0 0.0
        %1275 = vmatpush1.msra.mxu0 0.0
        %1276 = vmatprep.subr.mxu0 0.0
        %1277 = vmatpush1.msra.mxu0 0.0
        %1278 = vmatprep.subr.mxu0 0.0
        %1279 = vmatpush1.msra.mxu0 0.0
        %1280 = vmatprep.subr.mxu0 0.0
        %1281 = vmatpush1.msra.mxu0 0.0
        %1282 = vmatprep.subr.mxu0 0.0
        %1283 = vmatpush1.msra.mxu0 0.0
        %1284 = vmatprep.subr.mxu0 0.0
        %1285 = vmatpush1.msra.mxu0 0.0
        %1286 = vmatprep.subr.mxu0 0.0
        %1287 = vmatpush1.msra.mxu0 0.0
        %1288 = vmatprep.subr.mxu0 0.0
        %1289 = vmatpush1.msra.mxu0 0.0
        %1290 = vmatprep.subr.mxu0 0.0
        %1291 = vmatpush1.msra.mxu0 0.0
        %1292 = vmatprep.subr.mxu0 0.0
        %1293 = vmatpush1.msra.mxu0 0.0
        %1294 = vmatprep.subr.mxu0 0.0
        %1295 = vmatpush1.msra.mxu0 0.0
        %1296 = vmatprep.subr.mxu0 0.0
        %1297 = vmatpush1.msra.mxu0 0.0
        %1298 = vmatprep.subr.mxu0 0.0
        %1299 = vmatpush1.msra.mxu0 0.0
        %1300 = vmatprep.subr.mxu0 0.0
        %1301 = vmatpush1.msra.mxu0 0.0
        %1302 = vmatprep.subr.mxu0 0.0
        %1303 = vmatpush1.msra.mxu0 0.0
        %1304 = vmatprep.subr.mxu0 0.0
        %1305 = vmatpush1.msra.mxu0 0.0
        %1306 = vmatprep.subr.mxu0 0.0
        %1307 = vmatpush1.msra.mxu0 0.0
        %1308 = vmatprep.subr.mxu0 0.0
        %1309 = vmatpush1.msra.mxu0 0.0
        %1310 = vmatprep.subr.mxu0 0.0
        %1311 = vmatpush1.msra.mxu0 0.0
        %1312 = vmatprep.subr.mxu0 0.0
        %1313 = vmatpush1.msra.mxu0 0.0
        %1314 = vmatprep.subr.mxu0 0.0
        %1315 = vmatpush1.msra.mxu0 0.0
        %1316 = vmatprep.subr.mxu0 0.0
        %1317 = vmatpush1.msra.mxu0 0.0
        %1318 = vmatprep.subr.mxu0 0.0
        %1319 = vmatpush1.msra.mxu0 0.0
        %1320 = vmatprep.subr.mxu0 0.0
        %1321 = vmatpush1.msra.mxu0 0.0
        %1322 = vmatprep.subr.mxu0 0.0
        %1323 = vmatpush1.msra.mxu0 0.0
        %1324 = vmatprep.subr.mxu0 0.0
        %1325 = vmatpush1.msra.mxu0 0.0
        %1326 = vmatprep.subr.mxu0 0.0
        %1327 = vmatpush1.msra.mxu0 0.0
        %1328 = vmatprep.subr.mxu0 0.0
        %1329 = vmatpush1.msra.mxu0 0.0
        %1330 = vmatprep.mubr.f32.mxu0 0.0
        %1331 = vmatmul.mubr.f32.gmra.mrb[0].mxu0 %v1264
        %v1332 = vpop.f32.mrb[0].mxu0
        %v1333 = vadd.f32 0.0, %v1332
        %v1334 = vpop.f32.mrb[0].mxu0
        %1335 = vdwg.mxu0
        %1336 = vrot.lane.b32.xlu0 %v746, 56
        %v1337 = vpop.permute.xlu0 %1336
        %v1340 = vsel %vm756, %v1259, 0
        %1342 = vmatprep.subr.mxu0 0.0
        %1343 = vmatpush1.msra.mxu0 %v1337
        %1344 = vmatprep.subr.mxu0 0.0
        %1345 = vmatpush1.msra.mxu0 0.0
        %1346 = vmatprep.subr.mxu0 0.0
        %1347 = vmatpush1.msra.mxu0 0.0
        %1348 = vmatprep.subr.mxu0 0.0
        %1349 = vmatpush1.msra.mxu0 0.0
        %1350 = vmatprep.subr.mxu0 0.0
        %1351 = vmatpush1.msra.mxu0 0.0
        %1352 = vmatprep.subr.mxu0 0.0
        %1353 = vmatpush1.msra.mxu0 0.0
        %1354 = vmatprep.subr.mxu0 0.0
        %1355 = vmatpush1.msra.mxu0 0.0
        %1356 = vmatprep.subr.mxu0 0.0
        %1357 = vmatpush1.msra.mxu0 0.0
        %1358 = vmatprep.subr.mxu0 0.0
        %1359 = vmatpush1.msra.mxu0 0.0
        %1360 = vmatprep.subr.mxu0 0.0
        %1361 = vmatpush1.msra.mxu0 0.0
        %1362 = vmatprep.subr.mxu0 0.0
        %1363 = vmatpush1.msra.mxu0 0.0
        %1364 = vmatprep.subr.mxu0 0.0
        %1365 = vmatpush1.msra.mxu0 0.0
        %1366 = vmatprep.subr.mxu0 0.0
        %1367 = vmatpush1.msra.mxu0 0.0
        %1368 = vmatprep.subr.mxu0 0.0
        %1369 = vmatpush1.msra.mxu0 0.0
        %1370 = vmatprep.subr.mxu0 0.0
        %1371 = vmatpush1.msra.mxu0 0.0
        %1372 = vmatprep.subr.mxu0 0.0
        %1373 = vmatpush1.msra.mxu0 0.0
        %1374 = vmatprep.subr.mxu0 0.0
        %1375 = vmatpush1.msra.mxu0 0.0
        %1376 = vmatprep.subr.mxu0 0.0
        %1377 = vmatpush1.msra.mxu0 0.0
        %1378 = vmatprep.subr.mxu0 0.0
        %1379 = vmatpush1.msra.mxu0 0.0
        %1380 = vmatprep.subr.mxu0 0.0
        %1381 = vmatpush1.msra.mxu0 0.0
        %1382 = vmatprep.subr.mxu0 0.0
        %1383 = vmatpush1.msra.mxu0 0.0
        %1384 = vmatprep.subr.mxu0 0.0
        %1385 = vmatpush1.msra.mxu0 0.0
        %1386 = vmatprep.subr.mxu0 0.0
        %1387 = vmatpush1.msra.mxu0 0.0
        %1388 = vmatprep.subr.mxu0 0.0
        %1389 = vmatpush1.msra.mxu0 0.0
        %1390 = vmatprep.subr.mxu0 0.0
        %1391 = vmatpush1.msra.mxu0 0.0
        %1392 = vmatprep.subr.mxu0 0.0
        %1393 = vmatpush1.msra.mxu0 0.0
        %1394 = vmatprep.subr.mxu0 0.0
        %1395 = vmatpush1.msra.mxu0 0.0
        %1396 = vmatprep.subr.mxu0 0.0
        %1397 = vmatpush1.msra.mxu0 0.0
        %1398 = vmatprep.subr.mxu0 0.0
        %1399 = vmatpush1.msra.mxu0 0.0
        %1400 = vmatprep.subr.mxu0 0.0
        %1401 = vmatpush1.msra.mxu0 0.0
        %1402 = vmatprep.subr.mxu0 0.0
        %1403 = vmatpush1.msra.mxu0 0.0
        %1404 = vmatprep.subr.mxu0 0.0
        %1405 = vmatpush1.msra.mxu0 0.0
        %1406 = vmatprep.mubr.f32.mxu0 0.0
        %1407 = vmatmul.mubr.f32.gmra.mrb[0].mxu0 %v1340
        %v1408 = vpop.f32.mrb[0].mxu0
        %v1409 = vadd.f32 0.0, %v1408
        %v1410 = vpop.f32.mrb[0].mxu0
        %1411 = vdwg.mxu0
        %v1413 = vsel %vm756, %v1333, 0
        %v1416 = vsel %vm756, %v1409, 0
        %1418 = vmatprep.subr.mxu0 0.0
        %1419 = vmatpush1.msra.mxu0 %v750
        %1420 = vmatprep.subr.mxu0 0.0
        %1421 = vmatpush1.msra.mxu0 0.0
        %1422 = vmatprep.subr.mxu0 0.0
        %1423 = vmatpush1.msra.mxu0 0.0
        %1424 = vmatprep.subr.mxu0 0.0
        %1425 = vmatpush1.msra.mxu0 0.0
        %1426 = vmatprep.subr.mxu0 0.0
        %1427 = vmatpush1.msra.mxu0 0.0
        %1428 = vmatprep.subr.mxu0 0.0
        %1429 = vmatpush1.msra.mxu0 0.0
        %1430 = vmatprep.subr.mxu0 0.0
        %1431 = vmatpush1.msra.mxu0 0.0
        %1432 = vmatprep.subr.mxu0 0.0
        %1433 = vmatpush1.msra.mxu0 0.0
        %1434 = vmatprep.subr.mxu0 0.0
        %1435 = vmatpush1.msra.mxu0 0.0
        %1436 = vmatprep.subr.mxu0 0.0
        %1437 = vmatpush1.msra.mxu0 0.0
        %1438 = vmatprep.subr.mxu0 0.0
        %1439 = vmatpush1.msra.mxu0 0.0
        %1440 = vmatprep.subr.mxu0 0.0
        %1441 = vmatpush1.msra.mxu0 0.0
        %1442 = vmatprep.subr.mxu0 0.0
        %1443 = vmatpush1.msra.mxu0 0.0
        %1444 = vmatprep.subr.mxu0 0.0
        %1445 = vmatpush1.msra.mxu0 0.0
        %1446 = vmatprep.subr.mxu0 0.0
        %1447 = vmatpush1.msra.mxu0 0.0
        %1448 = vmatprep.subr.mxu0 0.0
        %1449 = vmatpush1.msra.mxu0 0.0
        %1450 = vmatprep.subr.mxu0 0.0
        %1451 = vmatpush1.msra.mxu0 0.0
        %1452 = vmatprep.subr.mxu0 0.0
        %1453 = vmatpush1.msra.mxu0 0.0
        %1454 = vmatprep.subr.mxu0 0.0
        %1455 = vmatpush1.msra.mxu0 0.0
        %1456 = vmatprep.subr.mxu0 0.0
        %1457 = vmatpush1.msra.mxu0 0.0
        %1458 = vmatprep.subr.mxu0 0.0
        %1459 = vmatpush1.msra.mxu0 0.0
        %1460 = vmatprep.subr.mxu0 0.0
        %1461 = vmatpush1.msra.mxu0 0.0
        %1462 = vmatprep.subr.mxu0 0.0
        %1463 = vmatpush1.msra.mxu0 0.0
        %1464 = vmatprep.subr.mxu0 0.0
        %1465 = vmatpush1.msra.mxu0 0.0
        %1466 = vmatprep.subr.mxu0 0.0
        %1467 = vmatpush1.msra.mxu0 0.0
        %1468 = vmatprep.subr.mxu0 0.0
        %1469 = vmatpush1.msra.mxu0 0.0
        %1470 = vmatprep.subr.mxu0 0.0
        %1471 = vmatpush1.msra.mxu0 0.0
        %1472 = vmatprep.subr.mxu0 0.0
        %1473 = vmatpush1.msra.mxu0 0.0
        %1474 = vmatprep.subr.mxu0 0.0
        %1475 = vmatpush1.msra.mxu0 0.0
        %1476 = vmatprep.subr.mxu0 0.0
        %1477 = vmatpush1.msra.mxu0 0.0
        %1478 = vmatprep.subr.mxu0 0.0
        %1479 = vmatpush1.msra.mxu0 0.0
        %1480 = vmatprep.subr.mxu0 0.0
        %1481 = vmatpush1.msra.mxu0 0.0
        %1482 = vmatprep.mubr.f32.mxu0 0.0
        %1483 = vmatmul.mubr.f32.gmra.mrb[0].mxu0 %v1413
        %v1484 = vpop.f32.mrb[0].mxu0
        %v1485 = vadd.f32 0.0, %v1484
        %v1486 = vpop.f32.mrb[0].mxu0
        %1487 = vmatprep.mubr.f32.mxu0 0.0
        %1488 = vmatmul.mubr.f32.gmra.mrb[0].mxu0 %v1416
        %v1489 = vpop.f32.mrb[0].mxu0
        %v1490 = vadd.f32 0.0, %v1489
        %v1491 = vpop.f32.mrb[0].mxu0
        %1492 = vdwg.mxu0
        %v1494 = vsel %vm756, %v1003, 0
        %v1497 = vsel %vm756, %v1079, 0
        %1499 = vmatprep.subr.mxu0 0.0
        %1500 = vmatpush1.msra.mxu0 %v749
        %1501 = vmatprep.subr.mxu0 0.0
        %1502 = vmatpush1.msra.mxu0 0.0
        %1503 = vmatprep.subr.mxu0 0.0
        %1504 = vmatpush1.msra.mxu0 0.0
        %1505 = vmatprep.subr.mxu0 0.0
        %1506 = vmatpush1.msra.mxu0 0.0
        %1507 = vmatprep.subr.mxu0 0.0
        %1508 = vmatpush1.msra.mxu0 0.0
        %1509 = vmatprep.subr.mxu0 0.0
        %1510 = vmatpush1.msra.mxu0 0.0
        %1511 = vmatprep.subr.mxu0 0.0
        %1512 = vmatpush1.msra.mxu0 0.0
        %1513 = vmatprep.subr.mxu0 0.0
        %1514 = vmatpush1.msra.mxu0 0.0
        %1515 = vmatprep.subr.mxu0 0.0
        %1516 = vmatpush1.msra.mxu0 0.0
        %1517 = vmatprep.subr.mxu0 0.0
        %1518 = vmatpush1.msra.mxu0 0.0
        %1519 = vmatprep.subr.mxu0 0.0
        %1520 = vmatpush1.msra.mxu0 0.0
        %1521 = vmatprep.subr.mxu0 0.0
        %1522 = vmatpush1.msra.mxu0 0.0
        %1523 = vmatprep.subr.mxu0 0.0
        %1524 = vmatpush1.msra.mxu0 0.0
        %1525 = vmatprep.subr.mxu0 0.0
        %1526 = vmatpush1.msra.mxu0 0.0
        %1527 = vmatprep.subr.mxu0 0.0
        %1528 = vmatpush1.msra.mxu0 0.0
        %1529 = vmatprep.subr.mxu0 0.0
        %1530 = vmatpush1.msra.mxu0 0.0
        %1531 = vmatprep.subr.mxu0 0.0
        %1532 = vmatpush1.msra.mxu0 0.0
        %1533 = vmatprep.subr.mxu0 0.0
        %1534 = vmatpush1.msra.mxu0 0.0
        %1535 = vmatprep.subr.mxu0 0.0
        %1536 = vmatpush1.msra.mxu0 0.0
        %1537 = vmatprep.subr.mxu0 0.0
        %1538 = vmatpush1.msra.mxu0 0.0
        %1539 = vmatprep.subr.mxu0 0.0
        %1540 = vmatpush1.msra.mxu0 0.0
        %1541 = vmatprep.subr.mxu0 0.0
        %1542 = vmatpush1.msra.mxu0 0.0
        %1543 = vmatprep.subr.mxu0 0.0
        %1544 = vmatpush1.msra.mxu0 0.0
        %1545 = vmatprep.subr.mxu0 0.0
        %1546 = vmatpush1.msra.mxu0 0.0
        %1547 = vmatprep.subr.mxu0 0.0
        %1548 = vmatpush1.msra.mxu0 0.0
        %1549 = vmatprep.subr.mxu0 0.0
        %1550 = vmatpush1.msra.mxu0 0.0
        %1551 = vmatprep.subr.mxu0 0.0
        %1552 = vmatpush1.msra.mxu0 0.0
        %1553 = vmatprep.subr.mxu0 0.0
        %1554 = vmatpush1.msra.mxu0 0.0
        %1555 = vmatprep.subr.mxu0 0.0
        %1556 = vmatpush1.msra.mxu0 0.0
        %1557 = vmatprep.subr.mxu0 0.0
        %1558 = vmatpush1.msra.mxu0 0.0
        %1559 = vmatprep.subr.mxu0 0.0
        %1560 = vmatpush1.msra.mxu0 0.0
        %1561 = vmatprep.subr.mxu0 0.0
        %1562 = vmatpush1.msra.mxu0 0.0
        %1563 = vmatprep.mubr.f32.mxu0 0.0
        %1564 = vmatmul.mubr.f32.gmra.mrb[0].mxu0 %v1494
        %v1565 = vpop.f32.mrb[0].mxu0
        %v1566 = vadd.f32 %v1485, %v1565
        %v1567 = vpop.f32.mrb[0].mxu0
        %1568 = vmatprep.mubr.f32.mxu0 0.0
        %1569 = vmatmul.mubr.f32.gmra.mrb[0].mxu0 %v1497
        %v1570 = vpop.f32.mrb[0].mxu0
        %v1571 = vadd.f32 %v1490, %v1570
        %v1572 = vpop.f32.mrb[0].mxu0
        %1573 = vdwg.mxu0
        %1574 = vrot.lane.b32.xlu0 %v741, 112
        %v1575 = vpop.permute.xlu0 %1574
        %1576 = vrot.lane.b32.xlu0 %v741, 80
        %v1577 = vpop.permute.xlu0 %1576
        %v1578 = vsel %vm756, %v1575, 0
        %v1580 = vsel %vm756, %v1577, 0
        %1582 = vmatprep.subr.mxu0 0.0
        %1583 = vmatpush1.xpose.msra.mxu0 %v1580
        %1584 = vmatprep.subr.mxu0 0.0
        %1585 = vmatpush1.xpose.msra.mxu0 0.0
        %1586 = vmatprep.subr.mxu0 0.0
        %1587 = vmatpush1.xpose.msra.mxu0 0.0
        %1588 = vmatprep.subr.mxu0 0.0
        %1589 = vmatpush1.xpose.msra.mxu0 0.0
        %1590 = vmatprep.subr.mxu0 0.0
        %1591 = vmatpush1.xpose.msra.mxu0 0.0
        %1592 = vmatprep.subr.mxu0 0.0
        %1593 = vmatpush1.xpose.msra.mxu0 0.0
        %1594 = vmatprep.subr.mxu0 0.0
        %1595 = vmatpush1.xpose.msra.mxu0 0.0
        %1596 = vmatprep.subr.mxu0 0.0
        %1597 = vmatpush1.xpose.msra.mxu0 0.0
        %1598 = vmatprep.subr.mxu0 0.0
        %1599 = vmatpush1.xpose.msra.mxu0 0.0
        %1600 = vmatprep.subr.mxu0 0.0
        %1601 = vmatpush1.xpose.msra.mxu0 0.0
        %1602 = vmatprep.subr.mxu0 0.0
        %1603 = vmatpush1.xpose.msra.mxu0 0.0
        %1604 = vmatprep.subr.mxu0 0.0
        %1605 = vmatpush1.xpose.msra.mxu0 0.0
        %1606 = vmatprep.subr.mxu0 0.0
        %1607 = vmatpush1.xpose.msra.mxu0 0.0
        %1608 = vmatprep.subr.mxu0 0.0
        %1609 = vmatpush1.xpose.msra.mxu0 0.0
        %1610 = vmatprep.subr.mxu0 0.0
        %1611 = vmatpush1.xpose.msra.mxu0 0.0
        %1612 = vmatprep.subr.mxu0 0.0
        %1613 = vmatpush1.xpose.msra.mxu0 0.0
        %1614 = vmatprep.subr.mxu0 0.0
        %1615 = vmatpush1.xpose.msra.mxu0 0.0
        %1616 = vmatprep.subr.mxu0 0.0
        %1617 = vmatpush1.xpose.msra.mxu0 0.0
        %1618 = vmatprep.subr.mxu0 0.0
        %1619 = vmatpush1.xpose.msra.mxu0 0.0
        %1620 = vmatprep.subr.mxu0 0.0
        %1621 = vmatpush1.xpose.msra.mxu0 0.0
        %1622 = vmatprep.subr.mxu0 0.0
        %1623 = vmatpush1.xpose.msra.mxu0 0.0
        %1624 = vmatprep.subr.mxu0 0.0
        %1625 = vmatpush1.xpose.msra.mxu0 0.0
        %1626 = vmatprep.subr.mxu0 0.0
        %1627 = vmatpush1.xpose.msra.mxu0 0.0
        %1628 = vmatprep.subr.mxu0 0.0
        %1629 = vmatpush1.xpose.msra.mxu0 0.0
        %1630 = vmatprep.subr.mxu0 0.0
        %1631 = vmatpush1.xpose.msra.mxu0 0.0
        %1632 = vmatprep.subr.mxu0 0.0
        %1633 = vmatpush1.xpose.msra.mxu0 0.0
        %1634 = vmatprep.subr.mxu0 0.0
        %1635 = vmatpush1.xpose.msra.mxu0 0.0
        %1636 = vmatprep.subr.mxu0 0.0
        %1637 = vmatpush1.xpose.msra.mxu0 0.0
        %1638 = vmatprep.subr.mxu0 0.0
        %1639 = vmatpush1.xpose.msra.mxu0 0.0
        %1640 = vmatprep.subr.mxu0 0.0
        %1641 = vmatpush1.xpose.msra.mxu0 0.0
        %1642 = vmatprep.subr.mxu0 0.0
        %1643 = vmatpush1.xpose.msra.mxu0 0.0
        %1644 = vmatprep.subr.mxu0 0.0
        %1645 = vmatpush1.xpose.msra.mxu0 0.0
        %1646 = vmatprep.mubr.f32.mxu0 0.0
        %1647 = vmatmul.mubr.f32.gmra.mrb[0].mxu0 %v1578
        %v1648 = vpop.f32.mrb[0].mxu0
        %v1649 = vadd.f32 0.0, %v1648
        %v1650 = vpop.f32.mrb[0].mxu0
        %1651 = vdwg.mxu0
        %1652 = vrot.lane.b32.xlu0 %v746, 112
        %v1653 = vpop.permute.xlu0 %1652
        %1654 = vrot.lane.b32.xlu0 %v746, 80
        %v1655 = vpop.permute.xlu0 %1654
        %v1656 = vsel %vm756, %v1653, 0
        %v1658 = vsel %vm756, %v1655, 0
        %1660 = vmatprep.subr.mxu0 0.0
        %1661 = vmatpush1.xpose.msra.mxu0 %v1658
        %1662 = vmatprep.subr.mxu0 0.0
        %1663 = vmatpush1.xpose.msra.mxu0 0.0
        %1664 = vmatprep.subr.mxu0 0.0
        %1665 = vmatpush1.xpose.msra.mxu0 0.0
        %1666 = vmatprep.subr.mxu0 0.0
        %1667 = vmatpush1.xpose.msra.mxu0 0.0
        %1668 = vmatprep.subr.mxu0 0.0
        %1669 = vmatpush1.xpose.msra.mxu0 0.0
        %1670 = vmatprep.subr.mxu0 0.0
        %1671 = vmatpush1.xpose.msra.mxu0 0.0
        %1672 = vmatprep.subr.mxu0 0.0
        %1673 = vmatpush1.xpose.msra.mxu0 0.0
        %1674 = vmatprep.subr.mxu0 0.0
        %1675 = vmatpush1.xpose.msra.mxu0 0.0
        %1676 = vmatprep.subr.mxu0 0.0
        %1677 = vmatpush1.xpose.msra.mxu0 0.0
        %1678 = vmatprep.subr.mxu0 0.0
        %1679 = vmatpush1.xpose.msra.mxu0 0.0
        %1680 = vmatprep.subr.mxu0 0.0
        %1681 = vmatpush1.xpose.msra.mxu0 0.0
        %1682 = vmatprep.subr.mxu0 0.0
        %1683 = vmatpush1.xpose.msra.mxu0 0.0
        %1684 = vmatprep.subr.mxu0 0.0
        %1685 = vmatpush1.xpose.msra.mxu0 0.0
        %1686 = vmatprep.subr.mxu0 0.0
        %1687 = vmatpush1.xpose.msra.mxu0 0.0
        %1688 = vmatprep.subr.mxu0 0.0
        %1689 = vmatpush1.xpose.msra.mxu0 0.0
        %1690 = vmatprep.subr.mxu0 0.0
        %1691 = vmatpush1.xpose.msra.mxu0 0.0
        %1692 = vmatprep.subr.mxu0 0.0
        %1693 = vmatpush1.xpose.msra.mxu0 0.0
        %1694 = vmatprep.subr.mxu0 0.0
        %1695 = vmatpush1.xpose.msra.mxu0 0.0
        %1696 = vmatprep.subr.mxu0 0.0
        %1697 = vmatpush1.xpose.msra.mxu0 0.0
        %1698 = vmatprep.subr.mxu0 0.0
        %1699 = vmatpush1.xpose.msra.mxu0 0.0
        %1700 = vmatprep.subr.mxu0 0.0
        %1701 = vmatpush1.xpose.msra.mxu0 0.0
        %1702 = vmatprep.subr.mxu0 0.0
        %1703 = vmatpush1.xpose.msra.mxu0 0.0
        %1704 = vmatprep.subr.mxu0 0.0
        %1705 = vmatpush1.xpose.msra.mxu0 0.0
        %1706 = vmatprep.subr.mxu0 0.0
        %1707 = vmatpush1.xpose.msra.mxu0 0.0
        %1708 = vmatprep.subr.mxu0 0.0
        %1709 = vmatpush1.xpose.msra.mxu0 0.0
        %1710 = vmatprep.subr.mxu0 0.0
        %1711 = vmatpush1.xpose.msra.mxu0 0.0
        %1712 = vmatprep.subr.mxu0 0.0
        %1713 = vmatpush1.xpose.msra.mxu0 0.0
        %1714 = vmatprep.subr.mxu0 0.0
        %1715 = vmatpush1.xpose.msra.mxu0 0.0
        %1716 = vmatprep.subr.mxu0 0.0
        %1717 = vmatpush1.xpose.msra.mxu0 0.0
        %1718 = vmatprep.subr.mxu0 0.0
        %1719 = vmatpush1.xpose.msra.mxu0 0.0
        %1720 = vmatprep.subr.mxu0 0.0
        %1721 = vmatpush1.xpose.msra.mxu0 0.0
        %1722 = vmatprep.subr.mxu0 0.0
        %1723 = vmatpush1.xpose.msra.mxu0 0.0
        %1724 = vmatprep.mubr.f32.mxu0 0.0
        %1725 = vmatmul.mubr.f32.gmra.mrb[0].mxu0 %v1656
        %v1726 = vpop.f32.mrb[0].mxu0
        %v1727 = vadd.f32 0.0, %v1726
        %v1728 = vpop.f32.mrb[0].mxu0
        %1729 = vdwg.mxu0
        %v1730 = vsel %vm756, %v1649, -inf
        %1731 = vmax.xlane.f32.xlu0 %v1730
        %v1732 = vpop.xlane.xlu0 %1731
        %v1733 = vsel %vm756, %v1727, -inf
        %1734 = vmax.xlane.f32.xlu0 %v1733
        %v1735 = vpop.xlane.xlu0 %1734
        %v1736 = vsub.f32 %v1649, %v1732
        %v1737 = vsub.f32 %v1727, %v1735
        %v1738 = vmul.f32 %v1736, 1.442695
        %v1739 = vpow.pop %v1738
        %v1740 = vmul.f32 %v1737, 1.442695
        %v1741 = vpow.pop %v1740
        %v1742 = vsel %vm756, %v1739, 0.0
        %1743 = vadd.xlane.f32.xlu0 %v1742
        %v1744 = vpop.xlane.xlu0 %1743
        %v1745 = vsel %vm756, %v1741, 0.0
        %1746 = vadd.xlane.f32.xlu0 %v1745
        %v1747 = vpop.xlane.xlu0 %1746
        %v1748 = vrcp.pop %v1744
        %v1749 = vrcp.pop %v1747
        %v1750 = vmul.f32 %v1739, %v1748
        %v1751 = vmul.f32 %v1741, %v1749
        %1752 = vrot.lane.b32.xlu0 %v741, 48
        %v1753 = vpop.permute.xlu0 %1752
        %v1756 = vsel %vm756, %v1750, 0
        %1758 = vmatprep.subr.mxu0 0.0
        %1759 = vmatpush1.msra.mxu0 %v1753
        %1760 = vmatprep.subr.mxu0 0.0
        %1761 = vmatpush1.msra.mxu0 0.0
        %1762 = vmatprep.subr.mxu0 0.0
        %1763 = vmatpush1.msra.mxu0 0.0
        %1764 = vmatprep.subr.mxu0 0.0
        %1765 = vmatpush1.msra.mxu0 0.0
        %1766 = vmatprep.subr.mxu0 0.0
        %1767 = vmatpush1.msra.mxu0 0.0
        %1768 = vmatprep.subr.mxu0 0.0
        %1769 = vmatpush1.msra.mxu0 0.0
        %1770 = vmatprep.subr.mxu0 0.0
        %1771 = vmatpush1.msra.mxu0 0.0
        %1772 = vmatprep.subr.mxu0 0.0
        %1773 = vmatpush1.msra.mxu0 0.0
        %1774 = vmatprep.subr.mxu0 0.0
        %1775 = vmatpush1.msra.mxu0 0.0
        %1776 = vmatprep.subr.mxu0 0.0
        %1777 = vmatpush1.msra.mxu0 0.0
        %1778 = vmatprep.subr.mxu0 0.0
        %1779 = vmatpush1.msra.mxu0 0.0
        %1780 = vmatprep.subr.mxu0 0.0
        %1781 = vmatpush1.msra.mxu0 0.0
        %1782 = vmatprep.subr.mxu0 0.0
        %1783 = vmatpush1.msra.mxu0 0.0
        %1784 = vmatprep.subr.mxu0 0.0
        %1785 = vmatpush1.msra.mxu0 0.0
        %1786 = vmatprep.subr.mxu0 0.0
        %1787 = vmatpush1.msra.mxu0 0.0
        %1788 = vmatprep.subr.mxu0 0.0
        %1789 = vmatpush1.msra.mxu0 0.0
        %1790 = vmatprep.subr.mxu0 0.0
        %1791 = vmatpush1.msra.mxu0 0.0
        %1792 = vmatprep.subr.mxu0 0.0
        %1793 = vmatpush1.msra.mxu0 0.0
        %1794 = vmatprep.subr.mxu0 0.0
        %1795 = vmatpush1.msra.mxu0 0.0
        %1796 = vmatprep.subr.mxu0 0.0
        %1797 = vmatpush1.msra.mxu0 0.0
        %1798 = vmatprep.subr.mxu0 0.0
        %1799 = vmatpush1.msra.mxu0 0.0
        %1800 = vmatprep.subr.mxu0 0.0
        %1801 = vmatpush1.msra.mxu0 0.0
        %1802 = vmatprep.subr.mxu0 0.0
        %1803 = vmatpush1.msra.mxu0 0.0
        %1804 = vmatprep.subr.mxu0 0.0
        %1805 = vmatpush1.msra.mxu0 0.0
        %1806 = vmatprep.subr.mxu0 0.0
        %1807 = vmatpush1.msra.mxu0 0.0
        %1808 = vmatprep.subr.mxu0 0.0
        %1809 = vmatpush1.msra.mxu0 0.0
        %1810 = vmatprep.subr.mxu0 0.0
        %1811 = vmatpush1.msra.mxu0 0.0
        %1812 = vmatprep.subr.mxu0 0.0
        %1813 = vmatpush1.msra.mxu0 0.0
        %1814 = vmatprep.subr.mxu0 0.0
        %1815 = vmatpush1.msra.mxu0 0.0
        %1816 = vmatprep.subr.mxu0 0.0
        %1817 = vmatpush1.msra.mxu0 0.0
        %1818 = vmatprep.subr.mxu0 0.0
        %1819 = vmatpush1.msra.mxu0 0.0
        %1820 = vmatprep.subr.mxu0 0.0
        %1821 = vmatpush1.msra.mxu0 0.0
        %1822 = vmatprep.mubr.f32.mxu0 0.0
        %1823 = vmatmul.mubr.f32.gmra.mrb[0].mxu0 %v1756
        %v1824 = vpop.f32.mrb[0].mxu0
        %v1825 = vadd.f32 0.0, %v1824
        %v1826 = vpop.f32.mrb[0].mxu0
        %1827 = vdwg.mxu0
        %1828 = vrot.lane.b32.xlu0 %v746, 48
        %v1829 = vpop.permute.xlu0 %1828
        %v1832 = vsel %vm756, %v1751, 0
        %1834 = vmatprep.subr.mxu0 0.0
        %1835 = vmatpush1.msra.mxu0 %v1829
        %1836 = vmatprep.subr.mxu0 0.0
        %1837 = vmatpush1.msra.mxu0 0.0
        %1838 = vmatprep.subr.mxu0 0.0
        %1839 = vmatpush1.msra.mxu0 0.0
        %1840 = vmatprep.subr.mxu0 0.0
        %1841 = vmatpush1.msra.mxu0 0.0
        %1842 = vmatprep.subr.mxu0 0.0
        %1843 = vmatpush1.msra.mxu0 0.0
        %1844 = vmatprep.subr.mxu0 0.0
        %1845 = vmatpush1.msra.mxu0 0.0
        %1846 = vmatprep.subr.mxu0 0.0
        %1847 = vmatpush1.msra.mxu0 0.0
        %1848 = vmatprep.subr.mxu0 0.0
        %1849 = vmatpush1.msra.mxu0 0.0
        %1850 = vmatprep.subr.mxu0 0.0
        %1851 = vmatpush1.msra.mxu0 0.0
        %1852 = vmatprep.subr.mxu0 0.0
        %1853 = vmatpush1.msra.mxu0 0.0
        %1854 = vmatprep.subr.mxu0 0.0
        %1855 = vmatpush1.msra.mxu0 0.0
        %1856 = vmatprep.subr.mxu0 0.0
        %1857 = vmatpush1.msra.mxu0 0.0
        %1858 = vmatprep.subr.mxu0 0.0
        %1859 = vmatpush1.msra.mxu0 0.0
        %1860 = vmatprep.subr.mxu0 0.0
        %1861 = vmatpush1.msra.mxu0 0.0
        %1862 = vmatprep.subr.mxu0 0.0
        %1863 = vmatpush1.msra.mxu0 0.0
        %1864 = vmatprep.subr.mxu0 0.0
        %1865 = vmatpush1.msra.mxu0 0.0
        %1866 = vmatprep.subr.mxu0 0.0
        %1867 = vmatpush1.msra.mxu0 0.0
        %1868 = vmatprep.subr.mxu0 0.0
        %1869 = vmatpush1.msra.mxu0 0.0
        %1870 = vmatprep.subr.mxu0 0.0
        %1871 = vmatpush1.msra.mxu0 0.0
        %1872 = vmatprep.subr.mxu0 0.0
        %1873 = vmatpush1.msra.mxu0 0.0
        %1874 = vmatprep.subr.mxu0 0.0
        %1875 = vmatpush1.msra.mxu0 0.0
        %1876 = vmatprep.subr.mxu0 0.0
        %1877 = vmatpush1.msra.mxu0 0.0
        %1878 = vmatprep.subr.mxu0 0.0
        %1879 = vmatpush1.msra.mxu0 0.0
        %1880 = vmatprep.subr.mxu0 0.0
        %1881 = vmatpush1.msra.mxu0 0.0
        %1882 = vmatprep.subr.mxu0 0.0
        %1883 = vmatpush1.msra.mxu0 0.0
        %1884 = vmatprep.subr.mxu0 0.0
        %1885 = vmatpush1.msra.mxu0 0.0
        %1886 = vmatprep.subr.mxu0 0.0
        %1887 = vmatpush1.msra.mxu0 0.0
        %1888 = vmatprep.subr.mxu0 0.0
        %1889 = vmatpush1.msra.mxu0 0.0
        %1890 = vmatprep.subr.mxu0 0.0
        %1891 = vmatpush1.msra.mxu0 0.0
        %1892 = vmatprep.subr.mxu0 0.0
        %1893 = vmatpush1.msra.mxu0 0.0
        %1894 = vmatprep.subr.mxu0 0.0
        %1895 = vmatpush1.msra.mxu0 0.0
        %1896 = vmatprep.subr.mxu0 0.0
        %1897 = vmatpush1.msra.mxu0 0.0
        %1898 = vmatprep.mubr.f32.mxu0 0.0
        %1899 = vmatmul.mubr.f32.gmra.mrb[0].mxu0 %v1832
        %v1900 = vpop.f32.mrb[0].mxu0
        %v1901 = vadd.f32 0.0, %v1900
        %v1902 = vpop.f32.mrb[0].mxu0
        %1903 = vdwg.mxu0
        %v1905 = vsel %vm756, %v1825, 0
        %v1908 = vsel %vm756, %v1901, 0
        %1910 = vmatprep.subr.mxu0 0.0
        %1911 = vmatpush1.msra.mxu0 %v751
        %1912 = vmatprep.subr.mxu0 0.0
        %1913 = vmatpush1.msra.mxu0 0.0
        %1914 = vmatprep.subr.mxu0 0.0
        %1915 = vmatpush1.msra.mxu0 0.0
        %1916 = vmatprep.subr.mxu0 0.0
        %1917 = vmatpush1.msra.mxu0 0.0
        %1918 = vmatprep.subr.mxu0 0.0
        %1919 = vmatpush1.msra.mxu0 0.0
        %1920 = vmatprep.subr.mxu0 0.0
        %1921 = vmatpush1.msra.mxu0 0.0
        %1922 = vmatprep.subr.mxu0 0.0
        %1923 = vmatpush1.msra.mxu0 0.0
        %1924 = vmatprep.subr.mxu0 0.0
        %1925 = vmatpush1.msra.mxu0 0.0
        %1926 = vmatprep.subr.mxu0 0.0
        %1927 = vmatpush1.msra.mxu0 0.0
        %1928 = vmatprep.subr.mxu0 0.0
        %1929 = vmatpush1.msra.mxu0 0.0
        %1930 = vmatprep.subr.mxu0 0.0
        %1931 = vmatpush1.msra.mxu0 0.0
        %1932 = vmatprep.subr.mxu0 0.0
        %1933 = vmatpush1.msra.mxu0 0.0
        %1934 = vmatprep.subr.mxu0 0.0
        %1935 = vmatpush1.msra.mxu0 0.0
        %1936 = vmatprep.subr.mxu0 0.0
        %1937 = vmatpush1.msra.mxu0 0.0
        %1938 = vmatprep.subr.mxu0 0.0
        %1939 = vmatpush1.msra.mxu0 0.0
        %1940 = vmatprep.subr.mxu0 0.0
        %1941 = vmatpush1.msra.mxu0 0.0
        %1942 = vmatprep.subr.mxu0 0.0
        %1943 = vmatpush1.msra.mxu0 0.0
        %1944 = vmatprep.subr.mxu0 0.0
        %1945 = vmatpush1.msra.mxu0 0.0
        %1946 = vmatprep.subr.mxu0 0.0
        %1947 = vmatpush1.msra.mxu0 0.0
        %1948 = vmatprep.subr.mxu0 0.0
        %1949 = vmatpush1.msra.mxu0 0.0
        %1950 = vmatprep.subr.mxu0 0.0
        %1951 = vmatpush1.msra.mxu0 0.0
        %1952 = vmatprep.subr.mxu0 0.0
        %1953 = vmatpush1.msra.mxu0 0.0
        %1954 = vmatprep.subr.mxu0 0.0
        %1955 = vmatpush1.msra.mxu0 0.0
        %1956 = vmatprep.subr.mxu0 0.0
        %1957 = vmatpush1.msra.mxu0 0.0
        %1958 = vmatprep.subr.mxu0 0.0
        %1959 = vmatpush1.msra.mxu0 0.0
        %1960 = vmatprep.subr.mxu0 0.0
        %1961 = vmatpush1.msra.mxu0 0.0
        %1962 = vmatprep.subr.mxu0 0.0
        %1963 = vmatpush1.msra.mxu0 0.0
        %1964 = vmatprep.subr.mxu0 0.0
        %1965 = vmatpush1.msra.mxu0 0.0
        %1966 = vmatprep.subr.mxu0 0.0
        %1967 = vmatpush1.msra.mxu0 0.0
        %1968 = vmatprep.subr.mxu0 0.0
        %1969 = vmatpush1.msra.mxu0 0.0
        %1970 = vmatprep.subr.mxu0 0.0
        %1971 = vmatpush1.msra.mxu0 0.0
        %1972 = vmatprep.subr.mxu0 0.0
        %1973 = vmatpush1.msra.mxu0 0.0
        %1974 = vmatprep.mubr.f32.mxu0 0.0
        %1975 = vmatmul.mubr.f32.gmra.mrb[0].mxu0 %v1905
        %v1976 = vpop.f32.mrb[0].mxu0
        %v1977 = vadd.f32 0.0, %v1976
        %v1978 = vpop.f32.mrb[0].mxu0
        %1979 = vmatprep.mubr.f32.mxu0 0.0
        %1980 = vmatmul.mubr.f32.gmra.mrb[0].mxu0 %v1908
        %v1981 = vpop.f32.mrb[0].mxu0
        %v1982 = vadd.f32 0.0, %v1981
        %v1983 = vpop.f32.mrb[0].mxu0
        %1984 = vdwg.mxu0
        %v1985 = vadd.f32 %v1566, %v1977
        %v1986 = vadd.f32 %v1571, %v1982
        %1987 = vrot.lane.b32.xlu0 %v741, 104
        %v1988 = vpop.permute.xlu0 %1987
        %1989 = vrot.lane.b32.xlu0 %v741, 72
        %v1990 = vpop.permute.xlu0 %1989
        %v1991 = vsel %vm756, %v1988, 0
        %v1993 = vsel %vm756, %v1990, 0
        %1995 = vmatprep.subr.mxu0 0.0
        %1996 = vmatpush1.xpose.msra.mxu0 %v1993
        %1997 = vmatprep.subr.mxu0 0.0
        %1998 = vmatpush1.xpose.msra.mxu0 0.0
        %1999 = vmatprep.subr.mxu0 0.0
        %2000 = vmatpush1.xpose.msra.mxu0 0.0
        %2001 = vmatprep.subr.mxu0 0.0
        %2002 = vmatpush1.xpose.msra.mxu0 0.0
        %2003 = vmatprep.subr.mxu0 0.0
        %2004 = vmatpush1.xpose.msra.mxu0 0.0
        %2005 = vmatprep.subr.mxu0 0.0
        %2006 = vmatpush1.xpose.msra.mxu0 0.0
        %2007 = vmatprep.subr.mxu0 0.0
        %2008 = vmatpush1.xpose.msra.mxu0 0.0
        %2009 = vmatprep.subr.mxu0 0.0
        %2010 = vmatpush1.xpose.msra.mxu0 0.0
        %2011 = vmatprep.subr.mxu0 0.0
        %2012 = vmatpush1.xpose.msra.mxu0 0.0
        %2013 = vmatprep.subr.mxu0 0.0
        %2014 = vmatpush1.xpose.msra.mxu0 0.0
        %2015 = vmatprep.subr.mxu0 0.0
        %2016 = vmatpush1.xpose.msra.mxu0 0.0
        %2017 = vmatprep.subr.mxu0 0.0
        %2018 = vmatpush1.xpose.msra.mxu0 0.0
        %2019 = vmatprep.subr.mxu0 0.0
        %2020 = vmatpush1.xpose.msra.mxu0 0.0
        %2021 = vmatprep.subr.mxu0 0.0
        %2022 = vmatpush1.xpose.msra.mxu0 0.0
        %2023 = vmatprep.subr.mxu0 0.0
        %2024 = vmatpush1.xpose.msra.mxu0 0.0
        %2025 = vmatprep.subr.mxu0 0.0
        %2026 = vmatpush1.xpose.msra.mxu0 0.0
        %2027 = vmatprep.subr.mxu0 0.0
        %2028 = vmatpush1.xpose.msra.mxu0 0.0
        %2029 = vmatprep.subr.mxu0 0.0
        %2030 = vmatpush1.xpose.msra.mxu0 0.0
        %2031 = vmatprep.subr.mxu0 0.0
        %2032 = vmatpush1.xpose.msra.mxu0 0.0
        %2033 = vmatprep.subr.mxu0 0.0
        %2034 = vmatpush1.xpose.msra.mxu0 0.0
        %2035 = vmatprep.subr.mxu0 0.0
        %2036 = vmatpush1.xpose.msra.mxu0 0.0
        %2037 = vmatprep.subr.mxu0 0.0
        %2038 = vmatpush1.xpose.msra.mxu0 0.0
        %2039 = vmatprep.subr.mxu0 0.0
        %2040 = vmatpush1.xpose.msra.mxu0 0.0
        %2041 = vmatprep.subr.mxu0 0.0
        %2042 = vmatpush1.xpose.msra.mxu0 0.0
        %2043 = vmatprep.subr.mxu0 0.0
        %2044 = vmatpush1.xpose.msra.mxu0 0.0
        %2045 = vmatprep.subr.mxu0 0.0
        %2046 = vmatpush1.xpose.msra.mxu0 0.0
        %2047 = vmatprep.subr.mxu0 0.0
        %2048 = vmatpush1.xpose.msra.mxu0 0.0
        %2049 = vmatprep.subr.mxu0 0.0
        %2050 = vmatpush1.xpose.msra.mxu0 0.0
        %2051 = vmatprep.subr.mxu0 0.0
        %2052 = vmatpush1.xpose.msra.mxu0 0.0
        %2053 = vmatprep.subr.mxu0 0.0
        %2054 = vmatpush1.xpose.msra.mxu0 0.0
        %2055 = vmatprep.subr.mxu0 0.0
        %2056 = vmatpush1.xpose.msra.mxu0 0.0
        %2057 = vmatprep.subr.mxu0 0.0
        %2058 = vmatpush1.xpose.msra.mxu0 0.0
        %2059 = vmatprep.mubr.f32.mxu0 0.0
        %2060 = vmatmul.mubr.f32.gmra.mrb[0].mxu0 %v1991
        %v2061 = vpop.f32.mrb[0].mxu0
        %v2062 = vadd.f32 0.0, %v2061
        %v2063 = vpop.f32.mrb[0].mxu0
        %2064 = vdwg.mxu0
        %2065 = vrot.lane.b32.xlu0 %v746, 104
        %v2066 = vpop.permute.xlu0 %2065
        %2067 = vrot.lane.b32.xlu0 %v746, 72
        %v2068 = vpop.permute.xlu0 %2067
        %v2069 = vsel %vm756, %v2066, 0
        %v2071 = vsel %vm756, %v2068, 0
        %2073 = vmatprep.subr.mxu0 0.0
        %2074 = vmatpush1.xpose.msra.mxu0 %v2071
        %2075 = vmatprep.subr.mxu0 0.0
        %2076 = vmatpush1.xpose.msra.mxu0 0.0
        %2077 = vmatprep.subr.mxu0 0.0
        %2078 = vmatpush1.xpose.msra.mxu0 0.0
        %2079 = vmatprep.subr.mxu0 0.0
        %2080 = vmatpush1.xpose.msra.mxu0 0.0
        %2081 = vmatprep.subr.mxu0 0.0
        %2082 = vmatpush1.xpose.msra.mxu0 0.0
        %2083 = vmatprep.subr.mxu0 0.0
        %2084 = vmatpush1.xpose.msra.mxu0 0.0
        %2085 = vmatprep.subr.mxu0 0.0
        %2086 = vmatpush1.xpose.msra.mxu0 0.0
        %2087 = vmatprep.subr.mxu0 0.0
        %2088 = vmatpush1.xpose.msra.mxu0 0.0
        %2089 = vmatprep.subr.mxu0 0.0
        %2090 = vmatpush1.xpose.msra.mxu0 0.0
        %2091 = vmatprep.subr.mxu0 0.0
        %2092 = vmatpush1.xpose.msra.mxu0 0.0
        %2093 = vmatprep.subr.mxu0 0.0
        %2094 = vmatpush1.xpose.msra.mxu0 0.0
        %2095 = vmatprep.subr.mxu0 0.0
        %2096 = vmatpush1.xpose.msra.mxu0 0.0
        %2097 = vmatprep.subr.mxu0 0.0
        %2098 = vmatpush1.xpose.msra.mxu0 0.0
        %2099 = vmatprep.subr.mxu0 0.0
        %2100 = vmatpush1.xpose.msra.mxu0 0.0
        %2101 = vmatprep.subr.mxu0 0.0
        %2102 = vmatpush1.xpose.msra.mxu0 0.0
        %2103 = vmatprep.subr.mxu0 0.0
        %2104 = vmatpush1.xpose.msra.mxu0 0.0
        %2105 = vmatprep.subr.mxu0 0.0
        %2106 = vmatpush1.xpose.msra.mxu0 0.0
        %2107 = vmatprep.subr.mxu0 0.0
        %2108 = vmatpush1.xpose.msra.mxu0 0.0
        %2109 = vmatprep.subr.mxu0 0.0
        %2110 = vmatpush1.xpose.msra.mxu0 0.0
        %2111 = vmatprep.subr.mxu0 0.0
        %2112 = vmatpush1.xpose.msra.mxu0 0.0
        %2113 = vmatprep.subr.mxu0 0.0
        %2114 = vmatpush1.xpose.msra.mxu0 0.0
        %2115 = vmatprep.subr.mxu0 0.0
        %2116 = vmatpush1.xpose.msra.mxu0 0.0
        %2117 = vmatprep.subr.mxu0 0.0
        %2118 = vmatpush1.xpose.msra.mxu0 0.0
        %2119 = vmatprep.subr.mxu0 0.0
        %2120 = vmatpush1.xpose.msra.mxu0 0.0
        %2121 = vmatprep.subr.mxu0 0.0
        %2122 = vmatpush1.xpose.msra.mxu0 0.0
        %2123 = vmatprep.subr.mxu0 0.0
        %2124 = vmatpush1.xpose.msra.mxu0 0.0
        %2125 = vmatprep.subr.mxu0 0.0
        %2126 = vmatpush1.xpose.msra.mxu0 0.0
        %2127 = vmatprep.subr.mxu0 0.0
        %2128 = vmatpush1.xpose.msra.mxu0 0.0
        %2129 = vmatprep.subr.mxu0 0.0
        %2130 = vmatpush1.xpose.msra.mxu0 0.0
        %2131 = vmatprep.subr.mxu0 0.0
        %2132 = vmatpush1.xpose.msra.mxu0 0.0
        %2133 = vmatprep.subr.mxu0 0.0
        %2134 = vmatpush1.xpose.msra.mxu0 0.0
        %2135 = vmatprep.subr.mxu0 0.0
        %2136 = vmatpush1.xpose.msra.mxu0 0.0
        %2137 = vmatprep.mubr.f32.mxu0 0.0
        %2138 = vmatmul.mubr.f32.gmra.mrb[0].mxu0 %v2069
        %v2139 = vpop.f32.mrb[0].mxu0
        %v2140 = vadd.f32 0.0, %v2139
        %v2141 = vpop.f32.mrb[0].mxu0
        %2142 = vdwg.mxu0
        %v2143 = vsel %vm756, %v2062, -inf
        %2144 = vmax.xlane.f32.xlu0 %v2143
        %v2145 = vpop.xlane.xlu0 %2144
        %v2146 = vsel %vm756, %v2140, -inf
        %2147 = vmax.xlane.f32.xlu0 %v2146
        %v2148 = vpop.xlane.xlu0 %2147
        %v2149 = vsub.f32 %v2062, %v2145
        %v2150 = vsub.f32 %v2140, %v2148
        %v2151 = vmul.f32 %v2149, 1.442695
        %v2152 = vpow.pop %v2151
        %v2153 = vmul.f32 %v2150, 1.442695
        %v2154 = vpow.pop %v2153
        %v2155 = vsel %vm756, %v2152, 0.0
        %2156 = vadd.xlane.f32.xlu0 %v2155
        %v2157 = vpop.xlane.xlu0 %2156
        %v2158 = vsel %vm756, %v2154, 0.0
        %2159 = vadd.xlane.f32.xlu0 %v2158
        %v2160 = vpop.xlane.xlu0 %2159
        %v2161 = vrcp.pop %v2157
        %v2162 = vrcp.pop %v2160
        %v2163 = vmul.f32 %v2152, %v2161
        %v2164 = vmul.f32 %v2154, %v2162
        %2165 = vrot.lane.b32.xlu0 %v741, 40
        %v2166 = vpop.permute.xlu0 %2165
        %v2169 = vsel %vm756, %v2163, 0
        %2171 = vmatprep.subr.mxu0 0.0
        %2172 = vmatpush1.msra.mxu0 %v2166
        %2173 = vmatprep.subr.mxu0 0.0
        %2174 = vmatpush1.msra.mxu0 0.0
        %2175 = vmatprep.subr.mxu0 0.0
        %2176 = vmatpush1.msra.mxu0 0.0
        %2177 = vmatprep.subr.mxu0 0.0
        %2178 = vmatpush1.msra.mxu0 0.0
        %2179 = vmatprep.subr.mxu0 0.0
        %2180 = vmatpush1.msra.mxu0 0.0
        %2181 = vmatprep.subr.mxu0 0.0
        %2182 = vmatpush1.msra.mxu0 0.0
        %2183 = vmatprep.subr.mxu0 0.0
        %2184 = vmatpush1.msra.mxu0 0.0
        %2185 = vmatprep.subr.mxu0 0.0
        %2186 = vmatpush1.msra.mxu0 0.0
        %2187 = vmatprep.subr.mxu0 0.0
        %2188 = vmatpush1.msra.mxu0 0.0
        %2189 = vmatprep.subr.mxu0 0.0
        %2190 = vmatpush1.msra.mxu0 0.0
        %2191 = vmatprep.subr.mxu0 0.0
        %2192 = vmatpush1.msra.mxu0 0.0
        %2193 = vmatprep.subr.mxu0 0.0
        %2194 = vmatpush1.msra.mxu0 0.0
        %2195 = vmatprep.subr.mxu0 0.0
        %2196 = vmatpush1.msra.mxu0 0.0
        %2197 = vmatprep.subr.mxu0 0.0
        %2198 = vmatpush1.msra.mxu0 0.0
        %2199 = vmatprep.subr.mxu0 0.0
        %2200 = vmatpush1.msra.mxu0 0.0
        %2201 = vmatprep.subr.mxu0 0.0
        %2202 = vmatpush1.msra.mxu0 0.0
        %2203 = vmatprep.subr.mxu0 0.0
        %2204 = vmatpush1.msra.mxu0 0.0
        %2205 = vmatprep.subr.mxu0 0.0
        %2206 = vmatpush1.msra.mxu0 0.0
        %2207 = vmatprep.subr.mxu0 0.0
        %2208 = vmatpush1.msra.mxu0 0.0
        %2209 = vmatprep.subr.mxu0 0.0
        %2210 = vmatpush1.msra.mxu0 0.0
        %2211 = vmatprep.subr.mxu0 0.0
        %2212 = vmatpush1.msra.mxu0 0.0
        %2213 = vmatprep.subr.mxu0 0.0
        %2214 = vmatpush1.msra.mxu0 0.0
        %2215 = vmatprep.subr.mxu0 0.0
        %2216 = vmatpush1.msra.mxu0 0.0
        %2217 = vmatprep.subr.mxu0 0.0
        %2218 = vmatpush1.msra.mxu0 0.0
        %2219 = vmatprep.subr.mxu0 0.0
        %2220 = vmatpush1.msra.mxu0 0.0
        %2221 = vmatprep.subr.mxu0 0.0
        %2222 = vmatpush1.msra.mxu0 0.0
        %2223 = vmatprep.subr.mxu0 0.0
        %2224 = vmatpush1.msra.mxu0 0.0
        %2225 = vmatprep.subr.mxu0 0.0
        %2226 = vmatpush1.msra.mxu0 0.0
        %2227 = vmatprep.subr.mxu0 0.0
        %2228 = vmatpush1.msra.mxu0 0.0
        %2229 = vmatprep.subr.mxu0 0.0
        %2230 = vmatpush1.msra.mxu0 0.0
        %2231 = vmatprep.subr.mxu0 0.0
        %2232 = vmatpush1.msra.mxu0 0.0
        %2233 = vmatprep.subr.mxu0 0.0
        %2234 = vmatpush1.msra.mxu0 0.0
        %2235 = vmatprep.mubr.f32.mxu0 0.0
        %2236 = vmatmul.mubr.f32.gmra.mrb[0].mxu0 %v2169
        %v2237 = vpop.f32.mrb[0].mxu0
        %v2238 = vadd.f32 0.0, %v2237
        %v2239 = vpop.f32.mrb[0].mxu0
        %2240 = vdwg.mxu0
        %2241 = vrot.lane.b32.xlu0 %v746, 40
        %v2242 = vpop.permute.xlu0 %2241
        %v2245 = vsel %vm756, %v2164, 0
        %2247 = vmatprep.subr.mxu0 0.0
        %2248 = vmatpush1.msra.mxu0 %v2242
        %2249 = vmatprep.subr.mxu0 0.0
        %2250 = vmatpush1.msra.mxu0 0.0
        %2251 = vmatprep.subr.mxu0 0.0
        %2252 = vmatpush1.msra.mxu0 0.0
        %2253 = vmatprep.subr.mxu0 0.0
        %2254 = vmatpush1.msra.mxu0 0.0
        %2255 = vmatprep.subr.mxu0 0.0
        %2256 = vmatpush1.msra.mxu0 0.0
        %2257 = vmatprep.subr.mxu0 0.0
        %2258 = vmatpush1.msra.mxu0 0.0
        %2259 = vmatprep.subr.mxu0 0.0
        %2260 = vmatpush1.msra.mxu0 0.0
        %2261 = vmatprep.subr.mxu0 0.0
        %2262 = vmatpush1.msra.mxu0 0.0
        %2263 = vmatprep.subr.mxu0 0.0
        %2264 = vmatpush1.msra.mxu0 0.0
        %2265 = vmatprep.subr.mxu0 0.0
        %2266 = vmatpush1.msra.mxu0 0.0
        %2267 = vmatprep.subr.mxu0 0.0
        %2268 = vmatpush1.msra.mxu0 0.0
        %2269 = vmatprep.subr.mxu0 0.0
        %2270 = vmatpush1.msra.mxu0 0.0
        %2271 = vmatprep.subr.mxu0 0.0
        %2272 = vmatpush1.msra.mxu0 0.0
        %2273 = vmatprep.subr.mxu0 0.0
        %2274 = vmatpush1.msra.mxu0 0.0
        %2275 = vmatprep.subr.mxu0 0.0
        %2276 = vmatpush1.msra.mxu0 0.0
        %2277 = vmatprep.subr.mxu0 0.0
        %2278 = vmatpush1.msra.mxu0 0.0
        %2279 = vmatprep.subr.mxu0 0.0
        %2280 = vmatpush1.msra.mxu0 0.0
        %2281 = vmatprep.subr.mxu0 0.0
        %2282 = vmatpush1.msra.mxu0 0.0
        %2283 = vmatprep.subr.mxu0 0.0
        %2284 = vmatpush1.msra.mxu0 0.0
        %2285 = vmatprep.subr.mxu0 0.0
        %2286 = vmatpush1.msra.mxu0 0.0
        %2287 = vmatprep.subr.mxu0 0.0
        %2288 = vmatpush1.msra.mxu0 0.0
        %2289 = vmatprep.subr.mxu0 0.0
        %2290 = vmatpush1.msra.mxu0 0.0
        %2291 = vmatprep.subr.mxu0 0.0
        %2292 = vmatpush1.msra.mxu0 0.0
        %2293 = vmatprep.subr.mxu0 0.0
        %2294 = vmatpush1.msra.mxu0 0.0
        %2295 = vmatprep.subr.mxu0 0.0
        %2296 = vmatpush1.msra.mxu0 0.0
        %2297 = vmatprep.subr.mxu0 0.0
        %2298 = vmatpush1.msra.mxu0 0.0
        %2299 = vmatprep.subr.mxu0 0.0
        %2300 = vmatpush1.msra.mxu0 0.0
        %2301 = vmatprep.subr.mxu0 0.0
        %2302 = vmatpush1.msra.mxu0 0.0
        %2303 = vmatprep.subr.mxu0 0.0
        %2304 = vmatpush1.msra.mxu0 0.0
        %2305 = vmatprep.subr.mxu0 0.0
        %2306 = vmatpush1.msra.mxu0 0.0
        %2307 = vmatprep.subr.mxu0 0.0
        %2308 = vmatpush1.msra.mxu0 0.0
        %2309 = vmatprep.subr.mxu0 0.0
        %2310 = vmatpush1.msra.mxu0 0.0
        %2311 = vmatprep.mubr.f32.mxu0 0.0
        %2312 = vmatmul.mubr.f32.gmra.mrb[0].mxu0 %v2245
        %v2313 = vpop.f32.mrb[0].mxu0
        %v2314 = vadd.f32 0.0, %v2313
        %v2315 = vpop.f32.mrb[0].mxu0
        %2316 = vdwg.mxu0
        %v2318 = vsel %vm756, %v2238, 0
        %v2321 = vsel %vm756, %v2314, 0
        %2323 = vmatprep.subr.mxu0 0.0
        %2324 = vmatpush1.msra.mxu0 %v752
        %2325 = vmatprep.subr.mxu0 0.0
        %2326 = vmatpush1.msra.mxu0 0.0
        %2327 = vmatprep.subr.mxu0 0.0
        %2328 = vmatpush1.msra.mxu0 0.0
        %2329 = vmatprep.subr.mxu0 0.0
        %2330 = vmatpush1.msra.mxu0 0.0
        %2331 = vmatprep.subr.mxu0 0.0
        %2332 = vmatpush1.msra.mxu0 0.0
        %2333 = vmatprep.subr.mxu0 0.0
        %2334 = vmatpush1.msra.mxu0 0.0
        %2335 = vmatprep.subr.mxu0 0.0
        %2336 = vmatpush1.msra.mxu0 0.0
        %2337 = vmatprep.subr.mxu0 0.0
        %2338 = vmatpush1.msra.mxu0 0.0
        %2339 = vmatprep.subr.mxu0 0.0
        %2340 = vmatpush1.msra.mxu0 0.0
        %2341 = vmatprep.subr.mxu0 0.0
        %2342 = vmatpush1.msra.mxu0 0.0
        %2343 = vmatprep.subr.mxu0 0.0
        %2344 = vmatpush1.msra.mxu0 0.0
        %2345 = vmatprep.subr.mxu0 0.0
        %2346 = vmatpush1.msra.mxu0 0.0
        %2347 = vmatprep.subr.mxu0 0.0
        %2348 = vmatpush1.msra.mxu0 0.0
        %2349 = vmatprep.subr.mxu0 0.0
        %2350 = vmatpush1.msra.mxu0 0.0
        %2351 = vmatprep.subr.mxu0 0.0
        %2352 = vmatpush1.msra.mxu0 0.0
        %2353 = vmatprep.subr.mxu0 0.0
        %2354 = vmatpush1.msra.mxu0 0.0
        %2355 = vmatprep.subr.mxu0 0.0
        %2356 = vmatpush1.msra.mxu0 0.0
        %2357 = vmatprep.subr.mxu0 0.0
        %2358 = vmatpush1.msra.mxu0 0.0
        %2359 = vmatprep.subr.mxu0 0.0
        %2360 = vmatpush1.msra.mxu0 0.0
        %2361 = vmatprep.subr.mxu0 0.0
        %2362 = vmatpush1.msra.mxu0 0.0
        %2363 = vmatprep.subr.mxu0 0.0
        %2364 = vmatpush1.msra.mxu0 0.0
        %2365 = vmatprep.subr.mxu0 0.0
        %2366 = vmatpush1.msra.mxu0 0.0
        %2367 = vmatprep.subr.mxu0 0.0
        %2368 = vmatpush1.msra.mxu0 0.0
        %2369 = vmatprep.subr.mxu0 0.0
        %2370 = vmatpush1.msra.mxu0 0.0
        %2371 = vmatprep.subr.mxu0 0.0
        %2372 = vmatpush1.msra.mxu0 0.0
        %2373 = vmatprep.subr.mxu0 0.0
        %2374 = vmatpush1.msra.mxu0 0.0
        %2375 = vmatprep.subr.mxu0 0.0
        %2376 = vmatpush1.msra.mxu0 0.0
        %2377 = vmatprep.subr.mxu0 0.0
        %2378 = vmatpush1.msra.mxu0 0.0
        %2379 = vmatprep.subr.mxu0 0.0
        %2380 = vmatpush1.msra.mxu0 0.0
        %2381 = vmatprep.subr.mxu0 0.0
        %2382 = vmatpush1.msra.mxu0 0.0
        %2383 = vmatprep.subr.mxu0 0.0
        %2384 = vmatpush1.msra.mxu0 0.0
        %2385 = vmatprep.subr.mxu0 0.0
        %2386 = vmatpush1.msra.mxu0 0.0
        %2387 = vmatprep.mubr.f32.mxu0 0.0
        %2388 = vmatmul.mubr.f32.gmra.mrb[0].mxu0 %v2318
        %v2389 = vpop.f32.mrb[0].mxu0
        %v2390 = vadd.f32 0.0, %v2389
        %v2391 = vpop.f32.mrb[0].mxu0
        %2392 = vmatprep.mubr.f32.mxu0 0.0
        %2393 = vmatmul.mubr.f32.gmra.mrb[0].mxu0 %v2321
        %v2394 = vpop.f32.mrb[0].mxu0
        %v2395 = vadd.f32 0.0, %v2394
        %v2396 = vpop.f32.mrb[0].mxu0
        %2397 = vdwg.mxu0
        %v2398 = vadd.f32 %v1985, %v2390
        %v2399 = vadd.f32 %v1986, %v2395
        %v2400 = vld [vmem:[%s5] sm:$0x1]
        %v2402 = vlaneseq
        %v2403 = vshrl.u32 %v2402, 7
        %v2404 = vsub.s32 0, %v2403
        %v2405 = vrot.slane %v2400, %v2404
        %v2407 = vadd.f32 %v2398, %v2405
        %v2408 = vadd.f32 %v2399, %v2405
        %v2409 = vadd.f32 %v654, %v2407
        %v2410 = vadd.f32 %v655, %v2408
        %v2411 = vld [vmem:[#allocation3] sm:$0x1]
        %v2412 = vld [vmem:[#allocation6] sm:$0x1]
        %v2413 = vsel %vm667, %v2409, 0.0
        %2414 = vadd.xlane.f32.xlu0 %v2413
        %v2415 = vpop.xlane.xlu0 %2414
        %v2416 = vsel %vm667, %v2410, 0.0
        %2417 = vadd.xlane.f32.xlu0 %v2416
        %v2418 = vpop.xlane.xlu0 %2417
        %v2419 = vrcp.pop 32.0
        %v2420 = vmul.f32 %v2415, %v2419
        %v2421 = vmul.f32 %v2418, %v2419
        %v2422 = vmul.f32 %v2409, %v2409
        %v2423 = vmul.f32 %v2410, %v2410
        %v2424 = vsel %vm667, %v2422, 0.0
        %2425 = vadd.xlane.f32.xlu0 %v2424
        %v2426 = vpop.xlane.xlu0 %2425
        %v2427 = vsel %vm667, %v2423, 0.0
        %2428 = vadd.xlane.f32.xlu0 %v2427
        %v2429 = vpop.xlane.xlu0 %2428
        %v2430 = vmul.f32 %v2426, %v2419
        %v2431 = vmul.f32 %v2429, %v2419
        %v2432 = vmul.f32 %v2420, %v2420
        %v2433 = vmul.f32 %v2421, %v2421
        %v2434 = vsub.f32 %v2430, %v2432
        %v2435 = vsub.f32 %v2431, %v2433
        %v2436 = vsub.f32 %v2409, %v2420
        %v2437 = vsub.f32 %v2410, %v2421
        %v2438 = vadd.f32 %v2434, 1e-05
        %v2439 = vadd.f32 %v2435, 1e-05
        %v2440 = vrsqrt.pop %v2438
        %v2441 = vrsqrt.pop %v2439
        %v2442 = vmul.f32 %v2436, %v2440
        %v2443 = vmul.f32 %v2437, %v2441
        %v2445 = vlaneseq
        %v2446 = vshrl.u32 %v2445, 7
        %v2447 = vsub.s32 0, %v2446
        %v2448 = vrot.slane %v2411, %v2447
        %v2450 = vmul.f32 %v2442, %v2448
        %v2451 = vmul.f32 %v2443, %v2448
        %v2453 = vlaneseq
        %v2454 = vshrl.u32 %v2453, 7
        %v2455 = vsub.s32 0, %v2454
        %v2456 = vrot.slane %v2412, %v2455
        %v2458 = vadd.f32 %v2450, %v2456
        %v2459 = vadd.f32 %v2451, %v2456
        %v2460 = vld [vmem:[%s8] sm:$0xff]
        %v2461 = vld [vmem:[%s8 + $0x8] sm:$0xff]
        %v2462 = vld [vmem:[%s8 + $0x10] sm:$0xff]
        %v2463 = vld [vmem:[%s8 + $0x18] sm:$0xff]
        %v2464 = vld [vmem:[%s9] sm:$0x1]
        %v2466 = vlaneseq
        %v2467 = vshrl.u32 %v2466, 7
        %v2468 = vsub.s32 0, %v2467
        %v2469 = vrot.slane %v2464, %v2468
        %v2472 = vsel %vm667, %v2458, 0
        %v2475 = vsel %vm667, %v2459, 0
        %2477 = vmatprep.subr.mxu0 0.0
        %2478 = vmatpush1.msra.mxu0 %v2460
        %2479 = vmatprep.subr.mxu0 0.0
        %2480 = vmatpush1.msra.mxu0 %v2461
        %2481 = vmatprep.subr.mxu0 0.0
        %2482 = vmatpush1.msra.mxu0 %v2462
        %2483 = vmatprep.subr.mxu0 0.0
        %2484 = vmatpush1.msra.mxu0 %v2463
        %2485 = vmatprep.subr.mxu0 0.0
        %2486 = vmatpush1.msra.mxu0 0.0
        %2487 = vmatprep.subr.mxu0 0.0
        %2488 = vmatpush1.msra.mxu0 0.0
        %2489 = vmatprep.subr.mxu0 0.0
        %2490 = vmatpush1.msra.mxu0 0.0
        %2491 = vmatprep.subr.mxu0 0.0
        %2492 = vmatpush1.msra.mxu0 0.0
        %2493 = vmatprep.subr.mxu0 0.0
        %2494 = vmatpush1.msra.mxu0 0.0
        %2495 = vmatprep.subr.mxu0 0.0
        %2496 = vmatpush1.msra.mxu0 0.0
        %2497 = vmatprep.subr.mxu0 0.0
        %2498 = vmatpush1.msra.mxu0 0.0
        %2499 = vmatprep.subr.mxu0 0.0
        %2500 = vmatpush1.msra.mxu0 0.0
        %2501 = vmatprep.subr.mxu0 0.0
        %2502 = vmatpush1.msra.mxu0 0.0
        %2503 = vmatprep.subr.mxu0 0.0
        %2504 = vmatpush1.msra.mxu0 0.0
        %2505 = vmatprep.subr.mxu0 0.0
        %2506 = vmatpush1.msra.mxu0 0.0
        %2507 = vmatprep.subr.mxu0 0.0
        %2508 = vmatpush1.msra.mxu0 0.0
        %2509 = vmatprep.subr.mxu0 0.0
        %2510 = vmatpush1.msra.mxu0 0.0
        %2511 = vmatprep.subr.mxu0 0.0
        %2512 = vmatpush1.msra.mxu0 0.0
        %2513 = vmatprep.subr.mxu0 0.0
        %2514 = vmatpush1.msra.mxu0 0.0
        %2515 = vmatprep.subr.mxu0 0.0
        %2516 = vmatpush1.msra.mxu0 0.0
        %2517 = vmatprep.subr.mxu0 0.0
        %2518 = vmatpush1.msra.mxu0 0.0
        %2519 = vmatprep.subr.mxu0 0.0
        %2520 = vmatpush1.msra.mxu0 0.0
        %2521 = vmatprep.subr.mxu0 0.0
        %2522 = vmatpush1.msra.mxu0 0.0
        %2523 = vmatprep.subr.mxu0 0.0
        %2524 = vmatpush1.msra.mxu0 0.0
        %2525 = vmatprep.subr.mxu0 0.0
        %2526 = vmatpush1.msra.mxu0 0.0
        %2527 = vmatprep.subr.mxu0 0.0
        %2528 = vmatpush1.msra.mxu0 0.0
        %2529 = vmatprep.subr.mxu0 0.0
        %2530 = vmatpush1.msra.mxu0 0.0
        %2531 = vmatprep.subr.mxu0 0.0
        %2532 = vmatpush1.msra.mxu0 0.0
        %2533 = vmatprep.subr.mxu0 0.0
        %2534 = vmatpush1.msra.mxu0 0.0
        %2535 = vmatprep.subr.mxu0 0.0
        %2536 = vmatpush1.msra.mxu0 0.0
        %2537 = vmatprep.subr.mxu0 0.0
        %2538 = vmatpush1.msra.mxu0 0.0
        %2539 = vmatprep.subr.mxu0 0.0
        %2540 = vmatpush1.msra.mxu0 0.0
        %2541 = vmatprep.mubr.f32.mxu0 0.0
        %2542 = vmatmul.mubr.f32.gmra.mrb[0].mxu0 %v2472
        %v2543 = vpop.f32.mrb[0].mxu0
        %v2544 = vadd.f32 %v2469, %v2543
        %v2545 = vpop.f32.mrb[0].mxu0
        %2546 = vmatprep.mubr.f32.mxu0 0.0
        %2547 = vmatmul.mubr.f32.gmra.mrb[0].mxu0 %v2475
        %v2548 = vpop.f32.mrb[0].mxu0
        %v2549 = vadd.f32 %v2469, %v2548
        %v2550 = vpop.f32.mrb[0].mxu0
        %2551 = vdwg.mxu0
        %v2552 = vmax.f32 %v2544, 0.0
        %v2553 = vmax.f32 %v2549, 0.0
        %v2554 = vld [vmem:[%s10] sm:$0xff]
        %v2555 = vld [vmem:[%s10 + $0x8] sm:$0xff]
        %v2556 = vld [vmem:[%s10 + $0x10] sm:$0xff]
        %v2557 = vld [vmem:[%s10 + $0x18] sm:$0xff]
        %v2558 = vld [vmem:[%s10 + $0x20] sm:$0xff]
        %v2559 = vld [vmem:[%s10 + $0x28] sm:$0xff]
        %v2560 = vld [vmem:[%s10 + $0x30] sm:$0xff]
        %v2561 = vld [vmem:[%s10 + $0x38] sm:$0xff]
        %v2562 = vld [vmem:[%s11] sm:$0x1]
        %v2564 = vlaneseq
        %v2565 = vshrl.u32 %v2564, 7
        %v2566 = vsub.s32 0, %v2565
        %v2567 = vrot.slane %v2562, %v2566
        %vm2569 = vcmask 523264
        %v2571 = vsel %vm2569, %v2552, 0
        %v2574 = vsel %vm2569, %v2553, 0
        %2576 = vmatprep.subr.mxu0 0.0
        %2577 = vmatpush1.msra.mxu0 %v2554
        %2578 = vmatprep.subr.mxu0 0.0
        %2579 = vmatpush1.msra.mxu0 %v2555
        %2580 = vmatprep.subr.mxu0 0.0
        %2581 = vmatpush1.msra.mxu0 %v2556
        %2582 = vmatprep.subr.mxu0 0.0
        %2583 = vmatpush1.msra.mxu0 %v2557
        %2584 = vmatprep.subr.mxu0 0.0
        %2585 = vmatpush1.msra.mxu0 %v2558
        %2586 = vmatprep.subr.mxu0 0.0
        %2587 = vmatpush1.msra.mxu0 %v2559
        %2588 = vmatprep.subr.mxu0 0.0
        %2589 = vmatpush1.msra.mxu0 %v2560
        %2590 = vmatprep.subr.mxu0 0.0
        %2591 = vmatpush1.msra.mxu0 %v2561
        %2592 = vmatprep.subr.mxu0 0.0
        %2593 = vmatpush1.msra.mxu0 0.0
        %2594 = vmatprep.subr.mxu0 0.0
        %2595 = vmatpush1.msra.mxu0 0.0
        %2596 = vmatprep.subr.mxu0 0.0
        %2597 = vmatpush1.msra.mxu0 0.0
        %2598 = vmatprep.subr.mxu0 0.0
        %2599 = vmatpush1.msra.mxu0 0.0
        %2600 = vmatprep.subr.mxu0 0.0
        %2601 = vmatpush1.msra.mxu0 0.0
        %2602 = vmatprep.subr.mxu0 0.0
        %2603 = vmatpush1.msra.mxu0 0.0
        %2604 = vmatprep.subr.mxu0 0.0
        %2605 = vmatpush1.msra.mxu0 0.0
        %2606 = vmatprep.subr.mxu0 0.0
        %2607 = vmatpush1.msra.mxu0 0.0
        %2608 = vmatprep.subr.mxu0 0.0
        %2609 = vmatpush1.msra.mxu0 0.0
        %2610 = vmatprep.subr.mxu0 0.0
        %2611 = vmatpush1.msra.mxu0 0.0
        %2612 = vmatprep.subr.mxu0 0.0
        %2613 = vmatpush1.msra.mxu0 0.0
        %2614 = vmatprep.subr.mxu0 0.0
        %2615 = vmatpush1.msra.mxu0 0.0
        %2616 = vmatprep.subr.mxu0 0.0
        %2617 = vmatpush1.msra.mxu0 0.0
        %2618 = vmatprep.subr.mxu0 0.0
        %2619 = vmatpush1.msra.mxu0 0.0
        %2620 = vmatprep.subr.mxu0 0.0
        %2621 = vmatpush1.msra.mxu0 0.0
        %2622 = vmatprep.subr.mxu0 0.0
        %2623 = vmatpush1.msra.mxu0 0.0
        %2624 = vmatprep.subr.mxu0 0.0
        %2625 = vmatpush1.msra.mxu0 0.0
        %2626 = vmatprep.subr.mxu0 0.0
        %2627 = vmatpush1.msra.mxu0 0.0
        %2628 = vmatprep.subr.mxu0 0.0
        %2629 = vmatpush1.msra.mxu0 0.0
        %2630 = vmatprep.subr.mxu0 0.0
        %2631 = vmatpush1.msra.mxu0 0.0
        %2632 = vmatprep.subr.mxu0 0.0
        %2633 = vmatpush1.msra.mxu0 0.0
        %2634 = vmatprep.subr.mxu0 0.0
        %2635 = vmatpush1.msra.mxu0 0.0
        %2636 = vmatprep.subr.mxu0 0.0
        %2637 = vmatpush1.msra.mxu0 0.0
        %2638 = vmatprep.subr.mxu0 0.0
        %2639 = vmatpush1.msra.mxu0 0.0
        %2640 = vmatprep.mubr.f32.mxu0 0.0
        %2641 = vmatmul.mubr.f32.gmra.mrb[0].mxu0 %v2571
        %v2642 = vpop.f32.mrb[0].mxu0
        %v2643 = vadd.f32 %v2567, %v2642
        %v2644 = vpop.f32.mrb[0].mxu0
        %2645 = vmatprep.mubr.f32.mxu0 0.0
        %2646 = vmatmul.mubr.f32.gmra.mrb[0].mxu0 %v2574
        %v2647 = vpop.f32.mrb[0].mxu0
        %v2648 = vadd.f32 %v2567, %v2647
        %v2649 = vpop.f32.mrb[0].mxu0
        %2650 = vdwg.mxu0
        %v2651 = vadd.f32 %v2458, %v2643
        %v2652 = vadd.f32 %v2459, %v2648
        %v2653 = vld [vmem:[%s12] sm:$0x1]
        %v2654 = vld [vmem:[%s13] sm:$0x1]
        %v2655 = vsel %vm667, %v2651, 0.0
        %2656 = vadd.xlane.f32.xlu0 %v2655
        %v2657 = vpop.xlane.xlu0 %2656
        %v2658 = vsel %vm667, %v2652, 0.0
        %2659 = vadd.xlane.f32.xlu0 %v2658
        %v2660 = vpop.xlane.xlu0 %2659
        %v2661 = vmul.f32 %v2657, %v2419
        %v2662 = vmul.f32 %v2660, %v2419
        %v2663 = vmul.f32 %v2651, %v2651
        %v2664 = vmul.f32 %v2652, %v2652
        %v2665 = vsel %vm667, %v2663, 0.0
        %2666 = vadd.xlane.f32.xlu0 %v2665
        %v2667 = vpop.xlane.xlu0 %2666
        %v2668 = vsel %vm667, %v2664, 0.0
        %2669 = vadd.xlane.f32.xlu0 %v2668
        %v2670 = vpop.xlane.xlu0 %2669
        %v2671 = vmul.f32 %v2667, %v2419
        %v2672 = vmul.f32 %v2670, %v2419
        %v2673 = vmul.f32 %v2661, %v2661
        %v2674 = vmul.f32 %v2662, %v2662
        %v2675 = vsub.f32 %v2671, %v2673
        %v2676 = vsub.f32 %v2672, %v2674
        %v2677 = vsub.f32 %v2651, %v2661
        %v2678 = vsub.f32 %v2652, %v2662
        %v2679 = vadd.f32 %v2675, 1e-05
        %v2680 = vadd.f32 %v2676, 1e-05
        %v2681 = vrsqrt.pop %v2679
        %v2682 = vrsqrt.pop %v2680
        %v2683 = vmul.f32 %v2677, %v2681
        %v2684 = vmul.f32 %v2678, %v2682
        %v2686 = vlaneseq
        %v2687 = vshrl.u32 %v2686, 7
        %v2688 = vsub.s32 0, %v2687
        %v2689 = vrot.slane %v2653, %v2688
        %v2691 = vmul.f32 %v2683, %v2689
        %v2692 = vmul.f32 %v2684, %v2689
        %v2694 = vlaneseq
        %v2695 = vshrl.u32 %v2694, 7
        %v2696 = vsub.s32 0, %v2695
        %v2697 = vrot.slane %v2654, %v2696
        %v2699 = vadd.f32 %v2691, %v2697
        %v2700 = vadd.f32 %v2692, %v2697
        %v2701 = vld [vmem:[#allocation8] sm:$0xff]
        %v2702 = vld [vmem:[#allocation8 + $0x8] sm:$0xff]
        %v2703 = vld [vmem:[#allocation8 + $0x10] sm:$0xff]
        %v2704 = vld [vmem:[#allocation8 + $0x18] sm:$0xff]
        %v2706 = vsel %vm667, %v2699, 0
        %v2709 = vsel %vm667, %v2700, 0
        %2711 = vmatprep.subr.mxu0 0.0
        %2712 = vmatpush1.msra.mxu0 %v2701
        %2713 = vmatprep.subr.mxu0 0.0
        %2714 = vmatpush1.msra.mxu0 %v2702
        %2715 = vmatprep.subr.mxu0 0.0
        %2716 = vmatpush1.msra.mxu0 %v2703
        %2717 = vmatprep.subr.mxu0 0.0
        %2718 = vmatpush1.msra.mxu0 %v2704
        %2719 = vmatprep.subr.mxu0 0.0
        %2720 = vmatpush1.msra.mxu0 0.0
        %2721 = vmatprep.subr.mxu0 0.0
        %2722 = vmatpush1.msra.mxu0 0.0
        %2723 = vmatprep.subr.mxu0 0.0
        %2724 = vmatpush1.msra.mxu0 0.0
        %2725 = vmatprep.subr.mxu0 0.0
        %2726 = vmatpush1.msra.mxu0 0.0
        %2727 = vmatprep.subr.mxu0 0.0
        %2728 = vmatpush1.msra.mxu0 0.0
        %2729 = vmatprep.subr.mxu0 0.0
        %2730 = vmatpush1.msra.mxu0 0.0
        %2731 = vmatprep.subr.mxu0 0.0
        %2732 = vmatpush1.msra.mxu0 0.0
        %2733 = vmatprep.subr.mxu0 0.0
        %2734 = vmatpush1.msra.mxu0 0.0
        %2735 = vmatprep.subr.mxu0 0.0
        %2736 = vmatpush1.msra.mxu0 0.0
        %2737 = vmatprep.subr.mxu0 0.0
        %2738 = vmatpush1.msra.mxu0 0.0
        %2739 = vmatprep.subr.mxu0 0.0
        %2740 = vmatpush1.msra.mxu0 0.0
        %2741 = vmatprep.subr.mxu0 0.0
        %2742 = vmatpush1.msra.mxu0 0.0
        %2743 = vmatprep.subr.mxu0 0.0
        %2744 = vmatpush1.msra.mxu0 0.0
        %2745 = vmatprep.subr.mxu0 0.0
        %2746 = vmatpush1.msra.mxu0 0.0
        %2747 = vmatprep.subr.mxu0 0.0
        %2748 = vmatpush1.msra.mxu0 0.0
        %2749 = vmatprep.subr.mxu0 0.0
        %2750 = vmatpush1.msra.mxu0 0.0
        %2751 = vmatprep.subr.mxu0 0.0
        %2752 = vmatpush1.msra.mxu0 0.0
        %2753 = vmatprep.subr.mxu0 0.0
        %2754 = vmatpush1.msra.mxu0 0.0
        %2755 = vmatprep.subr.mxu0 0.0
        %2756 = vmatpush1.msra.mxu0 0.0
        %2757 = vmatprep.subr.mxu0 0.0
        %2758 = vmatpush1.msra.mxu0 0.0
        %2759 = vmatprep.subr.mxu0 0.0
        %2760 = vmatpush1.msra.mxu0 0.0
        %2761 = vmatprep.subr.mxu0 0.0
        %2762 = vmatpush1.msra.mxu0 0.0
        %2763 = vmatprep.subr.mxu0 0.0
        %2764 = vmatpush1.msra.mxu0 0.0
        %2765 = vmatprep.subr.mxu0 0.0
        %2766 = vmatpush1.msra.mxu0 0.0
        %2767 = vmatprep.subr.mxu0 0.0
        %2768 = vmatpush1.msra.mxu0 0.0
        %2769 = vmatprep.subr.mxu0 0.0
        %2770 = vmatpush1.msra.mxu0 0.0
        %2771 = vmatprep.subr.mxu0 0.0
        %2772 = vmatpush1.msra.mxu0 0.0
        %2773 = vmatprep.subr.mxu0 0.0
        %2774 = vmatpush1.msra.mxu0 0.0
        %2775 = vmatprep.mubr.f32.mxu0 0.0
        %2776 = vmatmul.mubr.f32.gmra.mrb[0].mxu0 %v2706
        %v2777 = vpop.f32.mrb[0].mxu0
        %v2778 = vadd.f32 0.0, %v2777
        %v2779 = vpop.f32.mrb[0].mxu0
        %2780 = vmatprep.mubr.f32.mxu0 0.0
        %2781 = vmatmul.mubr.f32.gmra.mrb[0].mxu0 %v2709
        %v2782 = vpop.f32.mrb[0].mxu0
        %v2783 = vadd.f32 0.0, %v2782
        %v2784 = vpop.f32.mrb[0].mxu0
        %2785 = vdwg.mxu0
        %v2786 = vrot.slane %v2778, 7
        %v2787 = vrot.slane %v2783, 7
        %v2788 = vlaneseq
        %v2789 = vshrl.u32 %v2788, 7
        %vm2790 = vcmp.lt.s32.totalorder %v2789, 1
        %v2791 = vsel %vm2790, %v2786, %v2787
        %v2792 = vsel %vm2790, %v2787, %v2786
        %2795 = vrot.lane.b32.xlu0 %v2778, 96
        %v2796 = vpop.permute.xlu0 %2795
        %2797 = vrot.lane.b32.xlu0 %v2783, 96
        %v2798 = vpop.permute.xlu0 %2797
        %v2801 = vrot.slane %v2796, 1
        %v2802 = vrot.slane %v2798, 1
        %vm2803 = vcmp.lt.s32.totalorder %v2789, 7
        %v2804 = vsel %vm2803, %v2801, %v2802
        %v2805 = vsel %vm2803, %v2802, %v2801
        %vm2806 = vcmp.eq.s32.totalorder %v2789, 0
        %v2807 = vsel %vm2806, 0.0, %v2792
        %v2808 = vsel %vm2806, 0.0, %v2791
        %2811 = vrot.lane.b32.xlu0 %v2807, 16
        %v2812 = vpop.permute.xlu0 %2811
        %2813 = vrot.lane.b32.xlu0 %v2808, 16
        %v2814 = vpop.permute.xlu0 %2813
        %v2817 = vadd.f32 %v2778, %v2812
        %v2818 = vadd.f32 %v2783, %v2814
        %vm2819 = vcmp.eq.s32.totalorder %v2789, 7
        %v2820 = vsel %vm2819, 0.0, %v2804
        %v2821 = vsel %vm2819, 0.0, %v2805
        %2824 = vrot.lane.b32.xlu0 %v2820, 16
        %v2825 = vpop.permute.xlu0 %2824
        %2826 = vrot.lane.b32.xlu0 %v2821, 16
        %v2827 = vpop.permute.xlu0 %2826
        %v2830 = vadd.f32 %v2817, %v2825
        %v2831 = vadd.f32 %v2818, %v2827
        %v2832 = vld [vmem:[%s15] sm:$0x1]
        %v2834 = vlaneseq
        %v2835 = vshrl.u32 %v2834, 7
        %v2836 = vsub.s32 0, %v2835
        %v2837 = vrot.slane %v2832, %v2836
        %2838 = vrot.lane.b32.xlu0 %v2837, 16
        %v2839 = vpop.permute.xlu0 %2838
        %v2841 = vadd.f32 %v2830, %v2839
        %v2842 = vadd.f32 %v2831, %v2839
        %v2843 = vmax.f32 %v2841, 0.0
        %v2844 = vmax.f32 %v2842, 0.0
        %v2845 = vld [vmem:[%s16] sm:$0x1]
        %v2847 = vlaneseq
        %v2848 = vshrl.u32 %v2847, 7
        %v2849 = vsub.s32 0, %v2848
        %v2850 = vrot.slane %v2845, %v2849
        %2851 = vrot.lane.b32.xlu0 %v2850, 16
        %v2852 = vpop.permute.xlu0 %2851
        %v2854 = vmul.f32 %v2843, %v2852
        %v2855 = vmul.f32 %v2844, %v2852
        %2858 = vrot.lane.b32.xlu0 %v2854, 112
        %v2859 = vpop.permute.xlu0 %2858
        %2860 = vrot.lane.b32.xlu0 %v2855, 112
        %v2861 = vpop.permute.xlu0 %2860
        %vm2864 = vcmask 130048
        %v2865 = vsel %vm2864, %v2859, 0.0
        %2866 = vadd.xlane.f32.xlu0 %v2865
        %v2867 = vpop.xlane.xlu0 %2866
        %v2868 = vsel %vm2864, %v2861, 0.0
        %2869 = vadd.xlane.f32.xlu0 %v2868
        %v2870 = vpop.xlane.xlu0 %2869
        %v2871 = vld [vmem:[#allocation2] sm:$0x1]
        %v2873 = vlaneseq
        %v2874 = vshrl.u32 %v2873, 7
        %v2875 = vsub.s32 0, %v2874
        %v2876 = vrot.slane %v2871, %v2875
        %2877 = vset.pattern.permute.xlu0 0
        %2878 = vperm.xlu0 %2877, %v2876
        %v2879 = vpop.permute.xlu0 %2878
        %v2881 = vadd.f32 %v2867, %v2879
        %v2882 = vadd.f32 %v2870, %v2879
        %v2885 = vlaneseq
        %v2886 = vand.u32 %v2885, 127
        %v2887 = vlaneseq
        %v2888 = vshrl.u32 %v2887, 7
        %v2889 = vsub.s32 %v2886, %v2888
        %v2890 = vrot.slane %v2881, %v2889
        %v2891 = vlaneseq
        %v2892 = vshrl.u32 %v2891, 7
        %v2893 = vsub.s32 %v2886, %v2892
        %v2894 = vrot.slane %v2882, %v2893
        %vm2895 = vcmask 1041409
        %v2896 = vsel %vm2895, %v2894, %v2890
        %vm2898 = vcmask 58368
        %2899 = vst.msk [vmem:[%s627] sm:$0x3] %vm2898, %v2896
        %s2900 = sand.u32 %s432, 1
        %s2901 = scalar_lea.sflag [#allocation5], %s2900
        %s2902 = sand.u32 %s432, 1
        %s2903 = smul.addr %s2902, 2
        %s2904 = scalar_lea.vmem [#allocation9], %s2903
        // Predicated region
        $region105: #{tpu_custom_call.1} parent=91 // pred_check
          %p2905 = pneg %p442
        $region106: #{tpu_custom_call.1} parent=91 // pred_check_branch
          %2907 = sbr.rel (%p2905) target = $region108
        $region107: #{tpu_custom_call.1} parent=91 // pred_region
          %s2909 = ssub.s32 32, 32
          %2910 = vsyncadd %s2901, %s2909
          %s2911 = smul.addr %s36, 32
          %s2912 = scalar_lea.hbm %s18, %s2911
          %s2914 = sshll.u32 %s2904, 4
          %s2915 = int_to_ptr.vmem [resolvable:$true] %s2914
          %2917 = dma.vmem_to_hbm [thread:$0]  %s2915, 32, %s2912, %s2901
        $region108: #{tpu_custom_call.1} parent=91 // pred_fallthru
          _
      $region92: #{tpu_custom_call.1} parent=5 // pred_fallthru
        _
      %p2918 = scmp.le.s32.totalorder 2, %s31
      // Predicated region
      $region109: #{tpu_custom_call.1} parent=5 // pred_check
        %p2919 = pneg %p2918
      $region110: #{tpu_custom_call.1} parent=5 // pred_check_branch
        %2921 = sbr.rel (%p2919) target = $region112
      $region111: #{tpu_custom_call.1} parent=5 // pred_region
        %s2922 = ssub.s32 %s31, 2
        // Predicated region
        $region113: #{tpu_custom_call.1} parent=111 // pred_check
          %p2923 = pneg %p448
        $region114: #{tpu_custom_call.1} parent=111 // pred_check_branch
          %2925 = sbr.rel (%p2923) target = $region116
        $region115: #{tpu_custom_call.1} parent=111 // pred_region
          %s2926 = sand.u32 %s433, 1
          %s2927 = scalar_lea.sflag [#allocation5], %s2926
          %s2928 = sand.u32 %s433, 1
          %s2929 = smul.addr %s2928, 2
          %s2930 = scalar_lea.vmem [#allocation9], %s2929
          %2931 = dma.done %s2927, 32
        $region116: #{tpu_custom_call.1} parent=111 // pred_fallthru
          _
      $region112: #{tpu_custom_call.1} parent=5 // pred_fallthru
        _
    $region6: #{tpu_custom_call.1} parent=1 // loop_footer
      %s35 = sadd.s32 1, %s31
    $region7: #{tpu_custom_call.1} parent=1 // loop_footer_branch
      %30 = sbr.rel target = $region3
    $region8: #{tpu_custom_call.1} parent=1 // loop_exit
      _
    %2932 = vsyncpa [#allocation4], 1
    %s2933 = scalar_lea.sflag [#allocation4], 1
    %2934 = vsyncpa %s2933, 1
    %2935 = vsyncpa [#allocation7], 1
    %2936 = vsyncpa [#allocation5], 1
    %s2937 = scalar_lea.sflag [#allocation5], 1
    %2938 = vsyncpa %s2937, 1

</llo_original>
